<compile_context>
chip_gen: v7x
topology: tpu7x:2x2x1
jax: 0.10.0
libtpu: 0.0.40
codegen_flags: <defaults>
</compile_context>

<pallas_src>
import functools

import jax
import jax.numpy as jnp
from jax.experimental import pallas as pl
from jax.experimental.pallas import tpu as pltpu

LANES = 128                      # TPU lane width
OC_PAD = 64                      # conv output channels stored as 64 lanes
VMEM_LIMIT = 32 * 1024 * 1024    # explicit scoped-VMEM limit (safe on v5e/v6e/v7x)


def _round_up(x, m):
    return -(-x // m) * m


# ---------------------------------------------------------------------------
# Conv kernel: one batch block of conv2d(valid, stride) + bias + ReLU
#   x_ref     : (TB, QH, S, QW, KC)  bf16  H/W stride-phase folded input window
#   w_ref     : (K, OCP)             bf16  K = kqh*s*kqw*KC folded + zero-padded weights
#   b_ref     : (1, OCP)             f32
#   o_ref     : (TB, OH, OWP, OCP)   bf16  (OWP = round_up(OW, 8); pad columns are junk)
#   patch_ref : (TB*OH*OWP, K)       bf16  VMEM im2col slab scratch
# ---------------------------------------------------------------------------
def _conv_relu_kernel(x_ref, w_ref, b_ref, o_ref, patch_ref, *, s, kqh, kqw, oh, owp, kc):
    tb = x_ref.shape[0]
    ocp = o_ref.shape[-1]
    m = tb * oh * owp

    # Build the im2col slab: kqh*s*kqw tap copies.  The reshape only merges leading dims
    # (OWP is a multiple of 8, lane dim unchanged) so it is tile-preserving; the store
    # offsets along K are static.
    t = 0
    for qi in range(kqh):
        for ri in range(s):
            for qj in range(kqw):
                tap = x_ref[:, qi:qi + oh, ri:ri + 1, qj:qj + owp, :]   # (TB,OH,1,OWP,KC)
                patch_ref[:, t * kc:(t + 1) * kc] = tap.reshape(m, kc)
                t += 1

    # One MXU matmul per batch block: M = TB*OH*OWP, K = kh*kw*C (taps folded), N = OCP.
    acc = jnp.dot(patch_ref[...], w_ref[...], preferred_element_type=jnp.float32)
    acc = jnp.maximum(acc + b_ref[...], 0.0).astype(o_ref.dtype)
    o_ref[...] = acc.reshape(tb, oh, owp, ocp)            # tile-preserving split


def conv2d_relu(x_img, w_fold, b_pad, *, stride, kh, kw, tb=8):
    """x_img: (B, H, W, C) bf16  ->  (B, OH, OW, OCP) bf16 (channels padded to OCP)."""
    B, H, W, C = x_img.shape
    oh = (H - kh) // stride + 1
    ow = (W - kw) // stride + 1
    owp = _round_up(ow, 8)
    kqh = -(-kh // stride)
    kqw = -(-kw // stride)
    qh = oh - 1 + kqh
    qw = owp - 1 + kqw
    kc = stride * C
    k_total = kqh * stride * kqw * kc
    ocp = w_fold.shape[-1]
    assert w_fold.shape[0] == k_total

    # Crop / zero-pad to exactly the window the kernel reads, then fold the H and W
    # stride phases (pure row-major reshape, 1x activation bytes).
    need_h, need_w = stride * qh, stride * qw
    x = x_img[:, :min(H, need_h), :min(W, need_w), :]
    pad_h, pad_w = max(0, need_h - H), max(0, need_w - W)
    if pad_h or pad_w:
        x = jnp.pad(x, ((0, 0), (0, pad_h), (0, pad_w), (0, 0)))
    x = x.reshape(B, qh, stride, qw, kc)

    tb = max(1, min(tb, B))
    bp = _round_up(B, tb)
    if bp != B:
        x = jnp.pad(x, ((0, bp - B), (0, 0), (0, 0), (0, 0), (0, 0)))

    kernel = functools.partial(_conv_relu_kernel, s=stride, kqh=kqh, kqw=kqw,
                               oh=oh, owp=owp, kc=kc)
    out = pl.pallas_call(
        kernel,
        out_shape=jax.ShapeDtypeStruct((bp, oh, owp, ocp), jnp.bfloat16),
        grid=(bp // tb,),
        in_specs=[
            pl.BlockSpec((tb, qh, stride, qw, kc), lambda i: (i, 0, 0, 0, 0)),
            pl.BlockSpec((k_total, ocp), lambda i: (0, 0)),
            pl.BlockSpec((1, ocp), lambda i: (0, 0)),
        ],
        out_specs=pl.BlockSpec((tb, oh, owp, ocp), lambda i: (i, 0, 0, 0)),
        scratch_shapes=[pltpu.VMEM((tb * oh * owp, k_total), jnp.bfloat16)],
        compiler_params=pltpu.CompilerParams(
            dimension_semantics=("parallel",),
            vmem_limit_bytes=VMEM_LIMIT),
    )(x, w_fold, b_pad)
    # Drop padded batch rows and padded output columns (layout glue on a tiny activation).
    return out[:B, :, :ow, :]


# ---------------------------------------------------------------------------
# Fused FC head:  relu(x @ W1 + b1) @ W2 + b2  (+ dueling combine in-kernel)
# ---------------------------------------------------------------------------
def _fc_head_kernel(x_ref, w1_ref, b1_ref, w2_ref, b2_ref, o_ref, *, dueling, nb_actions):
    h = jnp.dot(x_ref[...], w1_ref[...], preferred_element_type=jnp.float32)
    h = jnp.maximum(h + b1_ref[...], 0.0).astype(w2_ref.dtype)
    y = jnp.dot(h, w2_ref[...], preferred_element_type=jnp.float32) + b2_ref[...]
    if dueling:
        # lane 0 = value stream, lanes 1..nb_actions = advantage stream, rest exactly 0.
        lane = jax.lax.broadcasted_iota(jnp.int32, y.shape, 1)
        adv = jnp.where((lane >= 1) & (lane <= nb_actions), y, 0.0)
        adv_mean = jnp.sum(adv, axis=-1, keepdims=True) * (1.0 / nb_actions)
        y = y[:, 0:1] + y - adv_mean          # Q values live in lanes 1..nb_actions
    o_ref[...] = y.astype(o_ref.dtype)


def fc_head(x_flat, w1, b1, w2, b2, *, dueling, nb_actions, tile_m=128):
    B, K = x_flat.shape
    hp = w1.shape[1]
    np_ = w2.shape[1]
    if B <= tile_m:
        tm, bp = B, B
    else:
        tm = tile_m
        bp = _round_up(B, tm)
        if bp != B:
            x_flat = jnp.pad(x_flat, ((0, bp - B), (0, 0)))
    kernel = functools.partial(_fc_head_kernel, dueling=dueling, nb_actions=nb_actions)
    y = pl.pallas_call(
        kernel,
        out_shape=jax.ShapeDtypeStruct((bp, np_), jnp.float32),
        grid=(bp // tm,),
        in_specs=[
            pl.BlockSpec((tm, K), lambda i: (i, 0)),
            pl.BlockSpec((K, hp), lambda i: (0, 0)),
            pl.BlockSpec((1, hp), lambda i: (0, 0)),
            pl.BlockSpec((hp, np_), lambda i: (0, 0)),
            pl.BlockSpec((1, np_), lambda i: (0, 0)),
        ],
        out_specs=pl.BlockSpec((tm, np_), lambda i: (i, 0)),
        compiler_params=pltpu.CompilerParams(
            dimension_semantics=("parallel",),
            vmem_limit_bytes=VMEM_LIMIT),
    )(x_flat, w1, b1, w2, b2)
    return y[:B]


# ---------------------------------------------------------------------------
# One-time weight preparation (all transposes / reorders / paddings hoisted here)
# ---------------------------------------------------------------------------
def _fold_conv_weight(w_oihw, stride, c_in_store, oc_pad):
    """OIHW -> (kqh*s*kqw*s*c_in_store, oc_pad) bf16 matching the in-kernel patch order.

    Patch column index for tap (qi, ri, qj) and sub-position (rj, c) is
    ((qi*s + ri)*kqw + qj) * (s*c_in_store) + rj*c_in_store + c, which multiplies the
    input element x[b, s*oh + (s*qi+ri), s*ow + (s*qj+rj), c].
    """
    OC, IC, KH, KW = w_oihw.shape
    assert IC <= c_in_store and OC <= oc_pad
    kqh = -(-KH // stride)
    kqw = -(-KW // stride)
    w_t = jnp.transpose(w_oihw, (2, 3, 1, 0))          # (KH, KW, IC, OC)
    wf = jnp.zeros((kqh, stride, kqw, stride, c_in_store, oc_pad), jnp.float32)
    for qi in range(kqh):
        for ri in range(stride):
            di = stride * qi + ri
            if di >= KH:
                continue
            for qj in range(kqw):
                for rj in range(stride):
                    dj = stride * qj + rj
                    if dj >= KW:
                        continue
                    wf = wf.at[qi, ri, qj, rj, :IC, :OC].set(w_t[di, dj])
    k_total = kqh * stride * kqw * stride * c_in_store
    return wf.reshape(k_total, oc_pad).astype(jnp.bfloat16)


def _pad_bias(b, n):
    return jnp.zeros((1, n), jnp.float32).at[0, :b.shape[0]].set(b)


def prepare_params(params, input_shape, enable_dueling=False):
    c_in, H, W = input_shape
    oh1, ow1 = (H - 8) // 4 + 1, (W - 8) // 4 + 1
    oh2, ow2 = (oh1 - 4) // 2 + 1, (ow1 - 4) // 2 + 1
    oh3, ow3 = oh2 - 2, ow2 - 2
    hidden = params["fc1_w"].shape[0]
    c3 = params["conv3_w"].shape[0]
    assert params["fc1_w"].shape[1] == c3 * oh3 * ow3
    hp = _round_up(hidden, LANES)
    np_ = LANES

    prep = {
        "c1_w": _fold_conv_weight(params["conv1_w"], 4, c_in, OC_PAD),
        "c1_b": _pad_bias(params["conv1_b"], OC_PAD),
        "c2_w": _fold_conv_weight(params["conv2_w"], 2, OC_PAD, OC_PAD),
        "c2_b": _pad_bias(params["conv2_b"], OC_PAD),
        "c3_w": _fold_conv_weight(params["conv3_w"], 1, OC_PAD, OC_PAD),
        "c3_b": _pad_bias(params["conv3_b"], OC_PAD),
    }

    # fc1: fold the PyTorch NCHW flatten order (c, oh, ow) into our NHWC (oh, ow, c)
    # activation layout.  conv3 stores exactly 64 channels -> NO zero feature rows.
    w1 = params["fc1_w"].reshape(hidden, c3, oh3, ow3)
    w1 = jnp.transpose(w1, (2, 3, 1, 0))                            # (oh3, ow3, c3, hidden)
    w1 = jnp.pad(w1, ((0, 0), (0, 0), (0, 0), (0, hp - hidden)))
    prep["fc1_w"] = w1.reshape(oh3 * ow3 * c3, hp).astype(jnp.bfloat16)
    prep["fc1_b"] = _pad_bias(params["fc1_b"], hp)

    if not enable_dueling:
        nb = params["fc2_w"].shape[0]
        assert nb <= np_
        hw = jnp.zeros((hp, np_), jnp.float32).at[:hidden, :nb].set(params["fc2_w"].T)
        hb = jnp.zeros((1, np_), jnp.float32).at[0, :nb].set(params["fc2_b"])
    else:
        nb = params["adv_w"].shape[0]
        assert nb + 1 <= np_
        hw = jnp.zeros((hp, np_), jnp.float32)
        hw = hw.at[:hidden, 0:1].set(params["value_w"].T)
        hw = hw.at[:hidden, 1:1 + nb].set(params["adv_w"].T)
        hb = jnp.zeros((1, np_), jnp.float32)
        hb = hb.at[0, 0].set(params["value_b"][0])
        hb = hb.at[0, 1:1 + nb].set(params["adv_b"])
    prep["head_w"] = hw.astype(jnp.bfloat16)
    prep["head_b"] = hb
    return prep


# ---------------------------------------------------------------------------
# Forward pass
# ---------------------------------------------------------------------------
def dqn_forward(x_nchw, prep, *, nb_actions, enable_dueling=False, tb=8):
    # On v7x pick tb so the conv grid length (ceil(B/tb)) is >= 2 -> both TensorCores used.
    x = jnp.transpose(x_nchw, (0, 2, 3, 1)).astype(jnp.bfloat16)     # NCHW -> NHWC (glue)
    x = conv2d_relu(x, prep["c1_w"], prep["c1_b"], stride=4, kh=8, kw=8, tb=tb)
    x = conv2d_relu(x, prep["c2_w"], prep["c2_b"], stride=2, kh=4, kw=4, tb=tb)
    x = conv2d_relu(x, prep["c3_w"], prep["c3_b"], stride=1, kh=3, kw=3, tb=tb)
    x_flat = x.reshape(x.shape[0], -1)        # (B, oh3*ow3*64); fc1_w rows match this order
    y = fc_head(x_flat, prep["fc1_w"], prep["fc1_b"], prep["head_w"], prep["head_b"],
                dueling=enable_dueling, nb_actions=nb_actions)
    if enable_dueling:
        return y[:, 1:1 + nb_actions]
    return y[:, :nb_actions]


# ---------------------------------------------------------------------------
# Parameter init (PyTorch shapes; init_weights: N(0, 0.01); biases optionally random
# so the bias path is actually exercised by the check)
# ---------------------------------------------------------------------------
def init_params(key, in_channels, feature_size, hidden_nodes, nb_actions, bias_std=0.0):
    ks = jax.random.split(key, 7)
    kb = jax.random.split(ks[6], 7)
    std = 0.01

    def bias(k, n):
        if bias_std > 0.0:
            return bias_std * jax.random.normal(k, (n,), jnp.float32)
        return jnp.zeros((n,), jnp.float32)

    return {
        "conv1_w": std * jax.random.normal(ks[0], (32, in_channels, 8, 8), jnp.float32),
        "conv1_b": bias(kb[0], 32),
        "conv2_w": std * jax.random.normal(ks[1], (64, 32, 4, 4), jnp.float32),
        "conv2_b": bias(kb[1], 64),
        "conv3_w": std * jax.random.normal(ks[2], (64, 64, 3, 3), jnp.float32),
        "conv3_b": bias(kb[2], 64),
        "fc1_w": std * jax.random.normal(ks[3], (hidden_nodes, feature_size), jnp.float32),
        "fc1_b": bias(kb[3], hidden_nodes),
        "fc2_w": std * jax.random.normal(ks[4], (nb_actions, hidden_nodes), jnp.float32),
        "fc2_b": bias(kb[4], nb_actions),
        "value_w": std * jax.random.normal(ks[5], (1, hidden_nodes), jnp.float32),
        "value_b": bias(kb[5], 1),
        "adv_w": std * jax.random.normal(jax.random.fold_in(ks[5], 1),
                                         (nb_actions, hidden_nodes), jnp.float32),
        "adv_b": bias(kb[6], nb_actions),
    }


# ---------------------------------------------------------------------------
# Pure-JAX f32 reference
# ---------------------------------------------------------------------------
def ref_forward(x, p, dueling=False):
    def conv(x, w, b, s):
        y = jax.lax.conv_general_dilated(
            x, w, (s, s), "VALID", dimension_numbers=("NCHW", "OIHW", "NCHW"))
        return jax.nn.relu(y + b.reshape(1, -1, 1, 1))

    x = conv(x, p["conv1_w"], p["conv1_b"], 4)
    x = conv(x, p["conv2_w"], p["conv2_b"], 2)
    x = conv(x, p["conv3_w"], p["conv3_b"], 1)
    x = x.reshape(x.shape[0], -1)
    x = jax.nn.relu(x @ p["fc1_w"].T + p["fc1_b"])
    if not dueling:
        return x @ p["fc2_w"].T + p["fc2_b"]
    v = x @ p["value_w"].T + p["value_b"]
    a = x @ p["adv_w"].T + p["adv_b"]
    return v + a - a.mean(axis=1, keepdims=True)


if __name__ == "__main__":
    # Smallest spatial size the k8/s4 -> k4/s2 -> k3/s1 stack supports: 36 -> 8 -> 3 -> 1.
    batch, in_ch, spatial = 4, 4, 36
    hidden_nodes, nb_actions = 32, 6

    oh1 = (spatial - 8) // 4 + 1
    oh2 = (oh1 - 4) // 2 + 1
    oh3 = oh2 - 2
    feature_size = 64 * oh3 * oh3

    key = jax.random.PRNGKey(0)
    k_x, k_p = jax.random.split(key)
    x = jax.random.normal(k_x, (batch, in_ch, spatial, spatial), jnp.float32)
    params = init_params(k_p, in_ch, feature_size, hidden_nodes, nb_actions, bias_std=0.1)

    for dueling in (False, True):
        prep = prepare_params(params, (in_ch, spatial, spatial), enable_dueling=dueling)
        # tb=2 -> conv grid length 2 (exercises batch blocking; keeps both v7x TCs busy).
        fwd = jax.jit(functools.partial(dqn_forward, nb_actions=nb_actions,
                                        enable_dueling=dueling, tb=2))
        out = jax.block_until_ready(fwd(x, prep))
        ref = jax.block_until_ready(ref_forward(x, params, dueling))
        assert out.shape == (batch, nb_actions)
        err = float(jnp.max(jnp.abs(out - ref)))
        # bf16 activations/weights vs f32 reference -> tolerance covers rounding only.
        assert err < 5e-3, f"Pallas output mismatch (dueling={dueling}): max abs err {err}"

    print("KERNEL_OK")
</pallas_src>

<mosaic_0001>
module attributes {stable_mosaic.version = 11 : i64} {
  func.func @_conv_relu_kernel(%arg0: i32, %arg1: memref<2x9x4x9x16xbf16, #tpu.memory_space<vmem>>, %arg2: memref<256x64xbf16, #tpu.memory_space<vmem>>, %arg3: memref<1x64xf32, #tpu.memory_space<vmem>>, %arg4: memref<2x8x8x64xbf16, #tpu.memory_space<vmem>>, %arg5: memref<128x256xbf16, #tpu.memory_space<vmem>>) attributes {dimension_semantics = [#tpu.dimension_semantics<parallel>], iteration_bounds = array<i64: 2>, scalar_prefetch = 0 : i64, scratch_operands = 1 : i64, tpu.core_type = #tpu.core_type<tc>, window_params = [{transform_indices = @transform_0, window_bounds = array<i64: 2, 9, 4, 9, 16>}, {pipeline_mode = #tpu.pipeline_mode<synchronous>, transform_indices = @transform_1, window_bounds = array<i64: 256, 64>}, {pipeline_mode = #tpu.pipeline_mode<synchronous>, transform_indices = @transform_2, window_bounds = array<i64: 1, 64>}, {transform_indices = @transform_3, window_bounds = array<i64: 2, 8, 8, 64>}]} {
    %c0 = arith.constant 0 : index
    %c0_0 = arith.constant 0 : index
    %c0_1 = arith.constant 0 : index
    %c0_2 = arith.constant 0 : index
    %c0_3 = arith.constant 0 : index
    %0 = vector.load %arg1[%c0, %c0_0, %c0_1, %c0_2, %c0_3] : memref<2x9x4x9x16xbf16, #tpu.memory_space<vmem>>, vector<2x8x1x8x16xbf16>
    %1 = vector.shape_cast %0 : vector<2x8x1x8x16xbf16> to vector<128x16xbf16>
    %c0_4 = arith.constant 0 : index
    %c0_5 = arith.constant 0 : index
    %2 = vector.load %arg5[%c0_4, %c0_5] : memref<128x256xbf16, #tpu.memory_space<vmem>>, vector<128x16xbf16>
    tpu.vector_store %arg5[%c0_4, %c0_5], %1 {strides = array<i32>} : memref<128x256xbf16, #tpu.memory_space<vmem>>, vector<128x16xbf16>,
    %c0_6 = arith.constant 0 : index
    %c0_7 = arith.constant 0 : index
    %c0_8 = arith.constant 0 : index
    %c1 = arith.constant 1 : index
    %c0_9 = arith.constant 0 : index
    %3 = vector.load %arg1[%c0_6, %c0_7, %c0_8, %c1, %c0_9] : memref<2x9x4x9x16xbf16, #tpu.memory_space<vmem>>, vector<2x8x1x8x16xbf16>
    %4 = vector.shape_cast %3 : vector<2x8x1x8x16xbf16> to vector<128x16xbf16>
    %c0_10 = arith.constant 0 : index
    %c16 = arith.constant 16 : index
    %5 = vector.load %arg5[%c0_10, %c16] : memref<128x256xbf16, #tpu.memory_space<vmem>>, vector<128x16xbf16>
    tpu.vector_store %arg5[%c0_10, %c16], %4 {strides = array<i32>} : memref<128x256xbf16, #tpu.memory_space<vmem>>, vector<128x16xbf16>,
    %c0_11 = arith.constant 0 : index
    %c0_12 = arith.constant 0 : index
    %c1_13 = arith.constant 1 : index
    %c0_14 = arith.constant 0 : index
    %c0_15 = arith.constant 0 : index
    %6 = vector.load %arg1[%c0_11, %c0_12, %c1_13, %c0_14, %c0_15] : memref<2x9x4x9x16xbf16, #tpu.memory_space<vmem>>, vector<2x8x1x8x16xbf16>
    %7 = vector.shape_cast %6 : vector<2x8x1x8x16xbf16> to vector<128x16xbf16>
    %c0_16 = arith.constant 0 : index
    %c32 = arith.constant 32 : index
    %8 = vector.load %arg5[%c0_16, %c32] : memref<128x256xbf16, #tpu.memory_space<vmem>>, vector<128x16xbf16>
    tpu.vector_store %arg5[%c0_16, %c32], %7 {strides = array<i32>} : memref<128x256xbf16, #tpu.memory_space<vmem>>, vector<128x16xbf16>,
    %c0_17 = arith.constant 0 : index
    %c0_18 = arith.constant 0 : index
    %c1_19 = arith.constant 1 : index
    %c1_20 = arith.constant 1 : index
    %c0_21 = arith.constant 0 : index
    %9 = vector.load %arg1[%c0_17, %c0_18, %c1_19, %c1_20, %c0_21] : memref<2x9x4x9x16xbf16, #tpu.memory_space<vmem>>, vector<2x8x1x8x16xbf16>
    %10 = vector.shape_cast %9 : vector<2x8x1x8x16xbf16> to vector<128x16xbf16>
    %c0_22 = arith.constant 0 : index
    %c48 = arith.constant 48 : index
    %11 = vector.load %arg5[%c0_22, %c48] : memref<128x256xbf16, #tpu.memory_space<vmem>>, vector<128x16xbf16>
    tpu.vector_store %arg5[%c0_22, %c48], %10 {strides = array<i32>} : memref<128x256xbf16, #tpu.memory_space<vmem>>, vector<128x16xbf16>,
    %c0_23 = arith.constant 0 : index
    %c0_24 = arith.constant 0 : index
    %c2 = arith.constant 2 : index
    %c0_25 = arith.constant 0 : index
    %c0_26 = arith.constant 0 : index
    %12 = vector.load %arg1[%c0_23, %c0_24, %c2, %c0_25, %c0_26] : memref<2x9x4x9x16xbf16, #tpu.memory_space<vmem>>, vector<2x8x1x8x16xbf16>
    %13 = vector.shape_cast %12 : vector<2x8x1x8x16xbf16> to vector<128x16xbf16>
    %c0_27 = arith.constant 0 : index
    %c64 = arith.constant 64 : index
    %14 = vector.load %arg5[%c0_27, %c64] : memref<128x256xbf16, #tpu.memory_space<vmem>>, vector<128x16xbf16>
    tpu.vector_store %arg5[%c0_27, %c64], %13 {strides = array<i32>} : memref<128x256xbf16, #tpu.memory_space<vmem>>, vector<128x16xbf16>,
    %c0_28 = arith.constant 0 : index
    %c0_29 = arith.constant 0 : index
    %c2_30 = arith.constant 2 : index
    %c1_31 = arith.constant 1 : index
    %c0_32 = arith.constant 0 : index
    %15 = vector.load %arg1[%c0_28, %c0_29, %c2_30, %c1_31, %c0_32] : memref<2x9x4x9x16xbf16, #tpu.memory_space<vmem>>, vector<2x8x1x8x16xbf16>
    %16 = vector.shape_cast %15 : vector<2x8x1x8x16xbf16> to vector<128x16xbf16>
    %c0_33 = arith.constant 0 : index
    %c80 = arith.constant 80 : index
    %17 = vector.load %arg5[%c0_33, %c80] : memref<128x256xbf16, #tpu.memory_space<vmem>>, vector<128x16xbf16>
    tpu.vector_store %arg5[%c0_33, %c80], %16 {strides = array<i32>} : memref<128x256xbf16, #tpu.memory_space<vmem>>, vector<128x16xbf16>,
    %c0_34 = arith.constant 0 : index
    %c0_35 = arith.constant 0 : index
    %c3 = arith.constant 3 : index
    %c0_36 = arith.constant 0 : index
    %c0_37 = arith.constant 0 : index
    %18 = vector.load %arg1[%c0_34, %c0_35, %c3, %c0_36, %c0_37] : memref<2x9x4x9x16xbf16, #tpu.memory_space<vmem>>, vector<2x8x1x8x16xbf16>
    %19 = vector.shape_cast %18 : vector<2x8x1x8x16xbf16> to vector<128x16xbf16>
    %c0_38 = arith.constant 0 : index
    %c96 = arith.constant 96 : index
    %20 = vector.load %arg5[%c0_38, %c96] : memref<128x256xbf16, #tpu.memory_space<vmem>>, vector<128x16xbf16>
    tpu.vector_store %arg5[%c0_38, %c96], %19 {strides = array<i32>} : memref<128x256xbf16, #tpu.memory_space<vmem>>, vector<128x16xbf16>,
    %c0_39 = arith.constant 0 : index
    %c0_40 = arith.constant 0 : index
    %c3_41 = arith.constant 3 : index
    %c1_42 = arith.constant 1 : index
    %c0_43 = arith.constant 0 : index
    %21 = vector.load %arg1[%c0_39, %c0_40, %c3_41, %c1_42, %c0_43] : memref<2x9x4x9x16xbf16, #tpu.memory_space<vmem>>, vector<2x8x1x8x16xbf16>
    %22 = vector.shape_cast %21 : vector<2x8x1x8x16xbf16> to vector<128x16xbf16>
    %c0_44 = arith.constant 0 : index
    %c112 = arith.constant 112 : index
    %23 = vector.load %arg5[%c0_44, %c112] : memref<128x256xbf16, #tpu.memory_space<vmem>>, vector<128x16xbf16>
    tpu.vector_store %arg5[%c0_44, %c112], %22 {strides = array<i32>} : memref<128x256xbf16, #tpu.memory_space<vmem>>, vector<128x16xbf16>,
    %c0_45 = arith.constant 0 : index
    %c1_46 = arith.constant 1 : index
    %c0_47 = arith.constant 0 : index
    %c0_48 = arith.constant 0 : index
    %c0_49 = arith.constant 0 : index
    %24 = vector.load %arg1[%c0_45, %c1_46, %c0_47, %c0_48, %c0_49] : memref<2x9x4x9x16xbf16, #tpu.memory_space<vmem>>, vector<2x8x1x8x16xbf16>
    %25 = vector.shape_cast %24 : vector<2x8x1x8x16xbf16> to vector<128x16xbf16>
    %c0_50 = arith.constant 0 : index
    %c128 = arith.constant 128 : index
    %26 = vector.load %arg5[%c0_50, %c128] : memref<128x256xbf16, #tpu.memory_space<vmem>>, vector<128x16xbf16>
    tpu.vector_store %arg5[%c0_50, %c128], %25 {strides = array<i32>} : memref<128x256xbf16, #tpu.memory_space<vmem>>, vector<128x16xbf16>,
    %c0_51 = arith.constant 0 : index
    %c1_52 = arith.constant 1 : index
    %c0_53 = arith.constant 0 : index
    %c1_54 = arith.constant 1 : index
    %c0_55 = arith.constant 0 : index
    %27 = vector.load %arg1[%c0_51, %c1_52, %c0_53, %c1_54, %c0_55] : memref<2x9x4x9x16xbf16, #tpu.memory_space<vmem>>, vector<2x8x1x8x16xbf16>
    %28 = vector.shape_cast %27 : vector<2x8x1x8x16xbf16> to vector<128x16xbf16>
    %c0_56 = arith.constant 0 : index
    %c144 = arith.constant 144 : index
    %29 = vector.load %arg5[%c0_56, %c144] : memref<128x256xbf16, #tpu.memory_space<vmem>>, vector<128x16xbf16>
    tpu.vector_store %arg5[%c0_56, %c144], %28 {strides = array<i32>} : memref<128x256xbf16, #tpu.memory_space<vmem>>, vector<128x16xbf16>,
    %c0_57 = arith.constant 0 : index
    %c1_58 = arith.constant 1 : index
    %c1_59 = arith.constant 1 : index
    %c0_60 = arith.constant 0 : index
    %c0_61 = arith.constant 0 : index
    %30 = vector.load %arg1[%c0_57, %c1_58, %c1_59, %c0_60, %c0_61] : memref<2x9x4x9x16xbf16, #tpu.memory_space<vmem>>, vector<2x8x1x8x16xbf16>
    %31 = vector.shape_cast %30 : vector<2x8x1x8x16xbf16> to vector<128x16xbf16>
    %c0_62 = arith.constant 0 : index
    %c160 = arith.constant 160 : index
    %32 = vector.load %arg5[%c0_62, %c160] : memref<128x256xbf16, #tpu.memory_space<vmem>>, vector<128x16xbf16>
    tpu.vector_store %arg5[%c0_62, %c160], %31 {strides = array<i32>} : memref<128x256xbf16, #tpu.memory_space<vmem>>, vector<128x16xbf16>,
    %c0_63 = arith.constant 0 : index
    %c1_64 = arith.constant 1 : index
    %c1_65 = arith.constant 1 : index
    %c1_66 = arith.constant 1 : index
    %c0_67 = arith.constant 0 : index
    %33 = vector.load %arg1[%c0_63, %c1_64, %c1_65, %c1_66, %c0_67] : memref<2x9x4x9x16xbf16, #tpu.memory_space<vmem>>, vector<2x8x1x8x16xbf16>
    %34 = vector.shape_cast %33 : vector<2x8x1x8x16xbf16> to vector<128x16xbf16>
    %c0_68 = arith.constant 0 : index
    %c176 = arith.constant 176 : index
    %35 = vector.load %arg5[%c0_68, %c176] : memref<128x256xbf16, #tpu.memory_space<vmem>>, vector<128x16xbf16>
    tpu.vector_store %arg5[%c0_68, %c176], %34 {strides = array<i32>} : memref<128x256xbf16, #tpu.memory_space<vmem>>, vector<128x16xbf16>,
    %c0_69 = arith.constant 0 : index
    %c1_70 = arith.constant 1 : index
    %c2_71 = arith.constant 2 : index
    %c0_72 = arith.constant 0 : index
    %c0_73 = arith.constant 0 : index
    %36 = vector.load %arg1[%c0_69, %c1_70, %c2_71, %c0_72, %c0_73] : memref<2x9x4x9x16xbf16, #tpu.memory_space<vmem>>, vector<2x8x1x8x16xbf16>
    %37 = vector.shape_cast %36 : vector<2x8x1x8x16xbf16> to vector<128x16xbf16>
    %c0_74 = arith.constant 0 : index
    %c192 = arith.constant 192 : index
    %38 = vector.load %arg5[%c0_74, %c192] : memref<128x256xbf16, #tpu.memory_space<vmem>>, vector<128x16xbf16>
    tpu.vector_store %arg5[%c0_74, %c192], %37 {strides = array<i32>} : memref<128x256xbf16, #tpu.memory_space<vmem>>, vector<128x16xbf16>,
    %c0_75 = arith.constant 0 : index
    %c1_76 = arith.constant 1 : index
    %c2_77 = arith.constant 2 : index
    %c1_78 = arith.constant 1 : index
    %c0_79 = arith.constant 0 : index
    %39 = vector.load %arg1[%c0_75, %c1_76, %c2_77, %c1_78, %c0_79] : memref<2x9x4x9x16xbf16, #tpu.memory_space<vmem>>, vector<2x8x1x8x16xbf16>
    %40 = vector.shape_cast %39 : vector<2x8x1x8x16xbf16> to vector<128x16xbf16>
    %c0_80 = arith.constant 0 : index
    %c208 = arith.constant 208 : index
    %41 = vector.load %arg5[%c0_80, %c208] : memref<128x256xbf16, #tpu.memory_space<vmem>>, vector<128x16xbf16>
    tpu.vector_store %arg5[%c0_80, %c208], %40 {strides = array<i32>} : memref<128x256xbf16, #tpu.memory_space<vmem>>, vector<128x16xbf16>,
    %c0_81 = arith.constant 0 : index
    %c1_82 = arith.constant 1 : index
    %c3_83 = arith.constant 3 : index
    %c0_84 = arith.constant 0 : index
    %c0_85 = arith.constant 0 : index
    %42 = vector.load %arg1[%c0_81, %c1_82, %c3_83, %c0_84, %c0_85] : memref<2x9x4x9x16xbf16, #tpu.memory_space<vmem>>, vector<2x8x1x8x16xbf16>
    %43 = vector.shape_cast %42 : vector<2x8x1x8x16xbf16> to vector<128x16xbf16>
    %c0_86 = arith.constant 0 : index
    %c224 = arith.constant 224 : index
    %44 = vector.load %arg5[%c0_86, %c224] : memref<128x256xbf16, #tpu.memory_space<vmem>>, vector<128x16xbf16>
    tpu.vector_store %arg5[%c0_86, %c224], %43 {strides = array<i32>} : memref<128x256xbf16, #tpu.memory_space<vmem>>, vector<128x16xbf16>,
    %c0_87 = arith.constant 0 : index
    %c1_88 = arith.constant 1 : index
    %c3_89 = arith.constant 3 : index
    %c1_90 = arith.constant 1 : index
    %c0_91 = arith.constant 0 : index
    %45 = vector.load %arg1[%c0_87, %c1_88, %c3_89, %c1_90, %c0_91] : memref<2x9x4x9x16xbf16, #tpu.memory_space<vmem>>, vector<2x8x1x8x16xbf16>
    %46 = vector.shape_cast %45 : vector<2x8x1x8x16xbf16> to vector<128x16xbf16>
    %c0_92 = arith.constant 0 : index
    %c240 = arith.constant 240 : index
    %47 = vector.load %arg5[%c0_92, %c240] : memref<128x256xbf16, #tpu.memory_space<vmem>>, vector<128x16xbf16>
    tpu.vector_store %arg5[%c0_92, %c240], %46 {strides = array<i32>} : memref<128x256xbf16, #tpu.memory_space<vmem>>, vector<128x16xbf16>,
    %c0_93 = arith.constant 0 : index
    %c0_94 = arith.constant 0 : index
    %48 = vector.load %arg5[%c0_93, %c0_94] : memref<128x256xbf16, #tpu.memory_space<vmem>>, vector<128x256xbf16>
    %c0_95 = arith.constant 0 : index
    %c0_96 = arith.constant 0 : index
    %49 = vector.load %arg2[%c0_95, %c0_96] : memref<256x64xbf16, #tpu.memory_space<vmem>>, vector<256x64xbf16>
    %cst = arith.constant dense<0.000000e+00> : vector<128x64xf32>
    %50 = tpu.matmul %48, %49, %cst {dimension_numbers = #tpu.dot_dimension_numbers<[1], [0], [0], [1], [0, 0, 1, 1], [], []>} : vector<128x256xbf16>, vector<256x64xbf16>, vector<128x64xf32> -> vector<128x64xf32>
    %c0_97 = arith.constant 0 : index
    %c0_98 = arith.constant 0 : index
    %51 = vector.load %arg3[%c0_97, %c0_98] : memref<1x64xf32, #tpu.memory_space<vmem>>, vector<1x64xf32>
    %52 = vector.broadcast %51 : vector<1x64xf32> to vector<128x64xf32>
    %53 = arith.addf %50, %52 : vector<128x64xf32>
    %cst_99 = arith.constant 0.000000e+00 : f32
    %54 = vector.broadcast %cst_99 : f32 to vector<128x64xf32>
    %55 = arith.maximumf %53, %54 : vector<128x64xf32>
    %56 = arith.truncf %55 : vector<128x64xf32> to vector<128x64xbf16>
    %57 = vector.shape_cast %56 : vector<128x64xbf16> to vector<2x8x8x64xbf16>
    %c0_100 = arith.constant 0 : index
    %c0_101 = arith.constant 0 : index
    %c0_102 = arith.constant 0 : index
    %c0_103 = arith.constant 0 : index
    %58 = vector.load %arg4[%c0_100, %c0_101, %c0_102, %c0_103] : memref<2x8x8x64xbf16, #tpu.memory_space<vmem>>, vector<2x8x8x64xbf16>
    tpu.vector_store %arg4[%c0_100, %c0_101, %c0_102, %c0_103], %57 {strides = array<i32>} : memref<2x8x8x64xbf16, #tpu.memory_space<vmem>>, vector<2x8x8x64xbf16>,
    return
  }
  func.func @transform_0(%arg0: i32) -> (i32, i32, i32, i32, i32) {
    %c0_i32 = arith.constant 0 : i32
    %c0_i32_0 = arith.constant 0 : i32
    %c0_i32_1 = arith.constant 0 : i32
    %c0_i32_2 = arith.constant 0 : i32
    %c0_i32_3 = arith.constant 0 : i32
    return %arg0, %c0_i32, %c0_i32_0, %c0_i32_1, %c0_i32_2 : i32, i32, i32, i32, i32
  }
  func.func @transform_1(%arg0: i32) -> (i32, i32) {
    %c0_i32 = arith.constant 0 : i32
    %c0_i32_0 = arith.constant 0 : i32
    %c0_i32_1 = arith.constant 0 : i32
    return %c0_i32, %c0_i32_0 : i32, i32
  }
  func.func @transform_2(%arg0: i32) -> (i32, i32) {
    %c0_i32 = arith.constant 0 : i32
    %c0_i32_0 = arith.constant 0 : i32
    %c0_i32_1 = arith.constant 0 : i32
    return %c0_i32, %c0_i32_0 : i32, i32
  }
  func.func @transform_3(%arg0: i32) -> (i32, i32, i32, i32) {
    %c0_i32 = arith.constant 0 : i32
    %c0_i32_0 = arith.constant 0 : i32
    %c0_i32_1 = arith.constant 0 : i32
    %c0_i32_2 = arith.constant 0 : i32
    return %arg0, %c0_i32, %c0_i32_0, %c0_i32_1 : i32, i32, i32, i32
  }
}

module attributes {stable_mosaic.version = 11 : i64} {
  func.func @_conv_relu_kernel(%arg0: i32, %arg1: memref<2x4x2x9x128xbf16, #tpu.memory_space<vmem>>, %arg2: memref<1024x64xbf16, #tpu.memory_space<vmem>>, %arg3: memref<1x64xf32, #tpu.memory_space<vmem>>, %arg4: memref<2x3x8x64xbf16, #tpu.memory_space<vmem>>, %arg5: memref<48x1024xbf16, #tpu.memory_space<vmem>>) attributes {dimension_semantics = [#tpu.dimension_semantics<parallel>], iteration_bounds = array<i64: 2>, scalar_prefetch = 0 : i64, scratch_operands = 1 : i64, tpu.core_type = #tpu.core_type<tc>, window_params = [{transform_indices = @transform_0, window_bounds = array<i64: 2, 4, 2, 9, 128>}, {pipeline_mode = #tpu.pipeline_mode<synchronous>, transform_indices = @transform_1, window_bounds = array<i64: 1024, 64>}, {pipeline_mode = #tpu.pipeline_mode<synchronous>, transform_indices = @transform_2, window_bounds = array<i64: 1, 64>}, {transform_indices = @transform_3, window_bounds = array<i64: 2, 3, 8, 64>}]} {
    %c0 = arith.constant 0 : index
    %c0_0 = arith.constant 0 : index
    %c0_1 = arith.constant 0 : index
    %c0_2 = arith.constant 0 : index
    %c0_3 = arith.constant 0 : index
    %0 = vector.load %arg1[%c0, %c0_0, %c0_1, %c0_2, %c0_3] : memref<2x4x2x9x128xbf16, #tpu.memory_space<vmem>>, vector<2x3x1x8x128xbf16>
    %1 = vector.shape_cast %0 : vector<2x3x1x8x128xbf16> to vector<48x128xbf16>
    %c0_4 = arith.constant 0 : index
    %c0_5 = arith.constant 0 : index
    %2 = vector.load %arg5[%c0_4, %c0_5] : memref<48x1024xbf16, #tpu.memory_space<vmem>>, vector<48x128xbf16>
    tpu.vector_store %arg5[%c0_4, %c0_5], %1 {strides = array<i32>} : memref<48x1024xbf16, #tpu.memory_space<vmem>>, vector<48x128xbf16>,
    %c0_6 = arith.constant 0 : index
    %c0_7 = arith.constant 0 : index
    %c0_8 = arith.constant 0 : index
    %c1 = arith.constant 1 : index
    %c0_9 = arith.constant 0 : index
    %3 = vector.load %arg1[%c0_6, %c0_7, %c0_8, %c1, %c0_9] : memref<2x4x2x9x128xbf16, #tpu.memory_space<vmem>>, vector<2x3x1x8x128xbf16>
    %4 = vector.shape_cast %3 : vector<2x3x1x8x128xbf16> to vector<48x128xbf16>
    %c0_10 = arith.constant 0 : index
    %c128 = arith.constant 128 : index
    %5 = vector.load %arg5[%c0_10, %c128] : memref<48x1024xbf16, #tpu.memory_space<vmem>>, vector<48x128xbf16>
    tpu.vector_store %arg5[%c0_10, %c128], %4 {strides = array<i32>} : memref<48x1024xbf16, #tpu.memory_space<vmem>>, vector<48x128xbf16>,
    %c0_11 = arith.constant 0 : index
    %c0_12 = arith.constant 0 : index
    %c1_13 = arith.constant 1 : index
    %c0_14 = arith.constant 0 : index
    %c0_15 = arith.constant 0 : index
    %6 = vector.load %arg1[%c0_11, %c0_12, %c1_13, %c0_14, %c0_15] : memref<2x4x2x9x128xbf16, #tpu.memory_space<vmem>>, vector<2x3x1x8x128xbf16>
    %7 = vector.shape_cast %6 : vector<2x3x1x8x128xbf16> to vector<48x128xbf16>
    %c0_16 = arith.constant 0 : index
    %c256 = arith.constant 256 : index
    %8 = vector.load %arg5[%c0_16, %c256] : memref<48x1024xbf16, #tpu.memory_space<vmem>>, vector<48x128xbf16>
    tpu.vector_store %arg5[%c0_16, %c256], %7 {strides = array<i32>} : memref<48x1024xbf16, #tpu.memory_space<vmem>>, vector<48x128xbf16>,
    %c0_17 = arith.constant 0 : index
    %c0_18 = arith.constant 0 : index
    %c1_19 = arith.constant 1 : index
    %c1_20 = arith.constant 1 : index
    %c0_21 = arith.constant 0 : index
    %9 = vector.load %arg1[%c0_17, %c0_18, %c1_19, %c1_20, %c0_21] : memref<2x4x2x9x128xbf16, #tpu.memory_space<vmem>>, vector<2x3x1x8x128xbf16>
    %10 = vector.shape_cast %9 : vector<2x3x1x8x128xbf16> to vector<48x128xbf16>
    %c0_22 = arith.constant 0 : index
    %c384 = arith.constant 384 : index
    %11 = vector.load %arg5[%c0_22, %c384] : memref<48x1024xbf16, #tpu.memory_space<vmem>>, vector<48x128xbf16>
    tpu.vector_store %arg5[%c0_22, %c384], %10 {strides = array<i32>} : memref<48x1024xbf16, #tpu.memory_space<vmem>>, vector<48x128xbf16>,
    %c0_23 = arith.constant 0 : index
    %c1_24 = arith.constant 1 : index
    %c0_25 = arith.constant 0 : index
    %c0_26 = arith.constant 0 : index
    %c0_27 = arith.constant 0 : index
    %12 = vector.load %arg1[%c0_23, %c1_24, %c0_25, %c0_26, %c0_27] : memref<2x4x2x9x128xbf16, #tpu.memory_space<vmem>>, vector<2x3x1x8x128xbf16>
    %13 = vector.shape_cast %12 : vector<2x3x1x8x128xbf16> to vector<48x128xbf16>
    %c0_28 = arith.constant 0 : index
    %c512 = arith.constant 512 : index
    %14 = vector.load %arg5[%c0_28, %c512] : memref<48x1024xbf16, #tpu.memory_space<vmem>>, vector<48x128xbf16>
    tpu.vector_store %arg5[%c0_28, %c512], %13 {strides = array<i32>} : memref<48x1024xbf16, #tpu.memory_space<vmem>>, vector<48x128xbf16>,
    %c0_29 = arith.constant 0 : index
    %c1_30 = arith.constant 1 : index
    %c0_31 = arith.constant 0 : index
    %c1_32 = arith.constant 1 : index
    %c0_33 = arith.constant 0 : index
    %15 = vector.load %arg1[%c0_29, %c1_30, %c0_31, %c1_32, %c0_33] : memref<2x4x2x9x128xbf16, #tpu.memory_space<vmem>>, vector<2x3x1x8x128xbf16>
    %16 = vector.shape_cast %15 : vector<2x3x1x8x128xbf16> to vector<48x128xbf16>
    %c0_34 = arith.constant 0 : index
    %c640 = arith.constant 640 : index
    %17 = vector.load %arg5[%c0_34, %c640] : memref<48x1024xbf16, #tpu.memory_space<vmem>>, vector<48x128xbf16>
    tpu.vector_store %arg5[%c0_34, %c640], %16 {strides = array<i32>} : memref<48x1024xbf16, #tpu.memory_space<vmem>>, vector<48x128xbf16>,
    %c0_35 = arith.constant 0 : index
    %c1_36 = arith.constant 1 : index
    %c1_37 = arith.constant 1 : index
    %c0_38 = arith.constant 0 : index
    %c0_39 = arith.constant 0 : index
    %18 = vector.load %arg1[%c0_35, %c1_36, %c1_37, %c0_38, %c0_39] : memref<2x4x2x9x128xbf16, #tpu.memory_space<vmem>>, vector<2x3x1x8x128xbf16>
    %19 = vector.shape_cast %18 : vector<2x3x1x8x128xbf16> to vector<48x128xbf16>
    %c0_40 = arith.constant 0 : index
    %c768 = arith.constant 768 : index
    %20 = vector.load %arg5[%c0_40, %c768] : memref<48x1024xbf16, #tpu.memory_space<vmem>>, vector<48x128xbf16>
    tpu.vector_store %arg5[%c0_40, %c768], %19 {strides = array<i32>} : memref<48x1024xbf16, #tpu.memory_space<vmem>>, vector<48x128xbf16>,
    %c0_41 = arith.constant 0 : index
    %c1_42 = arith.constant 1 : index
    %c1_43 = arith.constant 1 : index
    %c1_44 = arith.constant 1 : index
    %c0_45 = arith.constant 0 : index
    %21 = vector.load %arg1[%c0_41, %c1_42, %c1_43, %c1_44, %c0_45] : memref<2x4x2x9x128xbf16, #tpu.memory_space<vmem>>, vector<2x3x1x8x128xbf16>
    %22 = vector.shape_cast %21 : vector<2x3x1x8x128xbf16> to vector<48x128xbf16>
    %c0_46 = arith.constant 0 : index
    %c896 = arith.constant 896 : index
    %23 = vector.load %arg5[%c0_46, %c896] : memref<48x1024xbf16, #tpu.memory_space<vmem>>, vector<48x128xbf16>
    tpu.vector_store %arg5[%c0_46, %c896], %22 {strides = array<i32>} : memref<48x1024xbf16, #tpu.memory_space<vmem>>, vector<48x128xbf16>,
    %c0_47 = arith.constant 0 : index
    %c0_48 = arith.constant 0 : index
    %24 = vector.load %arg5[%c0_47, %c0_48] : memref<48x1024xbf16, #tpu.memory_space<vmem>>, vector<48x1024xbf16>
    %c0_49 = arith.constant 0 : index
    %c0_50 = arith.constant 0 : index
    %25 = vector.load %arg2[%c0_49, %c0_50] : memref<1024x64xbf16, #tpu.memory_space<vmem>>, vector<1024x64xbf16>
    %cst = arith.constant dense<0.000000e+00> : vector<48x64xf32>
    %26 = tpu.matmul %24, %25, %cst {dimension_numbers = #tpu.dot_dimension_numbers<[1], [0], [0], [1], [0, 0, 1, 1], [], []>} : vector<48x1024xbf16>, vector<1024x64xbf16>, vector<48x64xf32> -> vector<48x64xf32>
    %c0_51 = arith.constant 0 : index
    %c0_52 = arith.constant 0 : index
    %27 = vector.load %arg3[%c0_51, %c0_52] : memref<1x64xf32, #tpu.memory_space<vmem>>, vector<1x64xf32>
    %28 = vector.broadcast %27 : vector<1x64xf32> to vector<48x64xf32>
    %29 = arith.addf %26, %28 : vector<48x64xf32>
    %cst_53 = arith.constant 0.000000e+00 : f32
    %30 = vector.broadcast %cst_53 : f32 to vector<48x64xf32>
    %31 = arith.maximumf %29, %30 : vector<48x64xf32>
    %32 = arith.truncf %31 : vector<48x64xf32> to vector<48x64xbf16>
    %33 = vector.shape_cast %32 : vector<48x64xbf16> to vector<2x3x8x64xbf16>
    %c0_54 = arith.constant 0 : index
    %c0_55 = arith.constant 0 : index
    %c0_56 = arith.constant 0 : index
    %c0_57 = arith.constant 0 : index
    %34 = vector.load %arg4[%c0_54, %c0_55, %c0_56, %c0_57] : memref<2x3x8x64xbf16, #tpu.memory_space<vmem>>, vector<2x3x8x64xbf16>
    tpu.vector_store %arg4[%c0_54, %c0_55, %c0_56, %c0_57], %33 {strides = array<i32>} : memref<2x3x8x64xbf16, #tpu.memory_space<vmem>>, vector<2x3x8x64xbf16>,
    return
  }
  func.func @transform_0(%arg0: i32) -> (i32, i32, i32, i32, i32) {
    %c0_i32 = arith.constant 0 : i32
    %c0_i32_0 = arith.constant 0 : i32
    %c0_i32_1 = arith.constant 0 : i32
    %c0_i32_2 = arith.constant 0 : i32
    %c0_i32_3 = arith.constant 0 : i32
    return %arg0, %c0_i32, %c0_i32_0, %c0_i32_1, %c0_i32_2 : i32, i32, i32, i32, i32
  }
  func.func @transform_1(%arg0: i32) -> (i32, i32) {
    %c0_i32 = arith.constant 0 : i32
    %c0_i32_0 = arith.constant 0 : i32
    %c0_i32_1 = arith.constant 0 : i32
    return %c0_i32, %c0_i32_0 : i32, i32
  }
  func.func @transform_2(%arg0: i32) -> (i32, i32) {
    %c0_i32 = arith.constant 0 : i32
    %c0_i32_0 = arith.constant 0 : i32
    %c0_i32_1 = arith.constant 0 : i32
    return %c0_i32, %c0_i32_0 : i32, i32
  }
  func.func @transform_3(%arg0: i32) -> (i32, i32, i32, i32) {
    %c0_i32 = arith.constant 0 : i32
    %c0_i32_0 = arith.constant 0 : i32
    %c0_i32_1 = arith.constant 0 : i32
    %c0_i32_2 = arith.constant 0 : i32
    return %arg0, %c0_i32, %c0_i32_0, %c0_i32_1 : i32, i32, i32, i32
  }
}

module attributes {stable_mosaic.version = 11 : i64} {
  func.func @_conv_relu_kernel(%arg0: i32, %arg1: memref<2x3x1x10x64xbf16, #tpu.memory_space<vmem>>, %arg2: memref<576x64xbf16, #tpu.memory_space<vmem>>, %arg3: memref<1x64xf32, #tpu.memory_space<vmem>>, %arg4: memref<2x1x8x64xbf16, #tpu.memory_space<vmem>>, %arg5: memref<16x576xbf16, #tpu.memory_space<vmem>>) attributes {dimension_semantics = [#tpu.dimension_semantics<parallel>], iteration_bounds = array<i64: 2>, scalar_prefetch = 0 : i64, scratch_operands = 1 : i64, tpu.core_type = #tpu.core_type<tc>, window_params = [{transform_indices = @transform_0, window_bounds = array<i64: 2, 3, 1, 10, 64>}, {pipeline_mode = #tpu.pipeline_mode<synchronous>, transform_indices = @transform_1, window_bounds = array<i64: 576, 64>}, {pipeline_mode = #tpu.pipeline_mode<synchronous>, transform_indices = @transform_2, window_bounds = array<i64: 1, 64>}, {transform_indices = @transform_3, window_bounds = array<i64: 2, 1, 8, 64>}]} {
    %c0 = arith.constant 0 : index
    %c0_0 = arith.constant 0 : index
    %c0_1 = arith.constant 0 : index
    %c0_2 = arith.constant 0 : index
    %c0_3 = arith.constant 0 : index
    %0 = vector.load %arg1[%c0, %c0_0, %c0_1, %c0_2, %c0_3] : memref<2x3x1x10x64xbf16, #tpu.memory_space<vmem>>, vector<2x1x1x8x64xbf16>
    %1 = vector.shape_cast %0 : vector<2x1x1x8x64xbf16> to vector<16x64xbf16>
    %c0_4 = arith.constant 0 : index
    %c0_5 = arith.constant 0 : index
    %2 = vector.load %arg5[%c0_4, %c0_5] : memref<16x576xbf16, #tpu.memory_space<vmem>>, vector<16x64xbf16>
    tpu.vector_store %arg5[%c0_4, %c0_5], %1 {strides = array<i32>} : memref<16x576xbf16, #tpu.memory_space<vmem>>, vector<16x64xbf16>,
    %c0_6 = arith.constant 0 : index
    %c0_7 = arith.constant 0 : index
    %c0_8 = arith.constant 0 : index
    %c1 = arith.constant 1 : index
    %c0_9 = arith.constant 0 : index
    %3 = vector.load %arg1[%c0_6, %c0_7, %c0_8, %c1, %c0_9] : memref<2x3x1x10x64xbf16, #tpu.memory_space<vmem>>, vector<2x1x1x8x64xbf16>
    %4 = vector.shape_cast %3 : vector<2x1x1x8x64xbf16> to vector<16x64xbf16>
    %c0_10 = arith.constant 0 : index
    %c64 = arith.constant 64 : index
    %5 = vector.load %arg5[%c0_10, %c64] : memref<16x576xbf16, #tpu.memory_space<vmem>>, vector<16x64xbf16>
    tpu.vector_store %arg5[%c0_10, %c64], %4 {strides = array<i32>} : memref<16x576xbf16, #tpu.memory_space<vmem>>, vector<16x64xbf16>,
    %c0_11 = arith.constant 0 : index
    %c0_12 = arith.constant 0 : index
    %c0_13 = arith.constant 0 : index
    %c2 = arith.constant 2 : index
    %c0_14 = arith.constant 0 : index
    %6 = vector.load %arg1[%c0_11, %c0_12, %c0_13, %c2, %c0_14] : memref<2x3x1x10x64xbf16, #tpu.memory_space<vmem>>, vector<2x1x1x8x64xbf16>
    %7 = vector.shape_cast %6 : vector<2x1x1x8x64xbf16> to vector<16x64xbf16>
    %c0_15 = arith.constant 0 : index
    %c128 = arith.constant 128 : index
    %8 = vector.load %arg5[%c0_15, %c128] : memref<16x576xbf16, #tpu.memory_space<vmem>>, vector<16x64xbf16>
    tpu.vector_store %arg5[%c0_15, %c128], %7 {strides = array<i32>} : memref<16x576xbf16, #tpu.memory_space<vmem>>, vector<16x64xbf16>,
    %c0_16 = arith.constant 0 : index
    %c1_17 = arith.constant 1 : index
    %c0_18 = arith.constant 0 : index
    %c0_19 = arith.constant 0 : index
    %c0_20 = arith.constant 0 : index
    %9 = vector.load %arg1[%c0_16, %c1_17, %c0_18, %c0_19, %c0_20] : memref<2x3x1x10x64xbf16, #tpu.memory_space<vmem>>, vector<2x1x1x8x64xbf16>
    %10 = vector.shape_cast %9 : vector<2x1x1x8x64xbf16> to vector<16x64xbf16>
    %c0_21 = arith.constant 0 : index
    %c192 = arith.constant 192 : index
    %11 = vector.load %arg5[%c0_21, %c192] : memref<16x576xbf16, #tpu.memory_space<vmem>>, vector<16x64xbf16>
    tpu.vector_store %arg5[%c0_21, %c192], %10 {strides = array<i32>} : memref<16x576xbf16, #tpu.memory_space<vmem>>, vector<16x64xbf16>,
    %c0_22 = arith.constant 0 : index
    %c1_23 = arith.constant 1 : index
    %c0_24 = arith.constant 0 : index
    %c1_25 = arith.constant 1 : index
    %c0_26 = arith.constant 0 : index
    %12 = vector.load %arg1[%c0_22, %c1_23, %c0_24, %c1_25, %c0_26] : memref<2x3x1x10x64xbf16, #tpu.memory_space<vmem>>, vector<2x1x1x8x64xbf16>
    %13 = vector.shape_cast %12 : vector<2x1x1x8x64xbf16> to vector<16x64xbf16>
    %c0_27 = arith.constant 0 : index
    %c256 = arith.constant 256 : index
    %14 = vector.load %arg5[%c0_27, %c256] : memref<16x576xbf16, #tpu.memory_space<vmem>>, vector<16x64xbf16>
    tpu.vector_store %arg5[%c0_27, %c256], %13 {strides = array<i32>} : memref<16x576xbf16, #tpu.memory_space<vmem>>, vector<16x64xbf16>,
    %c0_28 = arith.constant 0 : index
    %c1_29 = arith.constant 1 : index
    %c0_30 = arith.constant 0 : index
    %c2_31 = arith.constant 2 : index
    %c0_32 = arith.constant 0 : index
    %15 = vector.load %arg1[%c0_28, %c1_29, %c0_30, %c2_31, %c0_32] : memref<2x3x1x10x64xbf16, #tpu.memory_space<vmem>>, vector<2x1x1x8x64xbf16>
    %16 = vector.shape_cast %15 : vector<2x1x1x8x64xbf16> to vector<16x64xbf16>
    %c0_33 = arith.constant 0 : index
    %c320 = arith.constant 320 : index
    %17 = vector.load %arg5[%c0_33, %c320] : memref<16x576xbf16, #tpu.memory_space<vmem>>, vector<16x64xbf16>
    tpu.vector_store %arg5[%c0_33, %c320], %16 {strides = array<i32>} : memref<16x576xbf16, #tpu.memory_space<vmem>>, vector<16x64xbf16>,
    %c0_34 = arith.constant 0 : index
    %c2_35 = arith.constant 2 : index
    %c0_36 = arith.constant 0 : index
    %c0_37 = arith.constant 0 : index
    %c0_38 = arith.constant 0 : index
    %18 = vector.load %arg1[%c0_34, %c2_35, %c0_36, %c0_37, %c0_38] : memref<2x3x1x10x64xbf16, #tpu.memory_space<vmem>>, vector<2x1x1x8x64xbf16>
    %19 = vector.shape_cast %18 : vector<2x1x1x8x64xbf16> to vector<16x64xbf16>
    %c0_39 = arith.constant 0 : index
    %c384 = arith.constant 384 : index
    %20 = vector.load %arg5[%c0_39, %c384] : memref<16x576xbf16, #tpu.memory_space<vmem>>, vector<16x64xbf16>
    tpu.vector_store %arg5[%c0_39, %c384], %19 {strides = array<i32>} : memref<16x576xbf16, #tpu.memory_space<vmem>>, vector<16x64xbf16>,
    %c0_40 = arith.constant 0 : index
    %c2_41 = arith.constant 2 : index
    %c0_42 = arith.constant 0 : index
    %c1_43 = arith.constant 1 : index
    %c0_44 = arith.constant 0 : index
    %21 = vector.load %arg1[%c0_40, %c2_41, %c0_42, %c1_43, %c0_44] : memref<2x3x1x10x64xbf16, #tpu.memory_space<vmem>>, vector<2x1x1x8x64xbf16>
    %22 = vector.shape_cast %21 : vector<2x1x1x8x64xbf16> to vector<16x64xbf16>
    %c0_45 = arith.constant 0 : index
    %c448 = arith.constant 448 : index
    %23 = vector.load %arg5[%c0_45, %c448] : memref<16x576xbf16, #tpu.memory_space<vmem>>, vector<16x64xbf16>
    tpu.vector_store %arg5[%c0_45, %c448], %22 {strides = array<i32>} : memref<16x576xbf16, #tpu.memory_space<vmem>>, vector<16x64xbf16>,
    %c0_46 = arith.constant 0 : index
    %c2_47 = arith.constant 2 : index
    %c0_48 = arith.constant 0 : index
    %c2_49 = arith.constant 2 : index
    %c0_50 = arith.constant 0 : index
    %24 = vector.load %arg1[%c0_46, %c2_47, %c0_48, %c2_49, %c0_50] : memref<2x3x1x10x64xbf16, #tpu.memory_space<vmem>>, vector<2x1x1x8x64xbf16>
    %25 = vector.shape_cast %24 : vector<2x1x1x8x64xbf16> to vector<16x64xbf16>
    %c0_51 = arith.constant 0 : index
    %c512 = arith.constant 512 : index
    %26 = vector.load %arg5[%c0_51, %c512] : memref<16x576xbf16, #tpu.memory_space<vmem>>, vector<16x64xbf16>
    tpu.vector_store %arg5[%c0_51, %c512], %25 {strides = array<i32>} : memref<16x576xbf16, #tpu.memory_space<vmem>>, vector<16x64xbf16>,
    %c0_52 = arith.constant 0 : index
    %c0_53 = arith.constant 0 : index
    %27 = vector.load %arg5[%c0_52, %c0_53] : memref<16x576xbf16, #tpu.memory_space<vmem>>, vector<16x576xbf16>
    %c0_54 = arith.constant 0 : index
    %c0_55 = arith.constant 0 : index
    %28 = vector.load %arg2[%c0_54, %c0_55] : memref<576x64xbf16, #tpu.memory_space<vmem>>, vector<576x64xbf16>
    %cst = arith.constant dense<0.000000e+00> : vector<16x64xf32>
    %29 = tpu.matmul %27, %28, %cst {dimension_numbers = #tpu.dot_dimension_numbers<[1], [0], [0], [1], [0, 0, 1, 1], [], []>} : vector<16x576xbf16>, vector<576x64xbf16>, vector<16x64xf32> -> vector<16x64xf32>
    %c0_56 = arith.constant 0 : index
    %c0_57 = arith.constant 0 : index
    %30 = vector.load %arg3[%c0_56, %c0_57] : memref<1x64xf32, #tpu.memory_space<vmem>>, vector<1x64xf32>
    %31 = vector.broadcast %30 : vector<1x64xf32> to vector<16x64xf32>
    %32 = arith.addf %29, %31 : vector<16x64xf32>
    %cst_58 = arith.constant 0.000000e+00 : f32
    %33 = vector.broadcast %cst_58 : f32 to vector<16x64xf32>
    %34 = arith.maximumf %32, %33 : vector<16x64xf32>
    %35 = arith.truncf %34 : vector<16x64xf32> to vector<16x64xbf16>
    %36 = vector.shape_cast %35 : vector<16x64xbf16> to vector<2x1x8x64xbf16>
    %c0_59 = arith.constant 0 : index
    %c0_60 = arith.constant 0 : index
    %c0_61 = arith.constant 0 : index
    %c0_62 = arith.constant 0 : index
    %37 = vector.load %arg4[%c0_59, %c0_60, %c0_61, %c0_62] : memref<2x1x8x64xbf16, #tpu.memory_space<vmem>>, vector<2x1x8x64xbf16>
    tpu.vector_store %arg4[%c0_59, %c0_60, %c0_61, %c0_62], %36 {strides = array<i32>} : memref<2x1x8x64xbf16, #tpu.memory_space<vmem>>, vector<2x1x8x64xbf16>,
    return
  }
  func.func @transform_0(%arg0: i32) -> (i32, i32, i32, i32, i32) {
    %c0_i32 = arith.constant 0 : i32
    %c0_i32_0 = arith.constant 0 : i32
    %c0_i32_1 = arith.constant 0 : i32
    %c0_i32_2 = arith.constant 0 : i32
    %c0_i32_3 = arith.constant 0 : i32
    return %arg0, %c0_i32, %c0_i32_0, %c0_i32_1, %c0_i32_2 : i32, i32, i32, i32, i32
  }
  func.func @transform_1(%arg0: i32) -> (i32, i32) {
    %c0_i32 = arith.constant 0 : i32
    %c0_i32_0 = arith.constant 0 : i32
    %c0_i32_1 = arith.constant 0 : i32
    return %c0_i32, %c0_i32_0 : i32, i32
  }
  func.func @transform_2(%arg0: i32) -> (i32, i32) {
    %c0_i32 = arith.constant 0 : i32
    %c0_i32_0 = arith.constant 0 : i32
    %c0_i32_1 = arith.constant 0 : i32
    return %c0_i32, %c0_i32_0 : i32, i32
  }
  func.func @transform_3(%arg0: i32) -> (i32, i32, i32, i32) {
    %c0_i32 = arith.constant 0 : i32
    %c0_i32_0 = arith.constant 0 : i32
    %c0_i32_1 = arith.constant 0 : i32
    %c0_i32_2 = arith.constant 0 : i32
    return %arg0, %c0_i32, %c0_i32_0, %c0_i32_1 : i32, i32, i32, i32
  }
}

module attributes {stable_mosaic.version = 11 : i64} {
  func.func @_fc_head_kernel(%arg0: i32, %arg1: memref<4x64xbf16, #tpu.memory_space<vmem>>, %arg2: memref<64x128xbf16, #tpu.memory_space<vmem>>, %arg3: memref<1x128xf32, #tpu.memory_space<vmem>>, %arg4: memref<128x128xbf16, #tpu.memory_space<vmem>>, %arg5: memref<1x128xf32, #tpu.memory_space<vmem>>, %arg6: memref<4x128xf32, #tpu.memory_space<vmem>>) attributes {dimension_semantics = [#tpu.dimension_semantics<parallel>], iteration_bounds = array<i64: 1>, scalar_prefetch = 0 : i64, scratch_operands = 0 : i64, tpu.core_type = #tpu.core_type<tc>, window_params = [{transform_indices = @transform_0, window_bounds = array<i64: 4, 64>}, {pipeline_mode = #tpu.pipeline_mode<synchronous>, transform_indices = @transform_1, window_bounds = array<i64: 64, 128>}, {pipeline_mode = #tpu.pipeline_mode<synchronous>, transform_indices = @transform_2, window_bounds = array<i64: 1, 128>}, {pipeline_mode = #tpu.pipeline_mode<synchronous>, transform_indices = @transform_3, window_bounds = array<i64: 128, 128>}, {pipeline_mode = #tpu.pipeline_mode<synchronous>, transform_indices = @transform_4, window_bounds = array<i64: 1, 128>}, {transform_indices = @transform_5, window_bounds = array<i64: 4, 128>}]} {
    %c0 = arith.constant 0 : index
    %c0_0 = arith.constant 0 : index
    %0 = vector.load %arg1[%c0, %c0_0] : memref<4x64xbf16, #tpu.memory_space<vmem>>, vector<4x64xbf16>
    %c0_1 = arith.constant 0 : index
    %c0_2 = arith.constant 0 : index
    %1 = vector.load %arg2[%c0_1, %c0_2] : memref<64x128xbf16, #tpu.memory_space<vmem>>, vector<64x128xbf16>
    %cst = arith.constant dense<0.000000e+00> : vector<4x128xf32>
    %2 = tpu.matmul %0, %1, %cst {dimension_numbers = #tpu.dot_dimension_numbers<[1], [0], [0], [1], [0, 0, 1, 1], [], []>} : vector<4x64xbf16>, vector<64x128xbf16>, vector<4x128xf32> -> vector<4x128xf32>
    %c0_3 = arith.constant 0 : index
    %c0_4 = arith.constant 0 : index
    %3 = vector.load %arg3[%c0_3, %c0_4] : memref<1x128xf32, #tpu.memory_space<vmem>>, vector<1x128xf32>
    %4 = vector.broadcast %3 : vector<1x128xf32> to vector<4x128xf32>
    %5 = arith.addf %2, %4 : vector<4x128xf32>
    %cst_5 = arith.constant 0.000000e+00 : f32
    %6 = vector.broadcast %cst_5 : f32 to vector<4x128xf32>
    %7 = arith.maximumf %5, %6 : vector<4x128xf32>
    %8 = arith.truncf %7 : vector<4x128xf32> to vector<4x128xbf16>
    %c0_6 = arith.constant 0 : index
    %c0_7 = arith.constant 0 : index
    %9 = vector.load %arg4[%c0_6, %c0_7] : memref<128x128xbf16, #tpu.memory_space<vmem>>, vector<128x128xbf16>
    %cst_8 = arith.constant dense<0.000000e+00> : vector<4x128xf32>
    %10 = tpu.matmul %8, %9, %cst_8 {dimension_numbers = #tpu.dot_dimension_numbers<[1], [0], [0], [1], [0, 0, 1, 1], [], []>} : vector<4x128xbf16>, vector<128x128xbf16>, vector<4x128xf32> -> vector<4x128xf32>
    %c0_9 = arith.constant 0 : index
    %c0_10 = arith.constant 0 : index
    %11 = vector.load %arg5[%c0_9, %c0_10] : memref<1x128xf32, #tpu.memory_space<vmem>>, vector<1x128xf32>
    %12 = vector.broadcast %11 : vector<1x128xf32> to vector<4x128xf32>
    %13 = arith.addf %10, %12 : vector<4x128xf32>
    %c0_11 = arith.constant 0 : index
    %c0_12 = arith.constant 0 : index
    %14 = vector.load %arg6[%c0_11, %c0_12] : memref<4x128xf32, #tpu.memory_space<vmem>>, vector<4x128xf32>
    tpu.vector_store %arg6[%c0_11, %c0_12], %13 {strides = array<i32>} : memref<4x128xf32, #tpu.memory_space<vmem>>, vector<4x128xf32>,
    return
  }
  func.func @transform_0(%arg0: i32) -> (i32, i32) {
    %c0_i32 = arith.constant 0 : i32
    %c0_i32_0 = arith.constant 0 : i32
    return %arg0, %c0_i32 : i32, i32
  }
  func.func @transform_1(%arg0: i32) -> (i32, i32) {
    %c0_i32 = arith.constant 0 : i32
    %c0_i32_0 = arith.constant 0 : i32
    %c0_i32_1 = arith.constant 0 : i32
    return %c0_i32, %c0_i32_0 : i32, i32
  }
  func.func @transform_2(%arg0: i32) -> (i32, i32) {
    %c0_i32 = arith.constant 0 : i32
    %c0_i32_0 = arith.constant 0 : i32
    %c0_i32_1 = arith.constant 0 : i32
    return %c0_i32, %c0_i32_0 : i32, i32
  }
  func.func @transform_3(%arg0: i32) -> (i32, i32) {
    %c0_i32 = arith.constant 0 : i32
    %c0_i32_0 = arith.constant 0 : i32
    %c0_i32_1 = arith.constant 0 : i32
    return %c0_i32, %c0_i32_0 : i32, i32
  }
  func.func @transform_4(%arg0: i32) -> (i32, i32) {
    %c0_i32 = arith.constant 0 : i32
    %c0_i32_0 = arith.constant 0 : i32
    %c0_i32_1 = arith.constant 0 : i32
    return %c0_i32, %c0_i32_0 : i32, i32
  }
  func.func @transform_5(%arg0: i32) -> (i32, i32) {
    %c0_i32 = arith.constant 0 : i32
    %c0_i32_0 = arith.constant 0 : i32
    return %arg0, %c0_i32 : i32, i32
  }
}

</mosaic_0001>

<llo_original>
// kernel: dqn_forward.4
$region0: #{dqn_forward.4}
  #allocation0 [shape = 'u32[]', space=smem, size = 0x4, offset = 0x4, fixed_abs, tag = 'smem constant byte address 0x4 - core index']
  #allocation1 [shape = 'u32[144,128]{1,0:T(1,128)}', space=vmem, size = 0x12000, scoped, tag = 'internal scratch']
  #allocation2 [shape = 'bf16[128,256]{1,0:T(16,128)(2,1)}', space=vmem, size = 0x10000, scoped, tag = 'scratch operand']
  %s0 = inlined_call_operand.vmem [shape: bf16[4,9,4,9,16], index: 0, kind: input, shape index: {}]
  %s1 = inlined_call_operand.vmem [shape: bf16[256,64], index: 1, kind: input, shape index: {}]
  %s2 = inlined_call_operand.vmem [shape: f32[1,64], index: 2, kind: input, shape index: {}]
  %s3 = inlined_call_operand.vmem [shape: bf16[4,8,8,64], index: 3, kind: output, shape index: {}]
  %s4 = sld [smem:[#allocation0]]
  $region45: #{dqn_forward.4} parent=0
    _
  %s6 = ssub.s32 1, %s4
  %s7 = scalar_select 0, %s6, %s4
  loop: start=0, step=1, limit=4
  $region2: #{dqn_forward.4} parent=0 // loop_pre_header
    _
  $region3: #{dqn_forward.4} parent=0 // loop_header
    %s9 = sphi 0, %s13
    %p10 = scmp.ge.s32.totalorder %s9, 4
    %s19 = sphi 0, %s21
    %s22 = sphi 0, %s19
    %s23 = sphi 0, %s22
    %s39 = sphi 0, %s23
    %s43 = sphi 0, %s43
    %s45 = sphi 0, %s43
    %s46 = sphi 0, %s45
    %s60 = sphi 0, %s46
    %s64 = sphi 0, %s64
    %s66 = sphi 0, %s64
    %s67 = sphi 0, %s66
    %s81 = sphi 0, %s67
    %s87 = sphi 0, %s89
    %s90 = sphi 0, %s87
    %s91 = sphi 0, %s90
    %s107 = sphi 0, %s91
  $region4: #{dqn_forward.4} parent=0 // loop_header_branch
    %12 = sbr.rel (%p10) target = $region8
  $region5: #{dqn_forward.4} parent=0 // loop_body
    %s14 = ssub.s32 %s9, 1
    %s15 = ssub.s32 %s9, 2
    %s16 = sadd.s32 %s9, 1
    %s17 = ssub.s32 %s9, %s16
    %p18 = scmp.eq.s32.totalorder %s17, 0
    %s20 = sadd.s32 %s19, 1
    %s21 = scalar_select %p18, %s19, %s20
    %p24 = pneg %p18
    %p25 = scmp.eq.s32.totalorder %s9, 1
    %p26 = por %p24, %p25
    %p27 = scmp.ne.s32.totalorder %s19, %s22
    %p28 = scmp.eq.s32.totalorder %s9, 0
    %p29 = por %p27, %p28
    %p30 = scmp.ne.s32.totalorder %s19, %s22
    %p31 = scmp.eq.s32.totalorder %s14, 1
    %p32 = por %p30, %p31
    %p33 = scmp.ne.s32.totalorder %s22, %s23
    %p34 = scmp.eq.s32.totalorder %s14, 0
    %p35 = por %p33, %p34
    %p36 = scmp.ne.s32.totalorder %s22, %s23
    %p37 = scmp.eq.s32.totalorder %s15, 1
    %p38 = por %p36, %p37
    %p40 = scmp.ne.s32.totalorder %s23, %s39
    %p41 = scmp.eq.s32.totalorder %s15, 0
    %p42 = por %p40, %p41
    %s44 = sadd.s32 %s43, 1
    %p47 = scmp.eq.s32.totalorder %s9, 1
    %p48 = scmp.ne.s32.totalorder %s43, %s45
    %p49 = scmp.eq.s32.totalorder %s9, 0
    %p50 = por %p48, %p49
    %p51 = scmp.ne.s32.totalorder %s43, %s45
    %p52 = scmp.eq.s32.totalorder %s14, 1
    %p53 = por %p51, %p52
    %p54 = scmp.ne.s32.totalorder %s45, %s46
    %p55 = scmp.eq.s32.totalorder %s14, 0
    %p56 = por %p54, %p55
    %p57 = scmp.ne.s32.totalorder %s45, %s46
    %p58 = scmp.eq.s32.totalorder %s15, 1
    %p59 = por %p57, %p58
    %p61 = scmp.ne.s32.totalorder %s46, %s60
    %p62 = scmp.eq.s32.totalorder %s15, 0
    %p63 = por %p61, %p62
    %s65 = sadd.s32 %s64, 1
    %p68 = scmp.eq.s32.totalorder %s9, 1
    %p69 = scmp.ne.s32.totalorder %s64, %s66
    %p70 = scmp.eq.s32.totalorder %s9, 0
    %p71 = por %p69, %p70
    %p72 = scmp.ne.s32.totalorder %s64, %s66
    %p73 = scmp.eq.s32.totalorder %s14, 1
    %p74 = por %p72, %p73
    %p75 = scmp.ne.s32.totalorder %s66, %s67
    %p76 = scmp.eq.s32.totalorder %s14, 0
    %p77 = por %p75, %p76
    %p78 = scmp.ne.s32.totalorder %s66, %s67
    %p79 = scmp.eq.s32.totalorder %s15, 1
    %p80 = por %p78, %p79
    %p82 = scmp.ne.s32.totalorder %s67, %s81
    %p83 = scmp.eq.s32.totalorder %s15, 0
    %p84 = por %p82, %p83
    %s85 = ssub.s32 %s9, %s16
    %p86 = scmp.eq.s32.totalorder %s85, 0
    %s88 = sadd.s32 %s87, 1
    %s89 = scalar_select %p86, %s87, %s88
    %p92 = pneg %p86
    %p93 = scmp.eq.s32.totalorder %s9, 1
    %p94 = por %p92, %p93
    %p95 = scmp.ne.s32.totalorder %s87, %s90
    %p96 = scmp.eq.s32.totalorder %s9, 0
    %p97 = por %p95, %p96
    %p98 = scmp.ne.s32.totalorder %s87, %s90
    %p99 = scmp.eq.s32.totalorder %s14, 1
    %p100 = por %p98, %p99
    %p101 = scmp.ne.s32.totalorder %s90, %s91
    %p102 = scmp.eq.s32.totalorder %s14, 0
    %p103 = por %p101, %p102
    %p104 = scmp.ne.s32.totalorder %s90, %s91
    %p105 = scmp.eq.s32.totalorder %s15, 1
    %p106 = por %p104, %p105
    %p108 = scmp.ne.s32.totalorder %s91, %s107
    %p109 = scmp.eq.s32.totalorder %s15, 0
    %p110 = por %p108, %p109
    %p111 = scmp.le.s32.totalorder 1, %s9
    %p112 = scmp.lt.s32.totalorder %s9, 3
    %p113 = pnand %p111, %p112
    %p114 = pneg %p113
    // Predicated region
    $region9: #{dqn_forward.4} parent=5 // pred_check
      _
    $region10: #{dqn_forward.4} parent=5 // pred_check_branch
      %116 = sbr.rel (%p113) target = $region12
    $region11: #{dqn_forward.4} parent=5 // pred_region
      %s117 = ssub.s32 %s9, 1
      // Predicated region
      $region13: #{dqn_forward.4} parent=11 // pred_check
        %p118 = pneg %p56
      $region14: #{dqn_forward.4} parent=11 // pred_check_branch
        %120 = sbr.rel (%p118) target = $region16
      $region15: #{dqn_forward.4} parent=11 // pred_region
        _
      $region16: #{dqn_forward.4} parent=11 // pred_fallthru
        _
      // Predicated region
      $region17: #{dqn_forward.4} parent=11 // pred_check
        %p121 = pneg %p77
      $region18: #{dqn_forward.4} parent=11 // pred_check_branch
        %123 = sbr.rel (%p121) target = $region20
      $region19: #{dqn_forward.4} parent=11 // pred_region
        _
      $region20: #{dqn_forward.4} parent=11 // pred_fallthru
        _
    $region12: #{dqn_forward.4} parent=5 // pred_fallthru
      _
    %p124 = scmp.lt.s32.totalorder %s9, 2
    // Predicated region
    $region21: #{dqn_forward.4} parent=5 // pred_check
      %p125 = pneg %p124
    $region22: #{dqn_forward.4} parent=5 // pred_check_branch
      %127 = sbr.rel (%p125) target = $region24
    $region23: #{dqn_forward.4} parent=5 // pred_region
      // Predicated region
      $region25: #{dqn_forward.4} parent=23 // pred_check
        %p128 = pneg %p29
      $region26: #{dqn_forward.4} parent=23 // pred_check_branch
        %130 = sbr.rel (%p128) target = $region28
      $region27: #{dqn_forward.4} parent=23 // pred_region
        %s131 = smul.u32 2, %s9
        %p132 = scmp.lt.s32.totalorder %s131, 3
        %s133 = scalar_select %p132, %s131, 3
        %s134 = smul.addr %s133, 72
        %s135 = smul.addr %s134, 4
        %s136 = scalar_lea.vmem %s0, %s135
        %s137 = smul.u32 2, %s9
      $region28: #{dqn_forward.4} parent=23 // pred_fallthru
        _
    $region24: #{dqn_forward.4} parent=5 // pred_fallthru
      _
    %p138 = scmp.le.s32.totalorder 1, %s9
    %p139 = scmp.lt.s32.totalorder %s9, 3
    %p140 = pnand %p138, %p139
    %p141 = pneg %p140
    // Predicated region
    $region29: #{dqn_forward.4} parent=5 // pred_check
      _
    $region30: #{dqn_forward.4} parent=5 // pred_check_branch
      %143 = sbr.rel (%p140) target = $region32
    $region31: #{dqn_forward.4} parent=5 // pred_region
      %s144 = ssub.s32 %s9, 1
      %s145 = smul.u32 2, %s14
      %p146 = scmp.lt.s32.totalorder %s145, 3
      %s147 = scalar_select %p146, %s145, 3
      %s148 = smul.addr %s147, 72
      %s149 = smul.addr %s148, 4
      %s150 = scalar_lea.vmem %s0, %s149
      %p151 = pneg %p35
      %p152 = pneg %p32
      %p153 = pneg %p56
      %p154 = pneg %p53
      %p155 = pneg %p77
      %p156 = pneg %p74
      %p157 = pneg %p103
      %p158 = pneg %p100
      %s159 = smul.u32 2, %s14
      %p160 = scmp.lt.s32.totalorder %s159, 3
      %s161 = scalar_select %p160, %s159, 3
      %s162 = smul.addr %s161, 8
      %s163 = smul.addr %s162, 4
      %s164 = scalar_lea.vmem %s3, %s163
      %s165 = smul.u32 2, %s14
      %p166 = scmp.lt.s32.totalorder %s165, 3
      %s167 = scalar_select %p166, %s165, 3
      %s168 = smul.addr %s167, 72
      %s169 = smul.addr %s168, 4
      %s170 = scalar_lea.vmem %s0, %s169
      %s171 = smul.u32 2, %s14
      %s172 = smul.u32 2, %s14
      %p173 = scmp.lt.s32.totalorder %s172, 3
      %s174 = scalar_select %p173, %s172, 3
      %s175 = smul.addr %s174, 8
      %s176 = smul.addr %s175, 4
      %s177 = scalar_lea.vmem %s3, %s176
      %s178 = smul.u32 2, %s14
      %v180 = vld [vmem:[%s170] sm:$0xf]
      %v181 = vld [vmem:[%s170 + $0x20] sm:$0xf]
      %v182 = vld [vmem:[%s170 + $0x40] sm:$0xf]
      %v183 = vld [vmem:[%s170 + $0x60] sm:$0xf]
      %v184 = vld [vmem:[%s170 + $0x80] sm:$0xf]
      %v185 = vld [vmem:[%s170 + $0xa0] sm:$0xf]
      %v186 = vld [vmem:[%s170 + $0xc0] sm:$0xf]
      %v187 = vld [vmem:[%s170 + $0xe0] sm:$0xf]
      %v188 = vld [vmem:[%s170 + $0x120] sm:$0xf]
      %v189 = vld [vmem:[%s170 + $0x140] sm:$0xf]
      %v190 = vld [vmem:[%s170 + $0x160] sm:$0xf]
      %v191 = vld [vmem:[%s170 + $0x180] sm:$0xf]
      %v192 = vld [vmem:[%s170 + $0x1a0] sm:$0xf]
      %v193 = vld [vmem:[%s170 + $0x1c0] sm:$0xf]
      %v194 = vld [vmem:[%s170 + $0x1e0] sm:$0xf]
      %v195 = vld [vmem:[%s170 + $0x200] sm:$0xf]
      %v212 = vunpack.c.l.b16 %v180
      %v213 = vunpack.c.l.b16 %v181
      %v214 = vunpack.c.l.b16 %v182
      %v215 = vunpack.c.l.b16 %v183
      %v216 = vunpack.c.l.b16 %v184
      %v217 = vunpack.c.l.b16 %v185
      %v218 = vunpack.c.l.b16 %v186
      %v219 = vunpack.c.l.b16 %v187
      %v220 = vunpack.c.l.b16 %v188
      %v221 = vunpack.c.l.b16 %v189
      %v222 = vunpack.c.l.b16 %v190
      %v223 = vunpack.c.l.b16 %v191
      %v224 = vunpack.c.l.b16 %v192
      %v225 = vunpack.c.l.b16 %v193
      %v226 = vunpack.c.l.b16 %v194
      %v227 = vunpack.c.l.b16 %v195
      %v228 = vpack.c.b16 %v213, %v212
      %v229 = vpack.c.b16 %v215, %v214
      %v230 = vpack.c.b16 %v217, %v216
      %v231 = vpack.c.b16 %v219, %v218
      %v232 = vpack.c.b16 %v221, %v220
      %v233 = vpack.c.b16 %v223, %v222
      %v234 = vpack.c.b16 %v225, %v224
      %v235 = vpack.c.b16 %v227, %v226
      %vm244 = vcmask 130048
      %245 = vst.msk [vmem:[#allocation2] sm:$0xff] %vm244, %v228
      %246 = vst.msk [vmem:[#allocation2 + $0x10] sm:$0xff] %vm244, %v229
      %247 = vst.msk [vmem:[#allocation2 + $0x20] sm:$0xff] %vm244, %v230
      %248 = vst.msk [vmem:[#allocation2 + $0x30] sm:$0xff] %vm244, %v231
      %249 = vst.msk [vmem:[#allocation2 + $0x40] sm:$0xff] %vm244, %v232
      %250 = vst.msk [vmem:[#allocation2 + $0x50] sm:$0xff] %vm244, %v233
      %251 = vst.msk [vmem:[#allocation2 + $0x60] sm:$0xff] %vm244, %v234
      %252 = vst.msk [vmem:[#allocation2 + $0x70] sm:$0xff] %vm244, %v235
      %v253 = vld [vmem:[%s170] sm:$0xf]
      %v254 = vld [vmem:[%s170 + $0x4] sm:$0x1]
      %v255 = vld [vmem:[%s170 + $0x20] sm:$0xf]
      %v256 = vld [vmem:[%s170 + $0x24] sm:$0x1]
      %v257 = vld [vmem:[%s170 + $0x40] sm:$0xf]
      %v258 = vld [vmem:[%s170 + $0x44] sm:$0x1]
      %v259 = vld [vmem:[%s170 + $0x60] sm:$0xf]
      %v260 = vld [vmem:[%s170 + $0x64] sm:$0x1]
      %v261 = vld [vmem:[%s170 + $0x80] sm:$0xf]
      %v262 = vld [vmem:[%s170 + $0x84] sm:$0x1]
      %v263 = vld [vmem:[%s170 + $0xa0] sm:$0xf]
      %v264 = vld [vmem:[%s170 + $0xa4] sm:$0x1]
      %v265 = vld [vmem:[%s170 + $0xc0] sm:$0xf]
      %v266 = vld [vmem:[%s170 + $0xc4] sm:$0x1]
      %v267 = vld [vmem:[%s170 + $0xe0] sm:$0xf]
      %v268 = vld [vmem:[%s170 + $0xe4] sm:$0x1]
      %v269 = vld [vmem:[%s170 + $0x120] sm:$0xf]
      %v270 = vld [vmem:[%s170 + $0x124] sm:$0x1]
      %v271 = vld [vmem:[%s170 + $0x140] sm:$0xf]
      %v272 = vld [vmem:[%s170 + $0x144] sm:$0x1]
      %v273 = vld [vmem:[%s170 + $0x160] sm:$0xf]
      %v274 = vld [vmem:[%s170 + $0x164] sm:$0x1]
      %v275 = vld [vmem:[%s170 + $0x180] sm:$0xf]
      %v276 = vld [vmem:[%s170 + $0x184] sm:$0x1]
      %v277 = vld [vmem:[%s170 + $0x1a0] sm:$0xf]
      %v278 = vld [vmem:[%s170 + $0x1a4] sm:$0x1]
      %v279 = vld [vmem:[%s170 + $0x1c0] sm:$0xf]
      %v280 = vld [vmem:[%s170 + $0x1c4] sm:$0x1]
      %v281 = vld [vmem:[%s170 + $0x1e0] sm:$0xf]
      %v282 = vld [vmem:[%s170 + $0x1e4] sm:$0x1]
      %v283 = vld [vmem:[%s170 + $0x200] sm:$0xf]
      %v284 = vld [vmem:[%s170 + $0x204] sm:$0x1]
      %vm285 = vsmask.f32 3328
      %vm286 = vsmask.f32 7440
      %vm287 = vmor %vm285, %vm286
      %v289 = vshrl.u32 %v253, 16
      %v291 = vrot.slane %v289, 4
      %v292 = vshll.u32 %v253, 16
      %v294 = vrot.slane %v292, 5
      %v295 = vor.u32 %v291, %v294
      %v296 = vrot.slane %v295, 4
      %v298 = vshll.u32 %v254, 16
      %v300 = vrot.slane %v298, 5
      %v301 = vsel %vm287, %v296, %v300
      %v303 = vshrl.u32 %v255, 16
      %v305 = vrot.slane %v303, 4
      %v306 = vshll.u32 %v255, 16
      %v308 = vrot.slane %v306, 5
      %v309 = vor.u32 %v305, %v308
      %v310 = vrot.slane %v309, 4
      %v312 = vshll.u32 %v256, 16
      %v314 = vrot.slane %v312, 5
      %v315 = vsel %vm287, %v310, %v314
      %v317 = vshrl.u32 %v257, 16
      %v319 = vrot.slane %v317, 4
      %v320 = vshll.u32 %v257, 16
      %v322 = vrot.slane %v320, 5
      %v323 = vor.u32 %v319, %v322
      %v324 = vrot.slane %v323, 4
      %v326 = vshll.u32 %v258, 16
      %v328 = vrot.slane %v326, 5
      %v329 = vsel %vm287, %v324, %v328
      %v331 = vshrl.u32 %v259, 16
      %v333 = vrot.slane %v331, 4
      %v334 = vshll.u32 %v259, 16
      %v336 = vrot.slane %v334, 5
      %v337 = vor.u32 %v333, %v336
      %v338 = vrot.slane %v337, 4
      %v340 = vshll.u32 %v260, 16
      %v342 = vrot.slane %v340, 5
      %v343 = vsel %vm287, %v338, %v342
      %v345 = vshrl.u32 %v261, 16
      %v347 = vrot.slane %v345, 4
      %v348 = vshll.u32 %v261, 16
      %v350 = vrot.slane %v348, 5
      %v351 = vor.u32 %v347, %v350
      %v352 = vrot.slane %v351, 4
      %v354 = vshll.u32 %v262, 16
      %v356 = vrot.slane %v354, 5
      %v357 = vsel %vm287, %v352, %v356
      %v359 = vshrl.u32 %v263, 16
      %v361 = vrot.slane %v359, 4
      %v362 = vshll.u32 %v263, 16
      %v364 = vrot.slane %v362, 5
      %v365 = vor.u32 %v361, %v364
      %v366 = vrot.slane %v365, 4
      %v368 = vshll.u32 %v264, 16
      %v370 = vrot.slane %v368, 5
      %v371 = vsel %vm287, %v366, %v370
      %v373 = vshrl.u32 %v265, 16
      %v375 = vrot.slane %v373, 4
      %v376 = vshll.u32 %v265, 16
      %v378 = vrot.slane %v376, 5
      %v379 = vor.u32 %v375, %v378
      %v380 = vrot.slane %v379, 4
      %v382 = vshll.u32 %v266, 16
      %v384 = vrot.slane %v382, 5
      %v385 = vsel %vm287, %v380, %v384
      %v387 = vshrl.u32 %v267, 16
      %v389 = vrot.slane %v387, 4
      %v390 = vshll.u32 %v267, 16
      %v392 = vrot.slane %v390, 5
      %v393 = vor.u32 %v389, %v392
      %v394 = vrot.slane %v393, 4
      %v396 = vshll.u32 %v268, 16
      %v398 = vrot.slane %v396, 5
      %v399 = vsel %vm287, %v394, %v398
      %v401 = vshrl.u32 %v269, 16
      %v403 = vrot.slane %v401, 4
      %v404 = vshll.u32 %v269, 16
      %v406 = vrot.slane %v404, 5
      %v407 = vor.u32 %v403, %v406
      %v408 = vrot.slane %v407, 4
      %v410 = vshll.u32 %v270, 16
      %v412 = vrot.slane %v410, 5
      %v413 = vsel %vm287, %v408, %v412
      %v415 = vshrl.u32 %v271, 16
      %v417 = vrot.slane %v415, 4
      %v418 = vshll.u32 %v271, 16
      %v420 = vrot.slane %v418, 5
      %v421 = vor.u32 %v417, %v420
      %v422 = vrot.slane %v421, 4
      %v424 = vshll.u32 %v272, 16
      %v426 = vrot.slane %v424, 5
      %v427 = vsel %vm287, %v422, %v426
      %v429 = vshrl.u32 %v273, 16
      %v431 = vrot.slane %v429, 4
      %v432 = vshll.u32 %v273, 16
      %v434 = vrot.slane %v432, 5
      %v435 = vor.u32 %v431, %v434
      %v436 = vrot.slane %v435, 4
      %v438 = vshll.u32 %v274, 16
      %v440 = vrot.slane %v438, 5
      %v441 = vsel %vm287, %v436, %v440
      %v443 = vshrl.u32 %v275, 16
      %v445 = vrot.slane %v443, 4
      %v446 = vshll.u32 %v275, 16
      %v448 = vrot.slane %v446, 5
      %v449 = vor.u32 %v445, %v448
      %v450 = vrot.slane %v449, 4
      %v452 = vshll.u32 %v276, 16
      %v454 = vrot.slane %v452, 5
      %v455 = vsel %vm287, %v450, %v454
      %v457 = vshrl.u32 %v277, 16
      %v459 = vrot.slane %v457, 4
      %v460 = vshll.u32 %v277, 16
      %v462 = vrot.slane %v460, 5
      %v463 = vor.u32 %v459, %v462
      %v464 = vrot.slane %v463, 4
      %v466 = vshll.u32 %v278, 16
      %v468 = vrot.slane %v466, 5
      %v469 = vsel %vm287, %v464, %v468
      %v471 = vshrl.u32 %v279, 16
      %v473 = vrot.slane %v471, 4
      %v474 = vshll.u32 %v279, 16
      %v476 = vrot.slane %v474, 5
      %v477 = vor.u32 %v473, %v476
      %v478 = vrot.slane %v477, 4
      %v480 = vshll.u32 %v280, 16
      %v482 = vrot.slane %v480, 5
      %v483 = vsel %vm287, %v478, %v482
      %v485 = vshrl.u32 %v281, 16
      %v487 = vrot.slane %v485, 4
      %v488 = vshll.u32 %v281, 16
      %v490 = vrot.slane %v488, 5
      %v491 = vor.u32 %v487, %v490
      %v492 = vrot.slane %v491, 4
      %v494 = vshll.u32 %v282, 16
      %v496 = vrot.slane %v494, 5
      %v497 = vsel %vm287, %v492, %v496
      %v499 = vshrl.u32 %v283, 16
      %v501 = vrot.slane %v499, 4
      %v502 = vshll.u32 %v283, 16
      %v504 = vrot.slane %v502, 5
      %v505 = vor.u32 %v501, %v504
      %v506 = vrot.slane %v505, 4
      %v508 = vshll.u32 %v284, 16
      %v510 = vrot.slane %v508, 5
      %v511 = vsel %vm287, %v506, %v510
      %v512 = vunpack.c.l.b16 %v301
      %v513 = vunpack.c.l.b16 %v315
      %v514 = vunpack.c.l.b16 %v329
      %v515 = vunpack.c.l.b16 %v343
      %v516 = vunpack.c.l.b16 %v357
      %v517 = vunpack.c.l.b16 %v371
      %v518 = vunpack.c.l.b16 %v385
      %v519 = vunpack.c.l.b16 %v399
      %v520 = vunpack.c.l.b16 %v413
      %v521 = vunpack.c.l.b16 %v427
      %v522 = vunpack.c.l.b16 %v441
      %v523 = vunpack.c.l.b16 %v455
      %v524 = vunpack.c.l.b16 %v469
      %v525 = vunpack.c.l.b16 %v483
      %v526 = vunpack.c.l.b16 %v497
      %v527 = vunpack.c.l.b16 %v511
      %v528 = vpack.c.b16 %v513, %v512
      %v529 = vpack.c.b16 %v515, %v514
      %v530 = vpack.c.b16 %v517, %v516
      %v531 = vpack.c.b16 %v519, %v518
      %v532 = vpack.c.b16 %v521, %v520
      %v533 = vpack.c.b16 %v523, %v522
      %v534 = vpack.c.b16 %v525, %v524
      %v535 = vpack.c.b16 %v527, %v526
      %536 = vrot.lane.b32.xlu0 %v528, 16
      %v537 = vpop.permute.xlu0 %536
      %538 = vrot.lane.b32.xlu0 %v529, 16
      %v539 = vpop.permute.xlu0 %538
      %540 = vrot.lane.b32.xlu0 %v530, 16
      %v541 = vpop.permute.xlu0 %540
      %542 = vrot.lane.b32.xlu0 %v531, 16
      %v543 = vpop.permute.xlu0 %542
      %544 = vrot.lane.b32.xlu0 %v532, 16
      %v545 = vpop.permute.xlu0 %544
      %546 = vrot.lane.b32.xlu0 %v533, 16
      %v547 = vpop.permute.xlu0 %546
      %548 = vrot.lane.b32.xlu0 %v534, 16
      %v549 = vpop.permute.xlu0 %548
      %550 = vrot.lane.b32.xlu0 %v535, 16
      %v551 = vpop.permute.xlu0 %550
      %vm560 = vcmask 261248
      %561 = vst.msk [vmem:[#allocation2] sm:$0xff] %vm560, %v537
      %562 = vst.msk [vmem:[#allocation2 + $0x10] sm:$0xff] %vm560, %v539
      %563 = vst.msk [vmem:[#allocation2 + $0x20] sm:$0xff] %vm560, %v541
      %564 = vst.msk [vmem:[#allocation2 + $0x30] sm:$0xff] %vm560, %v543
      %565 = vst.msk [vmem:[#allocation2 + $0x40] sm:$0xff] %vm560, %v545
      %566 = vst.msk [vmem:[#allocation2 + $0x50] sm:$0xff] %vm560, %v547
      %567 = vst.msk [vmem:[#allocation2 + $0x60] sm:$0xff] %vm560, %v549
      %568 = vst.msk [vmem:[#allocation2 + $0x70] sm:$0xff] %vm560, %v551
      %s569 = scalar_lea.vmem %s170, 8
      %v570 = vld [vmem:[%s569] sm:$0xf]
      %v571 = vld [vmem:[%s569 + $0x20] sm:$0xf]
      %v572 = vld [vmem:[%s569 + $0x40] sm:$0xf]
      %v573 = vld [vmem:[%s569 + $0x60] sm:$0xf]
      %v574 = vld [vmem:[%s569 + $0x80] sm:$0xf]
      %v575 = vld [vmem:[%s569 + $0xa0] sm:$0xf]
      %v576 = vld [vmem:[%s569 + $0xc0] sm:$0xf]
      %v577 = vld [vmem:[%s569 + $0xe0] sm:$0xf]
      %v578 = vld [vmem:[%s569 + $0x120] sm:$0xf]
      %v579 = vld [vmem:[%s569 + $0x140] sm:$0xf]
      %v580 = vld [vmem:[%s569 + $0x160] sm:$0xf]
      %v581 = vld [vmem:[%s569 + $0x180] sm:$0xf]
      %v582 = vld [vmem:[%s569 + $0x1a0] sm:$0xf]
      %v583 = vld [vmem:[%s569 + $0x1c0] sm:$0xf]
      %v584 = vld [vmem:[%s569 + $0x1e0] sm:$0xf]
      %v585 = vld [vmem:[%s569 + $0x200] sm:$0xf]
      %v602 = vunpack.c.l.b16 %v570
      %v603 = vunpack.c.l.b16 %v571
      %v604 = vunpack.c.l.b16 %v572
      %v605 = vunpack.c.l.b16 %v573
      %v606 = vunpack.c.l.b16 %v574
      %v607 = vunpack.c.l.b16 %v575
      %v608 = vunpack.c.l.b16 %v576
      %v609 = vunpack.c.l.b16 %v577
      %v610 = vunpack.c.l.b16 %v578
      %v611 = vunpack.c.l.b16 %v579
      %v612 = vunpack.c.l.b16 %v580
      %v613 = vunpack.c.l.b16 %v581
      %v614 = vunpack.c.l.b16 %v582
      %v615 = vunpack.c.l.b16 %v583
      %v616 = vunpack.c.l.b16 %v584
      %v617 = vunpack.c.l.b16 %v585
      %v618 = vpack.c.b16 %v603, %v602
      %v619 = vpack.c.b16 %v605, %v604
      %v620 = vpack.c.b16 %v607, %v606
      %v621 = vpack.c.b16 %v609, %v608
      %v622 = vpack.c.b16 %v611, %v610
      %v623 = vpack.c.b16 %v613, %v612
      %v624 = vpack.c.b16 %v615, %v614
      %v625 = vpack.c.b16 %v617, %v616
      %626 = vrot.lane.b32.xlu0 %v618, 32
      %v627 = vpop.permute.xlu0 %626
      %628 = vrot.lane.b32.xlu0 %v619, 32
      %v629 = vpop.permute.xlu0 %628
      %630 = vrot.lane.b32.xlu0 %v620, 32
      %v631 = vpop.permute.xlu0 %630
      %632 = vrot.lane.b32.xlu0 %v621, 32
      %v633 = vpop.permute.xlu0 %632
      %634 = vrot.lane.b32.xlu0 %v622, 32
      %v635 = vpop.permute.xlu0 %634
      %636 = vrot.lane.b32.xlu0 %v623, 32
      %v637 = vpop.permute.xlu0 %636
      %638 = vrot.lane.b32.xlu0 %v624, 32
      %v639 = vpop.permute.xlu0 %638
      %640 = vrot.lane.b32.xlu0 %v625, 32
      %v641 = vpop.permute.xlu0 %640
      %vm650 = vcmask 392448
      %651 = vst.msk [vmem:[#allocation2] sm:$0xff] %vm650, %v627
      %652 = vst.msk [vmem:[#allocation2 + $0x10] sm:$0xff] %vm650, %v629
      %653 = vst.msk [vmem:[#allocation2 + $0x20] sm:$0xff] %vm650, %v631
      %654 = vst.msk [vmem:[#allocation2 + $0x30] sm:$0xff] %vm650, %v633
      %655 = vst.msk [vmem:[#allocation2 + $0x40] sm:$0xff] %vm650, %v635
      %656 = vst.msk [vmem:[#allocation2 + $0x50] sm:$0xff] %vm650, %v637
      %657 = vst.msk [vmem:[#allocation2 + $0x60] sm:$0xff] %vm650, %v639
      %658 = vst.msk [vmem:[#allocation2 + $0x70] sm:$0xff] %vm650, %v641
      %v659 = vld [vmem:[%s569] sm:$0xf]
      %v660 = vld [vmem:[%s569 + $0x4] sm:$0x1]
      %v661 = vld [vmem:[%s569 + $0x20] sm:$0xf]
      %v662 = vld [vmem:[%s569 + $0x24] sm:$0x1]
      %v663 = vld [vmem:[%s569 + $0x40] sm:$0xf]
      %v664 = vld [vmem:[%s569 + $0x44] sm:$0x1]
      %v665 = vld [vmem:[%s569 + $0x60] sm:$0xf]
      %v666 = vld [vmem:[%s569 + $0x64] sm:$0x1]
      %v667 = vld [vmem:[%s569 + $0x80] sm:$0xf]
      %v668 = vld [vmem:[%s569 + $0x84] sm:$0x1]
      %v669 = vld [vmem:[%s569 + $0xa0] sm:$0xf]
      %v670 = vld [vmem:[%s569 + $0xa4] sm:$0x1]
      %v671 = vld [vmem:[%s569 + $0xc0] sm:$0xf]
      %v672 = vld [vmem:[%s569 + $0xc4] sm:$0x1]
      %v673 = vld [vmem:[%s569 + $0xe0] sm:$0xf]
      %v674 = vld [vmem:[%s569 + $0xe4] sm:$0x1]
      %v675 = vld [vmem:[%s569 + $0x120] sm:$0xf]
      %v676 = vld [vmem:[%s569 + $0x124] sm:$0x1]
      %v677 = vld [vmem:[%s569 + $0x140] sm:$0xf]
      %v678 = vld [vmem:[%s569 + $0x144] sm:$0x1]
      %v679 = vld [vmem:[%s569 + $0x160] sm:$0xf]
      %v680 = vld [vmem:[%s569 + $0x164] sm:$0x1]
      %v681 = vld [vmem:[%s569 + $0x180] sm:$0xf]
      %v682 = vld [vmem:[%s569 + $0x184] sm:$0x1]
      %v683 = vld [vmem:[%s569 + $0x1a0] sm:$0xf]
      %v684 = vld [vmem:[%s569 + $0x1a4] sm:$0x1]
      %v685 = vld [vmem:[%s569 + $0x1c0] sm:$0xf]
      %v686 = vld [vmem:[%s569 + $0x1c4] sm:$0x1]
      %v687 = vld [vmem:[%s569 + $0x1e0] sm:$0xf]
      %v688 = vld [vmem:[%s569 + $0x1e4] sm:$0x1]
      %v689 = vld [vmem:[%s569 + $0x200] sm:$0xf]
      %v690 = vld [vmem:[%s569 + $0x204] sm:$0x1]
      %v692 = vshrl.u32 %v659, 16
      %v694 = vrot.slane %v692, 4
      %v695 = vshll.u32 %v659, 16
      %v697 = vrot.slane %v695, 5
      %v698 = vor.u32 %v694, %v697
      %v699 = vrot.slane %v698, 4
      %v701 = vshll.u32 %v660, 16
      %v703 = vrot.slane %v701, 5
      %v704 = vsel %vm287, %v699, %v703
      %v706 = vshrl.u32 %v661, 16
      %v708 = vrot.slane %v706, 4
      %v709 = vshll.u32 %v661, 16
      %v711 = vrot.slane %v709, 5
      %v712 = vor.u32 %v708, %v711
      %v713 = vrot.slane %v712, 4
      %v715 = vshll.u32 %v662, 16
      %v717 = vrot.slane %v715, 5
      %v718 = vsel %vm287, %v713, %v717
      %v720 = vshrl.u32 %v663, 16
      %v722 = vrot.slane %v720, 4
      %v723 = vshll.u32 %v663, 16
      %v725 = vrot.slane %v723, 5
      %v726 = vor.u32 %v722, %v725
      %v727 = vrot.slane %v726, 4
      %v729 = vshll.u32 %v664, 16
      %v731 = vrot.slane %v729, 5
      %v732 = vsel %vm287, %v727, %v731
      %v734 = vshrl.u32 %v665, 16
      %v736 = vrot.slane %v734, 4
      %v737 = vshll.u32 %v665, 16
      %v739 = vrot.slane %v737, 5
      %v740 = vor.u32 %v736, %v739
      %v741 = vrot.slane %v740, 4
      %v743 = vshll.u32 %v666, 16
      %v745 = vrot.slane %v743, 5
      %v746 = vsel %vm287, %v741, %v745
      %v748 = vshrl.u32 %v667, 16
      %v750 = vrot.slane %v748, 4
      %v751 = vshll.u32 %v667, 16
      %v753 = vrot.slane %v751, 5
      %v754 = vor.u32 %v750, %v753
      %v755 = vrot.slane %v754, 4
      %v757 = vshll.u32 %v668, 16
      %v759 = vrot.slane %v757, 5
      %v760 = vsel %vm287, %v755, %v759
      %v762 = vshrl.u32 %v669, 16
      %v764 = vrot.slane %v762, 4
      %v765 = vshll.u32 %v669, 16
      %v767 = vrot.slane %v765, 5
      %v768 = vor.u32 %v764, %v767
      %v769 = vrot.slane %v768, 4
      %v771 = vshll.u32 %v670, 16
      %v773 = vrot.slane %v771, 5
      %v774 = vsel %vm287, %v769, %v773
      %v776 = vshrl.u32 %v671, 16
      %v778 = vrot.slane %v776, 4
      %v779 = vshll.u32 %v671, 16
      %v781 = vrot.slane %v779, 5
      %v782 = vor.u32 %v778, %v781
      %v783 = vrot.slane %v782, 4
      %v785 = vshll.u32 %v672, 16
      %v787 = vrot.slane %v785, 5
      %v788 = vsel %vm287, %v783, %v787
      %v790 = vshrl.u32 %v673, 16
      %v792 = vrot.slane %v790, 4
      %v793 = vshll.u32 %v673, 16
      %v795 = vrot.slane %v793, 5
      %v796 = vor.u32 %v792, %v795
      %v797 = vrot.slane %v796, 4
      %v799 = vshll.u32 %v674, 16
      %v801 = vrot.slane %v799, 5
      %v802 = vsel %vm287, %v797, %v801
      %v804 = vshrl.u32 %v675, 16
      %v806 = vrot.slane %v804, 4
      %v807 = vshll.u32 %v675, 16
      %v809 = vrot.slane %v807, 5
      %v810 = vor.u32 %v806, %v809
      %v811 = vrot.slane %v810, 4
      %v813 = vshll.u32 %v676, 16
      %v815 = vrot.slane %v813, 5
      %v816 = vsel %vm287, %v811, %v815
      %v818 = vshrl.u32 %v677, 16
      %v820 = vrot.slane %v818, 4
      %v821 = vshll.u32 %v677, 16
      %v823 = vrot.slane %v821, 5
      %v824 = vor.u32 %v820, %v823
      %v825 = vrot.slane %v824, 4
      %v827 = vshll.u32 %v678, 16
      %v829 = vrot.slane %v827, 5
      %v830 = vsel %vm287, %v825, %v829
      %v832 = vshrl.u32 %v679, 16
      %v834 = vrot.slane %v832, 4
      %v835 = vshll.u32 %v679, 16
      %v837 = vrot.slane %v835, 5
      %v838 = vor.u32 %v834, %v837
      %v839 = vrot.slane %v838, 4
      %v841 = vshll.u32 %v680, 16
      %v843 = vrot.slane %v841, 5
      %v844 = vsel %vm287, %v839, %v843
      %v846 = vshrl.u32 %v681, 16
      %v848 = vrot.slane %v846, 4
      %v849 = vshll.u32 %v681, 16
      %v851 = vrot.slane %v849, 5
      %v852 = vor.u32 %v848, %v851
      %v853 = vrot.slane %v852, 4
      %v855 = vshll.u32 %v682, 16
      %v857 = vrot.slane %v855, 5
      %v858 = vsel %vm287, %v853, %v857
      %v860 = vshrl.u32 %v683, 16
      %v862 = vrot.slane %v860, 4
      %v863 = vshll.u32 %v683, 16
      %v865 = vrot.slane %v863, 5
      %v866 = vor.u32 %v862, %v865
      %v867 = vrot.slane %v866, 4
      %v869 = vshll.u32 %v684, 16
      %v871 = vrot.slane %v869, 5
      %v872 = vsel %vm287, %v867, %v871
      %v874 = vshrl.u32 %v685, 16
      %v876 = vrot.slane %v874, 4
      %v877 = vshll.u32 %v685, 16
      %v879 = vrot.slane %v877, 5
      %v880 = vor.u32 %v876, %v879
      %v881 = vrot.slane %v880, 4
      %v883 = vshll.u32 %v686, 16
      %v885 = vrot.slane %v883, 5
      %v886 = vsel %vm287, %v881, %v885
      %v888 = vshrl.u32 %v687, 16
      %v890 = vrot.slane %v888, 4
      %v891 = vshll.u32 %v687, 16
      %v893 = vrot.slane %v891, 5
      %v894 = vor.u32 %v890, %v893
      %v895 = vrot.slane %v894, 4
      %v897 = vshll.u32 %v688, 16
      %v899 = vrot.slane %v897, 5
      %v900 = vsel %vm287, %v895, %v899
      %v902 = vshrl.u32 %v689, 16
      %v904 = vrot.slane %v902, 4
      %v905 = vshll.u32 %v689, 16
      %v907 = vrot.slane %v905, 5
      %v908 = vor.u32 %v904, %v907
      %v909 = vrot.slane %v908, 4
      %v911 = vshll.u32 %v690, 16
      %v913 = vrot.slane %v911, 5
      %v914 = vsel %vm287, %v909, %v913
      %v915 = vunpack.c.l.b16 %v704
      %v916 = vunpack.c.l.b16 %v718
      %v917 = vunpack.c.l.b16 %v732
      %v918 = vunpack.c.l.b16 %v746
      %v919 = vunpack.c.l.b16 %v760
      %v920 = vunpack.c.l.b16 %v774
      %v921 = vunpack.c.l.b16 %v788
      %v922 = vunpack.c.l.b16 %v802
      %v923 = vunpack.c.l.b16 %v816
      %v924 = vunpack.c.l.b16 %v830
      %v925 = vunpack.c.l.b16 %v844
      %v926 = vunpack.c.l.b16 %v858
      %v927 = vunpack.c.l.b16 %v872
      %v928 = vunpack.c.l.b16 %v886
      %v929 = vunpack.c.l.b16 %v900
      %v930 = vunpack.c.l.b16 %v914
      %v931 = vpack.c.b16 %v916, %v915
      %v932 = vpack.c.b16 %v918, %v917
      %v933 = vpack.c.b16 %v920, %v919
      %v934 = vpack.c.b16 %v922, %v921
      %v935 = vpack.c.b16 %v924, %v923
      %v936 = vpack.c.b16 %v926, %v925
      %v937 = vpack.c.b16 %v928, %v927
      %v938 = vpack.c.b16 %v930, %v929
      %939 = vrot.lane.b32.xlu0 %v931, 48
      %v940 = vpop.permute.xlu0 %939
      %941 = vrot.lane.b32.xlu0 %v932, 48
      %v942 = vpop.permute.xlu0 %941
      %943 = vrot.lane.b32.xlu0 %v933, 48
      %v944 = vpop.permute.xlu0 %943
      %945 = vrot.lane.b32.xlu0 %v934, 48
      %v946 = vpop.permute.xlu0 %945
      %947 = vrot.lane.b32.xlu0 %v935, 48
      %v948 = vpop.permute.xlu0 %947
      %949 = vrot.lane.b32.xlu0 %v936, 48
      %v950 = vpop.permute.xlu0 %949
      %951 = vrot.lane.b32.xlu0 %v937, 48
      %v952 = vpop.permute.xlu0 %951
      %953 = vrot.lane.b32.xlu0 %v938, 48
      %v954 = vpop.permute.xlu0 %953
      %vm963 = vcmask 523648
      %964 = vst.msk [vmem:[#allocation2] sm:$0xff] %vm963, %v940
      %965 = vst.msk [vmem:[#allocation2 + $0x10] sm:$0xff] %vm963, %v942
      %966 = vst.msk [vmem:[#allocation2 + $0x20] sm:$0xff] %vm963, %v944
      %967 = vst.msk [vmem:[#allocation2 + $0x30] sm:$0xff] %vm963, %v946
      %968 = vst.msk [vmem:[#allocation2 + $0x40] sm:$0xff] %vm963, %v948
      %969 = vst.msk [vmem:[#allocation2 + $0x50] sm:$0xff] %vm963, %v950
      %970 = vst.msk [vmem:[#allocation2 + $0x60] sm:$0xff] %vm963, %v952
      %971 = vst.msk [vmem:[#allocation2 + $0x70] sm:$0xff] %vm963, %v954
      %s972 = scalar_lea.vmem %s170, 16
      %v973 = vld [vmem:[%s972] sm:$0xf]
      %v974 = vld [vmem:[%s972 + $0x20] sm:$0xf]
      %v975 = vld [vmem:[%s972 + $0x40] sm:$0xf]
      %v976 = vld [vmem:[%s972 + $0x60] sm:$0xf]
      %v977 = vld [vmem:[%s972 + $0x80] sm:$0xf]
      %v978 = vld [vmem:[%s972 + $0xa0] sm:$0xf]
      %v979 = vld [vmem:[%s972 + $0xc0] sm:$0xf]
      %v980 = vld [vmem:[%s972 + $0xe0] sm:$0xf]
      %v981 = vld [vmem:[%s972 + $0x120] sm:$0xf]
      %v982 = vld [vmem:[%s972 + $0x140] sm:$0xf]
      %v983 = vld [vmem:[%s972 + $0x160] sm:$0xf]
      %v984 = vld [vmem:[%s972 + $0x180] sm:$0xf]
      %v985 = vld [vmem:[%s972 + $0x1a0] sm:$0xf]
      %v986 = vld [vmem:[%s972 + $0x1c0] sm:$0xf]
      %v987 = vld [vmem:[%s972 + $0x1e0] sm:$0xf]
      %v988 = vld [vmem:[%s972 + $0x200] sm:$0xf]
      %v1005 = vunpack.c.l.b16 %v973
      %v1006 = vunpack.c.l.b16 %v974
      %v1007 = vunpack.c.l.b16 %v975
      %v1008 = vunpack.c.l.b16 %v976
      %v1009 = vunpack.c.l.b16 %v977
      %v1010 = vunpack.c.l.b16 %v978
      %v1011 = vunpack.c.l.b16 %v979
      %v1012 = vunpack.c.l.b16 %v980
      %v1013 = vunpack.c.l.b16 %v981
      %v1014 = vunpack.c.l.b16 %v982
      %v1015 = vunpack.c.l.b16 %v983
      %v1016 = vunpack.c.l.b16 %v984
      %v1017 = vunpack.c.l.b16 %v985
      %v1018 = vunpack.c.l.b16 %v986
      %v1019 = vunpack.c.l.b16 %v987
      %v1020 = vunpack.c.l.b16 %v988
      %v1021 = vpack.c.b16 %v1006, %v1005
      %v1022 = vpack.c.b16 %v1008, %v1007
      %v1023 = vpack.c.b16 %v1010, %v1009
      %v1024 = vpack.c.b16 %v1012, %v1011
      %v1025 = vpack.c.b16 %v1014, %v1013
      %v1026 = vpack.c.b16 %v1016, %v1015
      %v1027 = vpack.c.b16 %v1018, %v1017
      %v1028 = vpack.c.b16 %v1020, %v1019
      %1029 = vrot.lane.b32.xlu0 %v1021, 64
      %v1030 = vpop.permute.xlu0 %1029
      %1031 = vrot.lane.b32.xlu0 %v1022, 64
      %v1032 = vpop.permute.xlu0 %1031
      %1033 = vrot.lane.b32.xlu0 %v1023, 64
      %v1034 = vpop.permute.xlu0 %1033
      %1035 = vrot.lane.b32.xlu0 %v1024, 64
      %v1036 = vpop.permute.xlu0 %1035
      %1037 = vrot.lane.b32.xlu0 %v1025, 64
      %v1038 = vpop.permute.xlu0 %1037
      %1039 = vrot.lane.b32.xlu0 %v1026, 64
      %v1040 = vpop.permute.xlu0 %1039
      %1041 = vrot.lane.b32.xlu0 %v1027, 64
      %v1042 = vpop.permute.xlu0 %1041
      %1043 = vrot.lane.b32.xlu0 %v1028, 64
      %v1044 = vpop.permute.xlu0 %1043
      %vm1053 = vcmask 654848
      %1054 = vst.msk [vmem:[#allocation2] sm:$0xff] %vm1053, %v1030
      %1055 = vst.msk [vmem:[#allocation2 + $0x10] sm:$0xff] %vm1053, %v1032
      %1056 = vst.msk [vmem:[#allocation2 + $0x20] sm:$0xff] %vm1053, %v1034
      %1057 = vst.msk [vmem:[#allocation2 + $0x30] sm:$0xff] %vm1053, %v1036
      %1058 = vst.msk [vmem:[#allocation2 + $0x40] sm:$0xff] %vm1053, %v1038
      %1059 = vst.msk [vmem:[#allocation2 + $0x50] sm:$0xff] %vm1053, %v1040
      %1060 = vst.msk [vmem:[#allocation2 + $0x60] sm:$0xff] %vm1053, %v1042
      %1061 = vst.msk [vmem:[#allocation2 + $0x70] sm:$0xff] %vm1053, %v1044
      %v1062 = vld [vmem:[%s972] sm:$0xf]
      %v1063 = vld [vmem:[%s972 + $0x4] sm:$0x1]
      %v1064 = vld [vmem:[%s972 + $0x20] sm:$0xf]
      %v1065 = vld [vmem:[%s972 + $0x24] sm:$0x1]
      %v1066 = vld [vmem:[%s972 + $0x40] sm:$0xf]
      %v1067 = vld [vmem:[%s972 + $0x44] sm:$0x1]
      %v1068 = vld [vmem:[%s972 + $0x60] sm:$0xf]
      %v1069 = vld [vmem:[%s972 + $0x64] sm:$0x1]
      %v1070 = vld [vmem:[%s972 + $0x80] sm:$0xf]
      %v1071 = vld [vmem:[%s972 + $0x84] sm:$0x1]
      %v1072 = vld [vmem:[%s972 + $0xa0] sm:$0xf]
      %v1073 = vld [vmem:[%s972 + $0xa4] sm:$0x1]
      %v1074 = vld [vmem:[%s972 + $0xc0] sm:$0xf]
      %v1075 = vld [vmem:[%s972 + $0xc4] sm:$0x1]
      %v1076 = vld [vmem:[%s972 + $0xe0] sm:$0xf]
      %v1077 = vld [vmem:[%s972 + $0xe4] sm:$0x1]
      %v1078 = vld [vmem:[%s972 + $0x120] sm:$0xf]
      %v1079 = vld [vmem:[%s972 + $0x124] sm:$0x1]
      %v1080 = vld [vmem:[%s972 + $0x140] sm:$0xf]
      %v1081 = vld [vmem:[%s972 + $0x144] sm:$0x1]
      %v1082 = vld [vmem:[%s972 + $0x160] sm:$0xf]
      %v1083 = vld [vmem:[%s972 + $0x164] sm:$0x1]
      %v1084 = vld [vmem:[%s972 + $0x180] sm:$0xf]
      %v1085 = vld [vmem:[%s972 + $0x184] sm:$0x1]
      %v1086 = vld [vmem:[%s972 + $0x1a0] sm:$0xf]
      %v1087 = vld [vmem:[%s972 + $0x1a4] sm:$0x1]
      %v1088 = vld [vmem:[%s972 + $0x1c0] sm:$0xf]
      %v1089 = vld [vmem:[%s972 + $0x1c4] sm:$0x1]
      %v1090 = vld [vmem:[%s972 + $0x1e0] sm:$0xf]
      %v1091 = vld [vmem:[%s972 + $0x1e4] sm:$0x1]
      %v1092 = vld [vmem:[%s972 + $0x200] sm:$0xf]
      %v1093 = vld [vmem:[%s972 + $0x204] sm:$0x1]
      %v1095 = vshrl.u32 %v1062, 16
      %v1097 = vrot.slane %v1095, 4
      %v1098 = vshll.u32 %v1062, 16
      %v1100 = vrot.slane %v1098, 5
      %v1101 = vor.u32 %v1097, %v1100
      %v1102 = vrot.slane %v1101, 4
      %v1104 = vshll.u32 %v1063, 16
      %v1106 = vrot.slane %v1104, 5
      %v1107 = vsel %vm287, %v1102, %v1106
      %v1109 = vshrl.u32 %v1064, 16
      %v1111 = vrot.slane %v1109, 4
      %v1112 = vshll.u32 %v1064, 16
      %v1114 = vrot.slane %v1112, 5
      %v1115 = vor.u32 %v1111, %v1114
      %v1116 = vrot.slane %v1115, 4
      %v1118 = vshll.u32 %v1065, 16
      %v1120 = vrot.slane %v1118, 5
      %v1121 = vsel %vm287, %v1116, %v1120
      %v1123 = vshrl.u32 %v1066, 16
      %v1125 = vrot.slane %v1123, 4
      %v1126 = vshll.u32 %v1066, 16
      %v1128 = vrot.slane %v1126, 5
      %v1129 = vor.u32 %v1125, %v1128
      %v1130 = vrot.slane %v1129, 4
      %v1132 = vshll.u32 %v1067, 16
      %v1134 = vrot.slane %v1132, 5
      %v1135 = vsel %vm287, %v1130, %v1134
      %v1137 = vshrl.u32 %v1068, 16
      %v1139 = vrot.slane %v1137, 4
      %v1140 = vshll.u32 %v1068, 16
      %v1142 = vrot.slane %v1140, 5
      %v1143 = vor.u32 %v1139, %v1142
      %v1144 = vrot.slane %v1143, 4
      %v1146 = vshll.u32 %v1069, 16
      %v1148 = vrot.slane %v1146, 5
      %v1149 = vsel %vm287, %v1144, %v1148
      %v1151 = vshrl.u32 %v1070, 16
      %v1153 = vrot.slane %v1151, 4
      %v1154 = vshll.u32 %v1070, 16
      %v1156 = vrot.slane %v1154, 5
      %v1157 = vor.u32 %v1153, %v1156
      %v1158 = vrot.slane %v1157, 4
      %v1160 = vshll.u32 %v1071, 16
      %v1162 = vrot.slane %v1160, 5
      %v1163 = vsel %vm287, %v1158, %v1162
      %v1165 = vshrl.u32 %v1072, 16
      %v1167 = vrot.slane %v1165, 4
      %v1168 = vshll.u32 %v1072, 16
      %v1170 = vrot.slane %v1168, 5
      %v1171 = vor.u32 %v1167, %v1170
      %v1172 = vrot.slane %v1171, 4
      %v1174 = vshll.u32 %v1073, 16
      %v1176 = vrot.slane %v1174, 5
      %v1177 = vsel %vm287, %v1172, %v1176
      %v1179 = vshrl.u32 %v1074, 16
      %v1181 = vrot.slane %v1179, 4
      %v1182 = vshll.u32 %v1074, 16
      %v1184 = vrot.slane %v1182, 5
      %v1185 = vor.u32 %v1181, %v1184
      %v1186 = vrot.slane %v1185, 4
      %v1188 = vshll.u32 %v1075, 16
      %v1190 = vrot.slane %v1188, 5
      %v1191 = vsel %vm287, %v1186, %v1190
      %v1193 = vshrl.u32 %v1076, 16
      %v1195 = vrot.slane %v1193, 4
      %v1196 = vshll.u32 %v1076, 16
      %v1198 = vrot.slane %v1196, 5
      %v1199 = vor.u32 %v1195, %v1198
      %v1200 = vrot.slane %v1199, 4
      %v1202 = vshll.u32 %v1077, 16
      %v1204 = vrot.slane %v1202, 5
      %v1205 = vsel %vm287, %v1200, %v1204
      %v1207 = vshrl.u32 %v1078, 16
      %v1209 = vrot.slane %v1207, 4
      %v1210 = vshll.u32 %v1078, 16
      %v1212 = vrot.slane %v1210, 5
      %v1213 = vor.u32 %v1209, %v1212
      %v1214 = vrot.slane %v1213, 4
      %v1216 = vshll.u32 %v1079, 16
      %v1218 = vrot.slane %v1216, 5
      %v1219 = vsel %vm287, %v1214, %v1218
      %v1221 = vshrl.u32 %v1080, 16
      %v1223 = vrot.slane %v1221, 4
      %v1224 = vshll.u32 %v1080, 16
      %v1226 = vrot.slane %v1224, 5
      %v1227 = vor.u32 %v1223, %v1226
      %v1228 = vrot.slane %v1227, 4
      %v1230 = vshll.u32 %v1081, 16
      %v1232 = vrot.slane %v1230, 5
      %v1233 = vsel %vm287, %v1228, %v1232
      %v1235 = vshrl.u32 %v1082, 16
      %v1237 = vrot.slane %v1235, 4
      %v1238 = vshll.u32 %v1082, 16
      %v1240 = vrot.slane %v1238, 5
      %v1241 = vor.u32 %v1237, %v1240
      %v1242 = vrot.slane %v1241, 4
      %v1244 = vshll.u32 %v1083, 16
      %v1246 = vrot.slane %v1244, 5
      %v1247 = vsel %vm287, %v1242, %v1246
      %v1249 = vshrl.u32 %v1084, 16
      %v1251 = vrot.slane %v1249, 4
      %v1252 = vshll.u32 %v1084, 16
      %v1254 = vrot.slane %v1252, 5
      %v1255 = vor.u32 %v1251, %v1254
      %v1256 = vrot.slane %v1255, 4
      %v1258 = vshll.u32 %v1085, 16
      %v1260 = vrot.slane %v1258, 5
      %v1261 = vsel %vm287, %v1256, %v1260
      %v1263 = vshrl.u32 %v1086, 16
      %v1265 = vrot.slane %v1263, 4
      %v1266 = vshll.u32 %v1086, 16
      %v1268 = vrot.slane %v1266, 5
      %v1269 = vor.u32 %v1265, %v1268
      %v1270 = vrot.slane %v1269, 4
      %v1272 = vshll.u32 %v1087, 16
      %v1274 = vrot.slane %v1272, 5
      %v1275 = vsel %vm287, %v1270, %v1274
      %v1277 = vshrl.u32 %v1088, 16
      %v1279 = vrot.slane %v1277, 4
      %v1280 = vshll.u32 %v1088, 16
      %v1282 = vrot.slane %v1280, 5
      %v1283 = vor.u32 %v1279, %v1282
      %v1284 = vrot.slane %v1283, 4
      %v1286 = vshll.u32 %v1089, 16
      %v1288 = vrot.slane %v1286, 5
      %v1289 = vsel %vm287, %v1284, %v1288
      %v1291 = vshrl.u32 %v1090, 16
      %v1293 = vrot.slane %v1291, 4
      %v1294 = vshll.u32 %v1090, 16
      %v1296 = vrot.slane %v1294, 5
      %v1297 = vor.u32 %v1293, %v1296
      %v1298 = vrot.slane %v1297, 4
      %v1300 = vshll.u32 %v1091, 16
      %v1302 = vrot.slane %v1300, 5
      %v1303 = vsel %vm287, %v1298, %v1302
      %v1305 = vshrl.u32 %v1092, 16
      %v1307 = vrot.slane %v1305, 4
      %v1308 = vshll.u32 %v1092, 16
      %v1310 = vrot.slane %v1308, 5
      %v1311 = vor.u32 %v1307, %v1310
      %v1312 = vrot.slane %v1311, 4
      %v1314 = vshll.u32 %v1093, 16
      %v1316 = vrot.slane %v1314, 5
      %v1317 = vsel %vm287, %v1312, %v1316
      %v1318 = vunpack.c.l.b16 %v1107
      %v1319 = vunpack.c.l.b16 %v1121
      %v1320 = vunpack.c.l.b16 %v1135
      %v1321 = vunpack.c.l.b16 %v1149
      %v1322 = vunpack.c.l.b16 %v1163
      %v1323 = vunpack.c.l.b16 %v1177
      %v1324 = vunpack.c.l.b16 %v1191
      %v1325 = vunpack.c.l.b16 %v1205
      %v1326 = vunpack.c.l.b16 %v1219
      %v1327 = vunpack.c.l.b16 %v1233
      %v1328 = vunpack.c.l.b16 %v1247
      %v1329 = vunpack.c.l.b16 %v1261
      %v1330 = vunpack.c.l.b16 %v1275
      %v1331 = vunpack.c.l.b16 %v1289
      %v1332 = vunpack.c.l.b16 %v1303
      %v1333 = vunpack.c.l.b16 %v1317
      %v1334 = vpack.c.b16 %v1319, %v1318
      %v1335 = vpack.c.b16 %v1321, %v1320
      %v1336 = vpack.c.b16 %v1323, %v1322
      %v1337 = vpack.c.b16 %v1325, %v1324
      %v1338 = vpack.c.b16 %v1327, %v1326
      %v1339 = vpack.c.b16 %v1329, %v1328
      %v1340 = vpack.c.b16 %v1331, %v1330
      %v1341 = vpack.c.b16 %v1333, %v1332
      %1342 = vrot.lane.b32.xlu0 %v1334, 80
      %v1343 = vpop.permute.xlu0 %1342
      %1344 = vrot.lane.b32.xlu0 %v1335, 80
      %v1345 = vpop.permute.xlu0 %1344
      %1346 = vrot.lane.b32.xlu0 %v1336, 80
      %v1347 = vpop.permute.xlu0 %1346
      %1348 = vrot.lane.b32.xlu0 %v1337, 80
      %v1349 = vpop.permute.xlu0 %1348
      %1350 = vrot.lane.b32.xlu0 %v1338, 80
      %v1351 = vpop.permute.xlu0 %1350
      %1352 = vrot.lane.b32.xlu0 %v1339, 80
      %v1353 = vpop.permute.xlu0 %1352
      %1354 = vrot.lane.b32.xlu0 %v1340, 80
      %v1355 = vpop.permute.xlu0 %1354
      %1356 = vrot.lane.b32.xlu0 %v1341, 80
      %v1357 = vpop.permute.xlu0 %1356
      %vm1366 = vcmask 786048
      %1367 = vst.msk [vmem:[#allocation2] sm:$0xff] %vm1366, %v1343
      %1368 = vst.msk [vmem:[#allocation2 + $0x10] sm:$0xff] %vm1366, %v1345
      %1369 = vst.msk [vmem:[#allocation2 + $0x20] sm:$0xff] %vm1366, %v1347
      %1370 = vst.msk [vmem:[#allocation2 + $0x30] sm:$0xff] %vm1366, %v1349
      %1371 = vst.msk [vmem:[#allocation2 + $0x40] sm:$0xff] %vm1366, %v1351
      %1372 = vst.msk [vmem:[#allocation2 + $0x50] sm:$0xff] %vm1366, %v1353
      %1373 = vst.msk [vmem:[#allocation2 + $0x60] sm:$0xff] %vm1366, %v1355
      %1374 = vst.msk [vmem:[#allocation2 + $0x70] sm:$0xff] %vm1366, %v1357
      %s1375 = scalar_lea.vmem %s170, 24
      %v1376 = vld [vmem:[%s1375] sm:$0xf]
      %v1377 = vld [vmem:[%s1375 + $0x20] sm:$0xf]
      %v1378 = vld [vmem:[%s1375 + $0x40] sm:$0xf]
      %v1379 = vld [vmem:[%s1375 + $0x60] sm:$0xf]
      %v1380 = vld [vmem:[%s1375 + $0x80] sm:$0xf]
      %v1381 = vld [vmem:[%s1375 + $0xa0] sm:$0xf]
      %v1382 = vld [vmem:[%s1375 + $0xc0] sm:$0xf]
      %v1383 = vld [vmem:[%s1375 + $0xe0] sm:$0xf]
      %v1384 = vld [vmem:[%s1375 + $0x120] sm:$0xf]
      %v1385 = vld [vmem:[%s1375 + $0x140] sm:$0xf]
      %v1386 = vld [vmem:[%s1375 + $0x160] sm:$0xf]
      %v1387 = vld [vmem:[%s1375 + $0x180] sm:$0xf]
      %v1388 = vld [vmem:[%s1375 + $0x1a0] sm:$0xf]
      %v1389 = vld [vmem:[%s1375 + $0x1c0] sm:$0xf]
      %v1390 = vld [vmem:[%s1375 + $0x1e0] sm:$0xf]
      %v1391 = vld [vmem:[%s1375 + $0x200] sm:$0xf]
      %v1408 = vunpack.c.l.b16 %v1376
      %v1409 = vunpack.c.l.b16 %v1377
      %v1410 = vunpack.c.l.b16 %v1378
      %v1411 = vunpack.c.l.b16 %v1379
      %v1412 = vunpack.c.l.b16 %v1380
      %v1413 = vunpack.c.l.b16 %v1381
      %v1414 = vunpack.c.l.b16 %v1382
      %v1415 = vunpack.c.l.b16 %v1383
      %v1416 = vunpack.c.l.b16 %v1384
      %v1417 = vunpack.c.l.b16 %v1385
      %v1418 = vunpack.c.l.b16 %v1386
      %v1419 = vunpack.c.l.b16 %v1387
      %v1420 = vunpack.c.l.b16 %v1388
      %v1421 = vunpack.c.l.b16 %v1389
      %v1422 = vunpack.c.l.b16 %v1390
      %v1423 = vunpack.c.l.b16 %v1391
      %v1424 = vpack.c.b16 %v1409, %v1408
      %v1425 = vpack.c.b16 %v1411, %v1410
      %v1426 = vpack.c.b16 %v1413, %v1412
      %v1427 = vpack.c.b16 %v1415, %v1414
      %v1428 = vpack.c.b16 %v1417, %v1416
      %v1429 = vpack.c.b16 %v1419, %v1418
      %v1430 = vpack.c.b16 %v1421, %v1420
      %v1431 = vpack.c.b16 %v1423, %v1422
      %1432 = vrot.lane.b32.xlu0 %v1424, 96
      %v1433 = vpop.permute.xlu0 %1432
      %1434 = vrot.lane.b32.xlu0 %v1425, 96
      %v1435 = vpop.permute.xlu0 %1434
      %1436 = vrot.lane.b32.xlu0 %v1426, 96
      %v1437 = vpop.permute.xlu0 %1436
      %1438 = vrot.lane.b32.xlu0 %v1427, 96
      %v1439 = vpop.permute.xlu0 %1438
      %1440 = vrot.lane.b32.xlu0 %v1428, 96
      %v1441 = vpop.permute.xlu0 %1440
      %1442 = vrot.lane.b32.xlu0 %v1429, 96
      %v1443 = vpop.permute.xlu0 %1442
      %1444 = vrot.lane.b32.xlu0 %v1430, 96
      %v1445 = vpop.permute.xlu0 %1444
      %1446 = vrot.lane.b32.xlu0 %v1431, 96
      %v1447 = vpop.permute.xlu0 %1446
      %vm1456 = vcmask 917248
      %1457 = vst.msk [vmem:[#allocation2] sm:$0xff] %vm1456, %v1433
      %1458 = vst.msk [vmem:[#allocation2 + $0x10] sm:$0xff] %vm1456, %v1435
      %1459 = vst.msk [vmem:[#allocation2 + $0x20] sm:$0xff] %vm1456, %v1437
      %1460 = vst.msk [vmem:[#allocation2 + $0x30] sm:$0xff] %vm1456, %v1439
      %1461 = vst.msk [vmem:[#allocation2 + $0x40] sm:$0xff] %vm1456, %v1441
      %1462 = vst.msk [vmem:[#allocation2 + $0x50] sm:$0xff] %vm1456, %v1443
      %1463 = vst.msk [vmem:[#allocation2 + $0x60] sm:$0xff] %vm1456, %v1445
      %1464 = vst.msk [vmem:[#allocation2 + $0x70] sm:$0xff] %vm1456, %v1447
      %v1465 = vld [vmem:[%s1375] sm:$0xf]
      %v1466 = vld [vmem:[%s1375 + $0x4] sm:$0x1]
      %v1467 = vld [vmem:[%s1375 + $0x20] sm:$0xf]
      %v1468 = vld [vmem:[%s1375 + $0x24] sm:$0x1]
      %v1469 = vld [vmem:[%s1375 + $0x40] sm:$0xf]
      %v1470 = vld [vmem:[%s1375 + $0x44] sm:$0x1]
      %v1471 = vld [vmem:[%s1375 + $0x60] sm:$0xf]
      %v1472 = vld [vmem:[%s1375 + $0x64] sm:$0x1]
      %v1473 = vld [vmem:[%s1375 + $0x80] sm:$0xf]
      %v1474 = vld [vmem:[%s1375 + $0x84] sm:$0x1]
      %v1475 = vld [vmem:[%s1375 + $0xa0] sm:$0xf]
      %v1476 = vld [vmem:[%s1375 + $0xa4] sm:$0x1]
      %v1477 = vld [vmem:[%s1375 + $0xc0] sm:$0xf]
      %v1478 = vld [vmem:[%s1375 + $0xc4] sm:$0x1]
      %v1479 = vld [vmem:[%s1375 + $0xe0] sm:$0xf]
      %v1480 = vld [vmem:[%s1375 + $0xe4] sm:$0x1]
      %v1481 = vld [vmem:[%s1375 + $0x120] sm:$0xf]
      %v1482 = vld [vmem:[%s1375 + $0x124] sm:$0x1]
      %v1483 = vld [vmem:[%s1375 + $0x140] sm:$0xf]
      %v1484 = vld [vmem:[%s1375 + $0x144] sm:$0x1]
      %v1485 = vld [vmem:[%s1375 + $0x160] sm:$0xf]
      %v1486 = vld [vmem:[%s1375 + $0x164] sm:$0x1]
      %v1487 = vld [vmem:[%s1375 + $0x180] sm:$0xf]
      %v1488 = vld [vmem:[%s1375 + $0x184] sm:$0x1]
      %v1489 = vld [vmem:[%s1375 + $0x1a0] sm:$0xf]
      %v1490 = vld [vmem:[%s1375 + $0x1a4] sm:$0x1]
      %v1491 = vld [vmem:[%s1375 + $0x1c0] sm:$0xf]
      %v1492 = vld [vmem:[%s1375 + $0x1c4] sm:$0x1]
      %v1493 = vld [vmem:[%s1375 + $0x1e0] sm:$0xf]
      %v1494 = vld [vmem:[%s1375 + $0x1e4] sm:$0x1]
      %v1495 = vld [vmem:[%s1375 + $0x200] sm:$0xf]
      %v1496 = vld [vmem:[%s1375 + $0x204] sm:$0x1]
      %v1498 = vshrl.u32 %v1465, 16
      %v1500 = vrot.slane %v1498, 4
      %v1501 = vshll.u32 %v1465, 16
      %v1503 = vrot.slane %v1501, 5
      %v1504 = vor.u32 %v1500, %v1503
      %v1505 = vrot.slane %v1504, 4
      %v1507 = vshll.u32 %v1466, 16
      %v1509 = vrot.slane %v1507, 5
      %v1510 = vsel %vm287, %v1505, %v1509
      %v1512 = vshrl.u32 %v1467, 16
      %v1514 = vrot.slane %v1512, 4
      %v1515 = vshll.u32 %v1467, 16
      %v1517 = vrot.slane %v1515, 5
      %v1518 = vor.u32 %v1514, %v1517
      %v1519 = vrot.slane %v1518, 4
      %v1521 = vshll.u32 %v1468, 16
      %v1523 = vrot.slane %v1521, 5
      %v1524 = vsel %vm287, %v1519, %v1523
      %v1526 = vshrl.u32 %v1469, 16
      %v1528 = vrot.slane %v1526, 4
      %v1529 = vshll.u32 %v1469, 16
      %v1531 = vrot.slane %v1529, 5
      %v1532 = vor.u32 %v1528, %v1531
      %v1533 = vrot.slane %v1532, 4
      %v1535 = vshll.u32 %v1470, 16
      %v1537 = vrot.slane %v1535, 5
      %v1538 = vsel %vm287, %v1533, %v1537
      %v1540 = vshrl.u32 %v1471, 16
      %v1542 = vrot.slane %v1540, 4
      %v1543 = vshll.u32 %v1471, 16
      %v1545 = vrot.slane %v1543, 5
      %v1546 = vor.u32 %v1542, %v1545
      %v1547 = vrot.slane %v1546, 4
      %v1549 = vshll.u32 %v1472, 16
      %v1551 = vrot.slane %v1549, 5
      %v1552 = vsel %vm287, %v1547, %v1551
      %v1554 = vshrl.u32 %v1473, 16
      %v1556 = vrot.slane %v1554, 4
      %v1557 = vshll.u32 %v1473, 16
      %v1559 = vrot.slane %v1557, 5
      %v1560 = vor.u32 %v1556, %v1559
      %v1561 = vrot.slane %v1560, 4
      %v1563 = vshll.u32 %v1474, 16
      %v1565 = vrot.slane %v1563, 5
      %v1566 = vsel %vm287, %v1561, %v1565
      %v1568 = vshrl.u32 %v1475, 16
      %v1570 = vrot.slane %v1568, 4
      %v1571 = vshll.u32 %v1475, 16
      %v1573 = vrot.slane %v1571, 5
      %v1574 = vor.u32 %v1570, %v1573
      %v1575 = vrot.slane %v1574, 4
      %v1577 = vshll.u32 %v1476, 16
      %v1579 = vrot.slane %v1577, 5
      %v1580 = vsel %vm287, %v1575, %v1579
      %v1582 = vshrl.u32 %v1477, 16
      %v1584 = vrot.slane %v1582, 4
      %v1585 = vshll.u32 %v1477, 16
      %v1587 = vrot.slane %v1585, 5
      %v1588 = vor.u32 %v1584, %v1587
      %v1589 = vrot.slane %v1588, 4
      %v1591 = vshll.u32 %v1478, 16
      %v1593 = vrot.slane %v1591, 5
      %v1594 = vsel %vm287, %v1589, %v1593
      %v1596 = vshrl.u32 %v1479, 16
      %v1598 = vrot.slane %v1596, 4
      %v1599 = vshll.u32 %v1479, 16
      %v1601 = vrot.slane %v1599, 5
      %v1602 = vor.u32 %v1598, %v1601
      %v1603 = vrot.slane %v1602, 4
      %v1605 = vshll.u32 %v1480, 16
      %v1607 = vrot.slane %v1605, 5
      %v1608 = vsel %vm287, %v1603, %v1607
      %v1610 = vshrl.u32 %v1481, 16
      %v1612 = vrot.slane %v1610, 4
      %v1613 = vshll.u32 %v1481, 16
      %v1615 = vrot.slane %v1613, 5
      %v1616 = vor.u32 %v1612, %v1615
      %v1617 = vrot.slane %v1616, 4
      %v1619 = vshll.u32 %v1482, 16
      %v1621 = vrot.slane %v1619, 5
      %v1622 = vsel %vm287, %v1617, %v1621
      %v1624 = vshrl.u32 %v1483, 16
      %v1626 = vrot.slane %v1624, 4
      %v1627 = vshll.u32 %v1483, 16
      %v1629 = vrot.slane %v1627, 5
      %v1630 = vor.u32 %v1626, %v1629
      %v1631 = vrot.slane %v1630, 4
      %v1633 = vshll.u32 %v1484, 16
      %v1635 = vrot.slane %v1633, 5
      %v1636 = vsel %vm287, %v1631, %v1635
      %v1638 = vshrl.u32 %v1485, 16
      %v1640 = vrot.slane %v1638, 4
      %v1641 = vshll.u32 %v1485, 16
      %v1643 = vrot.slane %v1641, 5
      %v1644 = vor.u32 %v1640, %v1643
      %v1645 = vrot.slane %v1644, 4
      %v1647 = vshll.u32 %v1486, 16
      %v1649 = vrot.slane %v1647, 5
      %v1650 = vsel %vm287, %v1645, %v1649
      %v1652 = vshrl.u32 %v1487, 16
      %v1654 = vrot.slane %v1652, 4
      %v1655 = vshll.u32 %v1487, 16
      %v1657 = vrot.slane %v1655, 5
      %v1658 = vor.u32 %v1654, %v1657
      %v1659 = vrot.slane %v1658, 4
      %v1661 = vshll.u32 %v1488, 16
      %v1663 = vrot.slane %v1661, 5
      %v1664 = vsel %vm287, %v1659, %v1663
      %v1666 = vshrl.u32 %v1489, 16
      %v1668 = vrot.slane %v1666, 4
      %v1669 = vshll.u32 %v1489, 16
      %v1671 = vrot.slane %v1669, 5
      %v1672 = vor.u32 %v1668, %v1671
      %v1673 = vrot.slane %v1672, 4
      %v1675 = vshll.u32 %v1490, 16
      %v1677 = vrot.slane %v1675, 5
      %v1678 = vsel %vm287, %v1673, %v1677
      %v1680 = vshrl.u32 %v1491, 16
      %v1682 = vrot.slane %v1680, 4
      %v1683 = vshll.u32 %v1491, 16
      %v1685 = vrot.slane %v1683, 5
      %v1686 = vor.u32 %v1682, %v1685
      %v1687 = vrot.slane %v1686, 4
      %v1689 = vshll.u32 %v1492, 16
      %v1691 = vrot.slane %v1689, 5
      %v1692 = vsel %vm287, %v1687, %v1691
      %v1694 = vshrl.u32 %v1493, 16
      %v1696 = vrot.slane %v1694, 4
      %v1697 = vshll.u32 %v1493, 16
      %v1699 = vrot.slane %v1697, 5
      %v1700 = vor.u32 %v1696, %v1699
      %v1701 = vrot.slane %v1700, 4
      %v1703 = vshll.u32 %v1494, 16
      %v1705 = vrot.slane %v1703, 5
      %v1706 = vsel %vm287, %v1701, %v1705
      %v1708 = vshrl.u32 %v1495, 16
      %v1710 = vrot.slane %v1708, 4
      %v1711 = vshll.u32 %v1495, 16
      %v1713 = vrot.slane %v1711, 5
      %v1714 = vor.u32 %v1710, %v1713
      %v1715 = vrot.slane %v1714, 4
      %v1717 = vshll.u32 %v1496, 16
      %v1719 = vrot.slane %v1717, 5
      %v1720 = vsel %vm287, %v1715, %v1719
      %v1721 = vunpack.c.l.b16 %v1510
      %v1722 = vunpack.c.l.b16 %v1524
      %v1723 = vunpack.c.l.b16 %v1538
      %v1724 = vunpack.c.l.b16 %v1552
      %v1725 = vunpack.c.l.b16 %v1566
      %v1726 = vunpack.c.l.b16 %v1580
      %v1727 = vunpack.c.l.b16 %v1594
      %v1728 = vunpack.c.l.b16 %v1608
      %v1729 = vunpack.c.l.b16 %v1622
      %v1730 = vunpack.c.l.b16 %v1636
      %v1731 = vunpack.c.l.b16 %v1650
      %v1732 = vunpack.c.l.b16 %v1664
      %v1733 = vunpack.c.l.b16 %v1678
      %v1734 = vunpack.c.l.b16 %v1692
      %v1735 = vunpack.c.l.b16 %v1706
      %v1736 = vunpack.c.l.b16 %v1720
      %v1737 = vpack.c.b16 %v1722, %v1721
      %v1738 = vpack.c.b16 %v1724, %v1723
      %v1739 = vpack.c.b16 %v1726, %v1725
      %v1740 = vpack.c.b16 %v1728, %v1727
      %v1741 = vpack.c.b16 %v1730, %v1729
      %v1742 = vpack.c.b16 %v1732, %v1731
      %v1743 = vpack.c.b16 %v1734, %v1733
      %v1744 = vpack.c.b16 %v1736, %v1735
      %1745 = vrot.lane.b32.xlu0 %v1737, 112
      %v1746 = vpop.permute.xlu0 %1745
      %1747 = vrot.lane.b32.xlu0 %v1738, 112
      %v1748 = vpop.permute.xlu0 %1747
      %1749 = vrot.lane.b32.xlu0 %v1739, 112
      %v1750 = vpop.permute.xlu0 %1749
      %1751 = vrot.lane.b32.xlu0 %v1740, 112
      %v1752 = vpop.permute.xlu0 %1751
      %1753 = vrot.lane.b32.xlu0 %v1741, 112
      %v1754 = vpop.permute.xlu0 %1753
      %1755 = vrot.lane.b32.xlu0 %v1742, 112
      %v1756 = vpop.permute.xlu0 %1755
      %1757 = vrot.lane.b32.xlu0 %v1743, 112
      %v1758 = vpop.permute.xlu0 %1757
      %1759 = vrot.lane.b32.xlu0 %v1744, 112
      %v1760 = vpop.permute.xlu0 %1759
      %vm1769 = vcmask 1048448
      %1770 = vst.msk [vmem:[#allocation2] sm:$0xff] %vm1769, %v1746
      %1771 = vst.msk [vmem:[#allocation2 + $0x10] sm:$0xff] %vm1769, %v1748
      %1772 = vst.msk [vmem:[#allocation2 + $0x20] sm:$0xff] %vm1769, %v1750
      %1773 = vst.msk [vmem:[#allocation2 + $0x30] sm:$0xff] %vm1769, %v1752
      %1774 = vst.msk [vmem:[#allocation2 + $0x40] sm:$0xff] %vm1769, %v1754
      %1775 = vst.msk [vmem:[#allocation2 + $0x50] sm:$0xff] %vm1769, %v1756
      %1776 = vst.msk [vmem:[#allocation2 + $0x60] sm:$0xff] %vm1769, %v1758
      %1777 = vst.msk [vmem:[#allocation2 + $0x70] sm:$0xff] %vm1769, %v1760
      %s1778 = scalar_lea.vmem %s170, 32
      %v1779 = vld [vmem:[%s1778] sm:$0xf]
      %v1780 = vld [vmem:[%s1778 + $0x20] sm:$0xf]
      %v1781 = vld [vmem:[%s1778 + $0x40] sm:$0xf]
      %v1782 = vld [vmem:[%s1778 + $0x60] sm:$0xf]
      %v1783 = vld [vmem:[%s1778 + $0x80] sm:$0xf]
      %v1784 = vld [vmem:[%s1778 + $0xa0] sm:$0xf]
      %v1785 = vld [vmem:[%s1778 + $0xc0] sm:$0xf]
      %v1786 = vld [vmem:[%s1778 + $0xe0] sm:$0xf]
      %v1787 = vld [vmem:[%s1778 + $0x120] sm:$0xf]
      %v1788 = vld [vmem:[%s1778 + $0x140] sm:$0xf]
      %v1789 = vld [vmem:[%s1778 + $0x160] sm:$0xf]
      %v1790 = vld [vmem:[%s1778 + $0x180] sm:$0xf]
      %v1791 = vld [vmem:[%s1778 + $0x1a0] sm:$0xf]
      %v1792 = vld [vmem:[%s1778 + $0x1c0] sm:$0xf]
      %v1793 = vld [vmem:[%s1778 + $0x1e0] sm:$0xf]
      %v1794 = vld [vmem:[%s1778 + $0x200] sm:$0xf]
      %v1811 = vunpack.c.l.b16 %v1779
      %v1812 = vunpack.c.l.b16 %v1780
      %v1813 = vunpack.c.l.b16 %v1781
      %v1814 = vunpack.c.l.b16 %v1782
      %v1815 = vunpack.c.l.b16 %v1783
      %v1816 = vunpack.c.l.b16 %v1784
      %v1817 = vunpack.c.l.b16 %v1785
      %v1818 = vunpack.c.l.b16 %v1786
      %v1819 = vunpack.c.l.b16 %v1787
      %v1820 = vunpack.c.l.b16 %v1788
      %v1821 = vunpack.c.l.b16 %v1789
      %v1822 = vunpack.c.l.b16 %v1790
      %v1823 = vunpack.c.l.b16 %v1791
      %v1824 = vunpack.c.l.b16 %v1792
      %v1825 = vunpack.c.l.b16 %v1793
      %v1826 = vunpack.c.l.b16 %v1794
      %v1827 = vpack.c.b16 %v1812, %v1811
      %v1828 = vpack.c.b16 %v1814, %v1813
      %v1829 = vpack.c.b16 %v1816, %v1815
      %v1830 = vpack.c.b16 %v1818, %v1817
      %v1831 = vpack.c.b16 %v1820, %v1819
      %v1832 = vpack.c.b16 %v1822, %v1821
      %v1833 = vpack.c.b16 %v1824, %v1823
      %v1834 = vpack.c.b16 %v1826, %v1825
      %1843 = vst.msk [vmem:[#allocation2 + $0x8] sm:$0xff] %vm244, %v1827
      %1844 = vst.msk [vmem:[#allocation2 + $0x18] sm:$0xff] %vm244, %v1828
      %1845 = vst.msk [vmem:[#allocation2 + $0x28] sm:$0xff] %vm244, %v1829
      %1846 = vst.msk [vmem:[#allocation2 + $0x38] sm:$0xff] %vm244, %v1830
      %1847 = vst.msk [vmem:[#allocation2 + $0x48] sm:$0xff] %vm244, %v1831
      %1848 = vst.msk [vmem:[#allocation2 + $0x58] sm:$0xff] %vm244, %v1832
      %1849 = vst.msk [vmem:[#allocation2 + $0x68] sm:$0xff] %vm244, %v1833
      %1850 = vst.msk [vmem:[#allocation2 + $0x78] sm:$0xff] %vm244, %v1834
      %v1851 = vld [vmem:[%s1778] sm:$0xf]
      %v1852 = vld [vmem:[%s1778 + $0x4] sm:$0x1]
      %v1853 = vld [vmem:[%s1778 + $0x20] sm:$0xf]
      %v1854 = vld [vmem:[%s1778 + $0x24] sm:$0x1]
      %v1855 = vld [vmem:[%s1778 + $0x40] sm:$0xf]
      %v1856 = vld [vmem:[%s1778 + $0x44] sm:$0x1]
      %v1857 = vld [vmem:[%s1778 + $0x60] sm:$0xf]
      %v1858 = vld [vmem:[%s1778 + $0x64] sm:$0x1]
      %v1859 = vld [vmem:[%s1778 + $0x80] sm:$0xf]
      %v1860 = vld [vmem:[%s1778 + $0x84] sm:$0x1]
      %v1861 = vld [vmem:[%s1778 + $0xa0] sm:$0xf]
      %v1862 = vld [vmem:[%s1778 + $0xa4] sm:$0x1]
      %v1863 = vld [vmem:[%s1778 + $0xc0] sm:$0xf]
      %v1864 = vld [vmem:[%s1778 + $0xc4] sm:$0x1]
      %v1865 = vld [vmem:[%s1778 + $0xe0] sm:$0xf]
      %v1866 = vld [vmem:[%s1778 + $0xe4] sm:$0x1]
      %v1867 = vld [vmem:[%s1778 + $0x120] sm:$0xf]
      %v1868 = vld [vmem:[%s1778 + $0x124] sm:$0x1]
      %v1869 = vld [vmem:[%s1778 + $0x140] sm:$0xf]
      %v1870 = vld [vmem:[%s1778 + $0x144] sm:$0x1]
      %v1871 = vld [vmem:[%s1778 + $0x160] sm:$0xf]
      %v1872 = vld [vmem:[%s1778 + $0x164] sm:$0x1]
      %v1873 = vld [vmem:[%s1778 + $0x180] sm:$0xf]
      %v1874 = vld [vmem:[%s1778 + $0x184] sm:$0x1]
      %v1875 = vld [vmem:[%s1778 + $0x1a0] sm:$0xf]
      %v1876 = vld [vmem:[%s1778 + $0x1a4] sm:$0x1]
      %v1877 = vld [vmem:[%s1778 + $0x1c0] sm:$0xf]
      %v1878 = vld [vmem:[%s1778 + $0x1c4] sm:$0x1]
      %v1879 = vld [vmem:[%s1778 + $0x1e0] sm:$0xf]
      %v1880 = vld [vmem:[%s1778 + $0x1e4] sm:$0x1]
      %v1881 = vld [vmem:[%s1778 + $0x200] sm:$0xf]
      %v1882 = vld [vmem:[%s1778 + $0x204] sm:$0x1]
      %v1884 = vshrl.u32 %v1851, 16
      %v1886 = vrot.slane %v1884, 4
      %v1887 = vshll.u32 %v1851, 16
      %v1889 = vrot.slane %v1887, 5
      %v1890 = vor.u32 %v1886, %v1889
      %v1891 = vrot.slane %v1890, 4
      %v1893 = vshll.u32 %v1852, 16
      %v1895 = vrot.slane %v1893, 5
      %v1896 = vsel %vm287, %v1891, %v1895
      %v1898 = vshrl.u32 %v1853, 16
      %v1900 = vrot.slane %v1898, 4
      %v1901 = vshll.u32 %v1853, 16
      %v1903 = vrot.slane %v1901, 5
      %v1904 = vor.u32 %v1900, %v1903
      %v1905 = vrot.slane %v1904, 4
      %v1907 = vshll.u32 %v1854, 16
      %v1909 = vrot.slane %v1907, 5
      %v1910 = vsel %vm287, %v1905, %v1909
      %v1912 = vshrl.u32 %v1855, 16
      %v1914 = vrot.slane %v1912, 4
      %v1915 = vshll.u32 %v1855, 16
      %v1917 = vrot.slane %v1915, 5
      %v1918 = vor.u32 %v1914, %v1917
      %v1919 = vrot.slane %v1918, 4
      %v1921 = vshll.u32 %v1856, 16
      %v1923 = vrot.slane %v1921, 5
      %v1924 = vsel %vm287, %v1919, %v1923
      %v1926 = vshrl.u32 %v1857, 16
      %v1928 = vrot.slane %v1926, 4
      %v1929 = vshll.u32 %v1857, 16
      %v1931 = vrot.slane %v1929, 5
      %v1932 = vor.u32 %v1928, %v1931
      %v1933 = vrot.slane %v1932, 4
      %v1935 = vshll.u32 %v1858, 16
      %v1937 = vrot.slane %v1935, 5
      %v1938 = vsel %vm287, %v1933, %v1937
      %v1940 = vshrl.u32 %v1859, 16
      %v1942 = vrot.slane %v1940, 4
      %v1943 = vshll.u32 %v1859, 16
      %v1945 = vrot.slane %v1943, 5
      %v1946 = vor.u32 %v1942, %v1945
      %v1947 = vrot.slane %v1946, 4
      %v1949 = vshll.u32 %v1860, 16
      %v1951 = vrot.slane %v1949, 5
      %v1952 = vsel %vm287, %v1947, %v1951
      %v1954 = vshrl.u32 %v1861, 16
      %v1956 = vrot.slane %v1954, 4
      %v1957 = vshll.u32 %v1861, 16
      %v1959 = vrot.slane %v1957, 5
      %v1960 = vor.u32 %v1956, %v1959
      %v1961 = vrot.slane %v1960, 4
      %v1963 = vshll.u32 %v1862, 16
      %v1965 = vrot.slane %v1963, 5
      %v1966 = vsel %vm287, %v1961, %v1965
      %v1968 = vshrl.u32 %v1863, 16
      %v1970 = vrot.slane %v1968, 4
      %v1971 = vshll.u32 %v1863, 16
      %v1973 = vrot.slane %v1971, 5
      %v1974 = vor.u32 %v1970, %v1973
      %v1975 = vrot.slane %v1974, 4
      %v1977 = vshll.u32 %v1864, 16
      %v1979 = vrot.slane %v1977, 5
      %v1980 = vsel %vm287, %v1975, %v1979
      %v1982 = vshrl.u32 %v1865, 16
      %v1984 = vrot.slane %v1982, 4
      %v1985 = vshll.u32 %v1865, 16
      %v1987 = vrot.slane %v1985, 5
      %v1988 = vor.u32 %v1984, %v1987
      %v1989 = vrot.slane %v1988, 4
      %v1991 = vshll.u32 %v1866, 16
      %v1993 = vrot.slane %v1991, 5
      %v1994 = vsel %vm287, %v1989, %v1993
      %v1996 = vshrl.u32 %v1867, 16
      %v1998 = vrot.slane %v1996, 4
      %v1999 = vshll.u32 %v1867, 16
      %v2001 = vrot.slane %v1999, 5
      %v2002 = vor.u32 %v1998, %v2001
      %v2003 = vrot.slane %v2002, 4
      %v2005 = vshll.u32 %v1868, 16
      %v2007 = vrot.slane %v2005, 5
      %v2008 = vsel %vm287, %v2003, %v2007
      %v2010 = vshrl.u32 %v1869, 16
      %v2012 = vrot.slane %v2010, 4
      %v2013 = vshll.u32 %v1869, 16
      %v2015 = vrot.slane %v2013, 5
      %v2016 = vor.u32 %v2012, %v2015
      %v2017 = vrot.slane %v2016, 4
      %v2019 = vshll.u32 %v1870, 16
      %v2021 = vrot.slane %v2019, 5
      %v2022 = vsel %vm287, %v2017, %v2021
      %v2024 = vshrl.u32 %v1871, 16
      %v2026 = vrot.slane %v2024, 4
      %v2027 = vshll.u32 %v1871, 16
      %v2029 = vrot.slane %v2027, 5
      %v2030 = vor.u32 %v2026, %v2029
      %v2031 = vrot.slane %v2030, 4
      %v2033 = vshll.u32 %v1872, 16
      %v2035 = vrot.slane %v2033, 5
      %v2036 = vsel %vm287, %v2031, %v2035
      %v2038 = vshrl.u32 %v1873, 16
      %v2040 = vrot.slane %v2038, 4
      %v2041 = vshll.u32 %v1873, 16
      %v2043 = vrot.slane %v2041, 5
      %v2044 = vor.u32 %v2040, %v2043
      %v2045 = vrot.slane %v2044, 4
      %v2047 = vshll.u32 %v1874, 16
      %v2049 = vrot.slane %v2047, 5
      %v2050 = vsel %vm287, %v2045, %v2049
      %v2052 = vshrl.u32 %v1875, 16
      %v2054 = vrot.slane %v2052, 4
      %v2055 = vshll.u32 %v1875, 16
      %v2057 = vrot.slane %v2055, 5
      %v2058 = vor.u32 %v2054, %v2057
      %v2059 = vrot.slane %v2058, 4
      %v2061 = vshll.u32 %v1876, 16
      %v2063 = vrot.slane %v2061, 5
      %v2064 = vsel %vm287, %v2059, %v2063
      %v2066 = vshrl.u32 %v1877, 16
      %v2068 = vrot.slane %v2066, 4
      %v2069 = vshll.u32 %v1877, 16
      %v2071 = vrot.slane %v2069, 5
      %v2072 = vor.u32 %v2068, %v2071
      %v2073 = vrot.slane %v2072, 4
      %v2075 = vshll.u32 %v1878, 16
      %v2077 = vrot.slane %v2075, 5
      %v2078 = vsel %vm287, %v2073, %v2077
      %v2080 = vshrl.u32 %v1879, 16
      %v2082 = vrot.slane %v2080, 4
      %v2083 = vshll.u32 %v1879, 16
      %v2085 = vrot.slane %v2083, 5
      %v2086 = vor.u32 %v2082, %v2085
      %v2087 = vrot.slane %v2086, 4
      %v2089 = vshll.u32 %v1880, 16
      %v2091 = vrot.slane %v2089, 5
      %v2092 = vsel %vm287, %v2087, %v2091
      %v2094 = vshrl.u32 %v1881, 16
      %v2096 = vrot.slane %v2094, 4
      %v2097 = vshll.u32 %v1881, 16
      %v2099 = vrot.slane %v2097, 5
      %v2100 = vor.u32 %v2096, %v2099
      %v2101 = vrot.slane %v2100, 4
      %v2103 = vshll.u32 %v1882, 16
      %v2105 = vrot.slane %v2103, 5
      %v2106 = vsel %vm287, %v2101, %v2105
      %v2107 = vunpack.c.l.b16 %v1896
      %v2108 = vunpack.c.l.b16 %v1910
      %v2109 = vunpack.c.l.b16 %v1924
      %v2110 = vunpack.c.l.b16 %v1938
      %v2111 = vunpack.c.l.b16 %v1952
      %v2112 = vunpack.c.l.b16 %v1966
      %v2113 = vunpack.c.l.b16 %v1980
      %v2114 = vunpack.c.l.b16 %v1994
      %v2115 = vunpack.c.l.b16 %v2008
      %v2116 = vunpack.c.l.b16 %v2022
      %v2117 = vunpack.c.l.b16 %v2036
      %v2118 = vunpack.c.l.b16 %v2050
      %v2119 = vunpack.c.l.b16 %v2064
      %v2120 = vunpack.c.l.b16 %v2078
      %v2121 = vunpack.c.l.b16 %v2092
      %v2122 = vunpack.c.l.b16 %v2106
      %v2123 = vpack.c.b16 %v2108, %v2107
      %v2124 = vpack.c.b16 %v2110, %v2109
      %v2125 = vpack.c.b16 %v2112, %v2111
      %v2126 = vpack.c.b16 %v2114, %v2113
      %v2127 = vpack.c.b16 %v2116, %v2115
      %v2128 = vpack.c.b16 %v2118, %v2117
      %v2129 = vpack.c.b16 %v2120, %v2119
      %v2130 = vpack.c.b16 %v2122, %v2121
      %2131 = vrot.lane.b32.xlu0 %v2123, 16
      %v2132 = vpop.permute.xlu0 %2131
      %2133 = vrot.lane.b32.xlu0 %v2124, 16
      %v2134 = vpop.permute.xlu0 %2133
      %2135 = vrot.lane.b32.xlu0 %v2125, 16
      %v2136 = vpop.permute.xlu0 %2135
      %2137 = vrot.lane.b32.xlu0 %v2126, 16
      %v2138 = vpop.permute.xlu0 %2137
      %2139 = vrot.lane.b32.xlu0 %v2127, 16
      %v2140 = vpop.permute.xlu0 %2139
      %2141 = vrot.lane.b32.xlu0 %v2128, 16
      %v2142 = vpop.permute.xlu0 %2141
      %2143 = vrot.lane.b32.xlu0 %v2129, 16
      %v2144 = vpop.permute.xlu0 %2143
      %2145 = vrot.lane.b32.xlu0 %v2130, 16
      %v2146 = vpop.permute.xlu0 %2145
      %2155 = vst.msk [vmem:[#allocation2 + $0x8] sm:$0xff] %vm560, %v2132
      %2156 = vst.msk [vmem:[#allocation2 + $0x18] sm:$0xff] %vm560, %v2134
      %2157 = vst.msk [vmem:[#allocation2 + $0x28] sm:$0xff] %vm560, %v2136
      %2158 = vst.msk [vmem:[#allocation2 + $0x38] sm:$0xff] %vm560, %v2138
      %2159 = vst.msk [vmem:[#allocation2 + $0x48] sm:$0xff] %vm560, %v2140
      %2160 = vst.msk [vmem:[#allocation2 + $0x58] sm:$0xff] %vm560, %v2142
      %2161 = vst.msk [vmem:[#allocation2 + $0x68] sm:$0xff] %vm560, %v2144
      %2162 = vst.msk [vmem:[#allocation2 + $0x78] sm:$0xff] %vm560, %v2146
      %s2163 = scalar_lea.vmem %s170, 40
      %v2164 = vld [vmem:[%s2163] sm:$0xf]
      %v2165 = vld [vmem:[%s2163 + $0x20] sm:$0xf]
      %v2166 = vld [vmem:[%s2163 + $0x40] sm:$0xf]
      %v2167 = vld [vmem:[%s2163 + $0x60] sm:$0xf]
      %v2168 = vld [vmem:[%s2163 + $0x80] sm:$0xf]
      %v2169 = vld [vmem:[%s2163 + $0xa0] sm:$0xf]
      %v2170 = vld [vmem:[%s2163 + $0xc0] sm:$0xf]
      %v2171 = vld [vmem:[%s2163 + $0xe0] sm:$0xf]
      %v2172 = vld [vmem:[%s2163 + $0x120] sm:$0xf]
      %v2173 = vld [vmem:[%s2163 + $0x140] sm:$0xf]
      %v2174 = vld [vmem:[%s2163 + $0x160] sm:$0xf]
      %v2175 = vld [vmem:[%s2163 + $0x180] sm:$0xf]
      %v2176 = vld [vmem:[%s2163 + $0x1a0] sm:$0xf]
      %v2177 = vld [vmem:[%s2163 + $0x1c0] sm:$0xf]
      %v2178 = vld [vmem:[%s2163 + $0x1e0] sm:$0xf]
      %v2179 = vld [vmem:[%s2163 + $0x200] sm:$0xf]
      %v2196 = vunpack.c.l.b16 %v2164
      %v2197 = vunpack.c.l.b16 %v2165
      %v2198 = vunpack.c.l.b16 %v2166
      %v2199 = vunpack.c.l.b16 %v2167
      %v2200 = vunpack.c.l.b16 %v2168
      %v2201 = vunpack.c.l.b16 %v2169
      %v2202 = vunpack.c.l.b16 %v2170
      %v2203 = vunpack.c.l.b16 %v2171
      %v2204 = vunpack.c.l.b16 %v2172
      %v2205 = vunpack.c.l.b16 %v2173
      %v2206 = vunpack.c.l.b16 %v2174
      %v2207 = vunpack.c.l.b16 %v2175
      %v2208 = vunpack.c.l.b16 %v2176
      %v2209 = vunpack.c.l.b16 %v2177
      %v2210 = vunpack.c.l.b16 %v2178
      %v2211 = vunpack.c.l.b16 %v2179
      %v2212 = vpack.c.b16 %v2197, %v2196
      %v2213 = vpack.c.b16 %v2199, %v2198
      %v2214 = vpack.c.b16 %v2201, %v2200
      %v2215 = vpack.c.b16 %v2203, %v2202
      %v2216 = vpack.c.b16 %v2205, %v2204
      %v2217 = vpack.c.b16 %v2207, %v2206
      %v2218 = vpack.c.b16 %v2209, %v2208
      %v2219 = vpack.c.b16 %v2211, %v2210
      %2220 = vrot.lane.b32.xlu0 %v2212, 32
      %v2221 = vpop.permute.xlu0 %2220
      %2222 = vrot.lane.b32.xlu0 %v2213, 32
      %v2223 = vpop.permute.xlu0 %2222
      %2224 = vrot.lane.b32.xlu0 %v2214, 32
      %v2225 = vpop.permute.xlu0 %2224
      %2226 = vrot.lane.b32.xlu0 %v2215, 32
      %v2227 = vpop.permute.xlu0 %2226
      %2228 = vrot.lane.b32.xlu0 %v2216, 32
      %v2229 = vpop.permute.xlu0 %2228
      %2230 = vrot.lane.b32.xlu0 %v2217, 32
      %v2231 = vpop.permute.xlu0 %2230
      %2232 = vrot.lane.b32.xlu0 %v2218, 32
      %v2233 = vpop.permute.xlu0 %2232
      %2234 = vrot.lane.b32.xlu0 %v2219, 32
      %v2235 = vpop.permute.xlu0 %2234
      %2244 = vst.msk [vmem:[#allocation2 + $0x8] sm:$0xff] %vm650, %v2221
      %2245 = vst.msk [vmem:[#allocation2 + $0x18] sm:$0xff] %vm650, %v2223
      %2246 = vst.msk [vmem:[#allocation2 + $0x28] sm:$0xff] %vm650, %v2225
      %2247 = vst.msk [vmem:[#allocation2 + $0x38] sm:$0xff] %vm650, %v2227
      %2248 = vst.msk [vmem:[#allocation2 + $0x48] sm:$0xff] %vm650, %v2229
      %2249 = vst.msk [vmem:[#allocation2 + $0x58] sm:$0xff] %vm650, %v2231
      %2250 = vst.msk [vmem:[#allocation2 + $0x68] sm:$0xff] %vm650, %v2233
      %2251 = vst.msk [vmem:[#allocation2 + $0x78] sm:$0xff] %vm650, %v2235
      %v2252 = vld [vmem:[%s2163] sm:$0xf]
      %v2253 = vld [vmem:[%s2163 + $0x4] sm:$0x1]
      %v2254 = vld [vmem:[%s2163 + $0x20] sm:$0xf]
      %v2255 = vld [vmem:[%s2163 + $0x24] sm:$0x1]
      %v2256 = vld [vmem:[%s2163 + $0x40] sm:$0xf]
      %v2257 = vld [vmem:[%s2163 + $0x44] sm:$0x1]
      %v2258 = vld [vmem:[%s2163 + $0x60] sm:$0xf]
      %v2259 = vld [vmem:[%s2163 + $0x64] sm:$0x1]
      %v2260 = vld [vmem:[%s2163 + $0x80] sm:$0xf]
      %v2261 = vld [vmem:[%s2163 + $0x84] sm:$0x1]
      %v2262 = vld [vmem:[%s2163 + $0xa0] sm:$0xf]
      %v2263 = vld [vmem:[%s2163 + $0xa4] sm:$0x1]
      %v2264 = vld [vmem:[%s2163 + $0xc0] sm:$0xf]
      %v2265 = vld [vmem:[%s2163 + $0xc4] sm:$0x1]
      %v2266 = vld [vmem:[%s2163 + $0xe0] sm:$0xf]
      %v2267 = vld [vmem:[%s2163 + $0xe4] sm:$0x1]
      %v2268 = vld [vmem:[%s2163 + $0x120] sm:$0xf]
      %v2269 = vld [vmem:[%s2163 + $0x124] sm:$0x1]
      %v2270 = vld [vmem:[%s2163 + $0x140] sm:$0xf]
      %v2271 = vld [vmem:[%s2163 + $0x144] sm:$0x1]
      %v2272 = vld [vmem:[%s2163 + $0x160] sm:$0xf]
      %v2273 = vld [vmem:[%s2163 + $0x164] sm:$0x1]
      %v2274 = vld [vmem:[%s2163 + $0x180] sm:$0xf]
      %v2275 = vld [vmem:[%s2163 + $0x184] sm:$0x1]
      %v2276 = vld [vmem:[%s2163 + $0x1a0] sm:$0xf]
      %v2277 = vld [vmem:[%s2163 + $0x1a4] sm:$0x1]
      %v2278 = vld [vmem:[%s2163 + $0x1c0] sm:$0xf]
      %v2279 = vld [vmem:[%s2163 + $0x1c4] sm:$0x1]
      %v2280 = vld [vmem:[%s2163 + $0x1e0] sm:$0xf]
      %v2281 = vld [vmem:[%s2163 + $0x1e4] sm:$0x1]
      %v2282 = vld [vmem:[%s2163 + $0x200] sm:$0xf]
      %v2283 = vld [vmem:[%s2163 + $0x204] sm:$0x1]
      %v2285 = vshrl.u32 %v2252, 16
      %v2287 = vrot.slane %v2285, 4
      %v2288 = vshll.u32 %v2252, 16
      %v2290 = vrot.slane %v2288, 5
      %v2291 = vor.u32 %v2287, %v2290
      %v2292 = vrot.slane %v2291, 4
      %v2294 = vshll.u32 %v2253, 16
      %v2296 = vrot.slane %v2294, 5
      %v2297 = vsel %vm287, %v2292, %v2296
      %v2299 = vshrl.u32 %v2254, 16
      %v2301 = vrot.slane %v2299, 4
      %v2302 = vshll.u32 %v2254, 16
      %v2304 = vrot.slane %v2302, 5
      %v2305 = vor.u32 %v2301, %v2304
      %v2306 = vrot.slane %v2305, 4
      %v2308 = vshll.u32 %v2255, 16
      %v2310 = vrot.slane %v2308, 5
      %v2311 = vsel %vm287, %v2306, %v2310
      %v2313 = vshrl.u32 %v2256, 16
      %v2315 = vrot.slane %v2313, 4
      %v2316 = vshll.u32 %v2256, 16
      %v2318 = vrot.slane %v2316, 5
      %v2319 = vor.u32 %v2315, %v2318
      %v2320 = vrot.slane %v2319, 4
      %v2322 = vshll.u32 %v2257, 16
      %v2324 = vrot.slane %v2322, 5
      %v2325 = vsel %vm287, %v2320, %v2324
      %v2327 = vshrl.u32 %v2258, 16
      %v2329 = vrot.slane %v2327, 4
      %v2330 = vshll.u32 %v2258, 16
      %v2332 = vrot.slane %v2330, 5
      %v2333 = vor.u32 %v2329, %v2332
      %v2334 = vrot.slane %v2333, 4
      %v2336 = vshll.u32 %v2259, 16
      %v2338 = vrot.slane %v2336, 5
      %v2339 = vsel %vm287, %v2334, %v2338
      %v2341 = vshrl.u32 %v2260, 16
      %v2343 = vrot.slane %v2341, 4
      %v2344 = vshll.u32 %v2260, 16
      %v2346 = vrot.slane %v2344, 5
      %v2347 = vor.u32 %v2343, %v2346
      %v2348 = vrot.slane %v2347, 4
      %v2350 = vshll.u32 %v2261, 16
      %v2352 = vrot.slane %v2350, 5
      %v2353 = vsel %vm287, %v2348, %v2352
      %v2355 = vshrl.u32 %v2262, 16
      %v2357 = vrot.slane %v2355, 4
      %v2358 = vshll.u32 %v2262, 16
      %v2360 = vrot.slane %v2358, 5
      %v2361 = vor.u32 %v2357, %v2360
      %v2362 = vrot.slane %v2361, 4
      %v2364 = vshll.u32 %v2263, 16
      %v2366 = vrot.slane %v2364, 5
      %v2367 = vsel %vm287, %v2362, %v2366
      %v2369 = vshrl.u32 %v2264, 16
      %v2371 = vrot.slane %v2369, 4
      %v2372 = vshll.u32 %v2264, 16
      %v2374 = vrot.slane %v2372, 5
      %v2375 = vor.u32 %v2371, %v2374
      %v2376 = vrot.slane %v2375, 4
      %v2378 = vshll.u32 %v2265, 16
      %v2380 = vrot.slane %v2378, 5
      %v2381 = vsel %vm287, %v2376, %v2380
      %v2383 = vshrl.u32 %v2266, 16
      %v2385 = vrot.slane %v2383, 4
      %v2386 = vshll.u32 %v2266, 16
      %v2388 = vrot.slane %v2386, 5
      %v2389 = vor.u32 %v2385, %v2388
      %v2390 = vrot.slane %v2389, 4
      %v2392 = vshll.u32 %v2267, 16
      %v2394 = vrot.slane %v2392, 5
      %v2395 = vsel %vm287, %v2390, %v2394
      %v2397 = vshrl.u32 %v2268, 16
      %v2399 = vrot.slane %v2397, 4
      %v2400 = vshll.u32 %v2268, 16
      %v2402 = vrot.slane %v2400, 5
      %v2403 = vor.u32 %v2399, %v2402
      %v2404 = vrot.slane %v2403, 4
      %v2406 = vshll.u32 %v2269, 16
      %v2408 = vrot.slane %v2406, 5
      %v2409 = vsel %vm287, %v2404, %v2408
      %v2411 = vshrl.u32 %v2270, 16
      %v2413 = vrot.slane %v2411, 4
      %v2414 = vshll.u32 %v2270, 16
      %v2416 = vrot.slane %v2414, 5
      %v2417 = vor.u32 %v2413, %v2416
      %v2418 = vrot.slane %v2417, 4
      %v2420 = vshll.u32 %v2271, 16
      %v2422 = vrot.slane %v2420, 5
      %v2423 = vsel %vm287, %v2418, %v2422
      %v2425 = vshrl.u32 %v2272, 16
      %v2427 = vrot.slane %v2425, 4
      %v2428 = vshll.u32 %v2272, 16
      %v2430 = vrot.slane %v2428, 5
      %v2431 = vor.u32 %v2427, %v2430
      %v2432 = vrot.slane %v2431, 4
      %v2434 = vshll.u32 %v2273, 16
      %v2436 = vrot.slane %v2434, 5
      %v2437 = vsel %vm287, %v2432, %v2436
      %v2439 = vshrl.u32 %v2274, 16
      %v2441 = vrot.slane %v2439, 4
      %v2442 = vshll.u32 %v2274, 16
      %v2444 = vrot.slane %v2442, 5
      %v2445 = vor.u32 %v2441, %v2444
      %v2446 = vrot.slane %v2445, 4
      %v2448 = vshll.u32 %v2275, 16
      %v2450 = vrot.slane %v2448, 5
      %v2451 = vsel %vm287, %v2446, %v2450
      %v2453 = vshrl.u32 %v2276, 16
      %v2455 = vrot.slane %v2453, 4
      %v2456 = vshll.u32 %v2276, 16
      %v2458 = vrot.slane %v2456, 5
      %v2459 = vor.u32 %v2455, %v2458
      %v2460 = vrot.slane %v2459, 4
      %v2462 = vshll.u32 %v2277, 16
      %v2464 = vrot.slane %v2462, 5
      %v2465 = vsel %vm287, %v2460, %v2464
      %v2467 = vshrl.u32 %v2278, 16
      %v2469 = vrot.slane %v2467, 4
      %v2470 = vshll.u32 %v2278, 16
      %v2472 = vrot.slane %v2470, 5
      %v2473 = vor.u32 %v2469, %v2472
      %v2474 = vrot.slane %v2473, 4
      %v2476 = vshll.u32 %v2279, 16
      %v2478 = vrot.slane %v2476, 5
      %v2479 = vsel %vm287, %v2474, %v2478
      %v2481 = vshrl.u32 %v2280, 16
      %v2483 = vrot.slane %v2481, 4
      %v2484 = vshll.u32 %v2280, 16
      %v2486 = vrot.slane %v2484, 5
      %v2487 = vor.u32 %v2483, %v2486
      %v2488 = vrot.slane %v2487, 4
      %v2490 = vshll.u32 %v2281, 16
      %v2492 = vrot.slane %v2490, 5
      %v2493 = vsel %vm287, %v2488, %v2492
      %v2495 = vshrl.u32 %v2282, 16
      %v2497 = vrot.slane %v2495, 4
      %v2498 = vshll.u32 %v2282, 16
      %v2500 = vrot.slane %v2498, 5
      %v2501 = vor.u32 %v2497, %v2500
      %v2502 = vrot.slane %v2501, 4
      %v2504 = vshll.u32 %v2283, 16
      %v2506 = vrot.slane %v2504, 5
      %v2507 = vsel %vm287, %v2502, %v2506
      %v2508 = vunpack.c.l.b16 %v2297
      %v2509 = vunpack.c.l.b16 %v2311
      %v2510 = vunpack.c.l.b16 %v2325
      %v2511 = vunpack.c.l.b16 %v2339
      %v2512 = vunpack.c.l.b16 %v2353
      %v2513 = vunpack.c.l.b16 %v2367
      %v2514 = vunpack.c.l.b16 %v2381
      %v2515 = vunpack.c.l.b16 %v2395
      %v2516 = vunpack.c.l.b16 %v2409
      %v2517 = vunpack.c.l.b16 %v2423
      %v2518 = vunpack.c.l.b16 %v2437
      %v2519 = vunpack.c.l.b16 %v2451
      %v2520 = vunpack.c.l.b16 %v2465
      %v2521 = vunpack.c.l.b16 %v2479
      %v2522 = vunpack.c.l.b16 %v2493
      %v2523 = vunpack.c.l.b16 %v2507
      %v2524 = vpack.c.b16 %v2509, %v2508
      %v2525 = vpack.c.b16 %v2511, %v2510
      %v2526 = vpack.c.b16 %v2513, %v2512
      %v2527 = vpack.c.b16 %v2515, %v2514
      %v2528 = vpack.c.b16 %v2517, %v2516
      %v2529 = vpack.c.b16 %v2519, %v2518
      %v2530 = vpack.c.b16 %v2521, %v2520
      %v2531 = vpack.c.b16 %v2523, %v2522
      %2532 = vrot.lane.b32.xlu0 %v2524, 48
      %v2533 = vpop.permute.xlu0 %2532
      %2534 = vrot.lane.b32.xlu0 %v2525, 48
      %v2535 = vpop.permute.xlu0 %2534
      %2536 = vrot.lane.b32.xlu0 %v2526, 48
      %v2537 = vpop.permute.xlu0 %2536
      %2538 = vrot.lane.b32.xlu0 %v2527, 48
      %v2539 = vpop.permute.xlu0 %2538
      %2540 = vrot.lane.b32.xlu0 %v2528, 48
      %v2541 = vpop.permute.xlu0 %2540
      %2542 = vrot.lane.b32.xlu0 %v2529, 48
      %v2543 = vpop.permute.xlu0 %2542
      %2544 = vrot.lane.b32.xlu0 %v2530, 48
      %v2545 = vpop.permute.xlu0 %2544
      %2546 = vrot.lane.b32.xlu0 %v2531, 48
      %v2547 = vpop.permute.xlu0 %2546
      %2556 = vst.msk [vmem:[#allocation2 + $0x8] sm:$0xff] %vm963, %v2533
      %2557 = vst.msk [vmem:[#allocation2 + $0x18] sm:$0xff] %vm963, %v2535
      %2558 = vst.msk [vmem:[#allocation2 + $0x28] sm:$0xff] %vm963, %v2537
      %2559 = vst.msk [vmem:[#allocation2 + $0x38] sm:$0xff] %vm963, %v2539
      %2560 = vst.msk [vmem:[#allocation2 + $0x48] sm:$0xff] %vm963, %v2541
      %2561 = vst.msk [vmem:[#allocation2 + $0x58] sm:$0xff] %vm963, %v2543
      %2562 = vst.msk [vmem:[#allocation2 + $0x68] sm:$0xff] %vm963, %v2545
      %2563 = vst.msk [vmem:[#allocation2 + $0x78] sm:$0xff] %vm963, %v2547
      %s2564 = scalar_lea.vmem %s170, 48
      %v2565 = vld [vmem:[%s2564] sm:$0xf]
      %v2566 = vld [vmem:[%s2564 + $0x20] sm:$0xf]
      %v2567 = vld [vmem:[%s2564 + $0x40] sm:$0xf]
      %v2568 = vld [vmem:[%s2564 + $0x60] sm:$0xf]
      %v2569 = vld [vmem:[%s2564 + $0x80] sm:$0xf]
      %v2570 = vld [vmem:[%s2564 + $0xa0] sm:$0xf]
      %v2571 = vld [vmem:[%s2564 + $0xc0] sm:$0xf]
      %v2572 = vld [vmem:[%s2564 + $0xe0] sm:$0xf]
      %v2573 = vld [vmem:[%s2564 + $0x120] sm:$0xf]
      %v2574 = vld [vmem:[%s2564 + $0x140] sm:$0xf]
      %v2575 = vld [vmem:[%s2564 + $0x160] sm:$0xf]
      %v2576 = vld [vmem:[%s2564 + $0x180] sm:$0xf]
      %v2577 = vld [vmem:[%s2564 + $0x1a0] sm:$0xf]
      %v2578 = vld [vmem:[%s2564 + $0x1c0] sm:$0xf]
      %v2579 = vld [vmem:[%s2564 + $0x1e0] sm:$0xf]
      %v2580 = vld [vmem:[%s2564 + $0x200] sm:$0xf]
      %v2597 = vunpack.c.l.b16 %v2565
      %v2598 = vunpack.c.l.b16 %v2566
      %v2599 = vunpack.c.l.b16 %v2567
      %v2600 = vunpack.c.l.b16 %v2568
      %v2601 = vunpack.c.l.b16 %v2569
      %v2602 = vunpack.c.l.b16 %v2570
      %v2603 = vunpack.c.l.b16 %v2571
      %v2604 = vunpack.c.l.b16 %v2572
      %v2605 = vunpack.c.l.b16 %v2573
      %v2606 = vunpack.c.l.b16 %v2574
      %v2607 = vunpack.c.l.b16 %v2575
      %v2608 = vunpack.c.l.b16 %v2576
      %v2609 = vunpack.c.l.b16 %v2577
      %v2610 = vunpack.c.l.b16 %v2578
      %v2611 = vunpack.c.l.b16 %v2579
      %v2612 = vunpack.c.l.b16 %v2580
      %v2613 = vpack.c.b16 %v2598, %v2597
      %v2614 = vpack.c.b16 %v2600, %v2599
      %v2615 = vpack.c.b16 %v2602, %v2601
      %v2616 = vpack.c.b16 %v2604, %v2603
      %v2617 = vpack.c.b16 %v2606, %v2605
      %v2618 = vpack.c.b16 %v2608, %v2607
      %v2619 = vpack.c.b16 %v2610, %v2609
      %v2620 = vpack.c.b16 %v2612, %v2611
      %2621 = vrot.lane.b32.xlu0 %v2613, 64
      %v2622 = vpop.permute.xlu0 %2621
      %2623 = vrot.lane.b32.xlu0 %v2614, 64
      %v2624 = vpop.permute.xlu0 %2623
      %2625 = vrot.lane.b32.xlu0 %v2615, 64
      %v2626 = vpop.permute.xlu0 %2625
      %2627 = vrot.lane.b32.xlu0 %v2616, 64
      %v2628 = vpop.permute.xlu0 %2627
      %2629 = vrot.lane.b32.xlu0 %v2617, 64
      %v2630 = vpop.permute.xlu0 %2629
      %2631 = vrot.lane.b32.xlu0 %v2618, 64
      %v2632 = vpop.permute.xlu0 %2631
      %2633 = vrot.lane.b32.xlu0 %v2619, 64
      %v2634 = vpop.permute.xlu0 %2633
      %2635 = vrot.lane.b32.xlu0 %v2620, 64
      %v2636 = vpop.permute.xlu0 %2635
      %2645 = vst.msk [vmem:[#allocation2 + $0x8] sm:$0xff] %vm1053, %v2622
      %2646 = vst.msk [vmem:[#allocation2 + $0x18] sm:$0xff] %vm1053, %v2624
      %2647 = vst.msk [vmem:[#allocation2 + $0x28] sm:$0xff] %vm1053, %v2626
      %2648 = vst.msk [vmem:[#allocation2 + $0x38] sm:$0xff] %vm1053, %v2628
      %2649 = vst.msk [vmem:[#allocation2 + $0x48] sm:$0xff] %vm1053, %v2630
      %2650 = vst.msk [vmem:[#allocation2 + $0x58] sm:$0xff] %vm1053, %v2632
      %2651 = vst.msk [vmem:[#allocation2 + $0x68] sm:$0xff] %vm1053, %v2634
      %2652 = vst.msk [vmem:[#allocation2 + $0x78] sm:$0xff] %vm1053, %v2636
      %v2653 = vld [vmem:[%s2564] sm:$0xf]
      %v2654 = vld [vmem:[%s2564 + $0x4] sm:$0x1]
      %v2655 = vld [vmem:[%s2564 + $0x20] sm:$0xf]
      %v2656 = vld [vmem:[%s2564 + $0x24] sm:$0x1]
      %v2657 = vld [vmem:[%s2564 + $0x40] sm:$0xf]
      %v2658 = vld [vmem:[%s2564 + $0x44] sm:$0x1]
      %v2659 = vld [vmem:[%s2564 + $0x60] sm:$0xf]
      %v2660 = vld [vmem:[%s2564 + $0x64] sm:$0x1]
      %v2661 = vld [vmem:[%s2564 + $0x80] sm:$0xf]
      %v2662 = vld [vmem:[%s2564 + $0x84] sm:$0x1]
      %v2663 = vld [vmem:[%s2564 + $0xa0] sm:$0xf]
      %v2664 = vld [vmem:[%s2564 + $0xa4] sm:$0x1]
      %v2665 = vld [vmem:[%s2564 + $0xc0] sm:$0xf]
      %v2666 = vld [vmem:[%s2564 + $0xc4] sm:$0x1]
      %v2667 = vld [vmem:[%s2564 + $0xe0] sm:$0xf]
      %v2668 = vld [vmem:[%s2564 + $0xe4] sm:$0x1]
      %v2669 = vld [vmem:[%s2564 + $0x120] sm:$0xf]
      %v2670 = vld [vmem:[%s2564 + $0x124] sm:$0x1]
      %v2671 = vld [vmem:[%s2564 + $0x140] sm:$0xf]
      %v2672 = vld [vmem:[%s2564 + $0x144] sm:$0x1]
      %v2673 = vld [vmem:[%s2564 + $0x160] sm:$0xf]
      %v2674 = vld [vmem:[%s2564 + $0x164] sm:$0x1]
      %v2675 = vld [vmem:[%s2564 + $0x180] sm:$0xf]
      %v2676 = vld [vmem:[%s2564 + $0x184] sm:$0x1]
      %v2677 = vld [vmem:[%s2564 + $0x1a0] sm:$0xf]
      %v2678 = vld [vmem:[%s2564 + $0x1a4] sm:$0x1]
      %v2679 = vld [vmem:[%s2564 + $0x1c0] sm:$0xf]
      %v2680 = vld [vmem:[%s2564 + $0x1c4] sm:$0x1]
      %v2681 = vld [vmem:[%s2564 + $0x1e0] sm:$0xf]
      %v2682 = vld [vmem:[%s2564 + $0x1e4] sm:$0x1]
      %v2683 = vld [vmem:[%s2564 + $0x200] sm:$0xf]
      %v2684 = vld [vmem:[%s2564 + $0x204] sm:$0x1]
      %v2686 = vshrl.u32 %v2653, 16
      %v2688 = vrot.slane %v2686, 4
      %v2689 = vshll.u32 %v2653, 16
      %v2691 = vrot.slane %v2689, 5
      %v2692 = vor.u32 %v2688, %v2691
      %v2693 = vrot.slane %v2692, 4
      %v2695 = vshll.u32 %v2654, 16
      %v2697 = vrot.slane %v2695, 5
      %v2698 = vsel %vm287, %v2693, %v2697
      %v2700 = vshrl.u32 %v2655, 16
      %v2702 = vrot.slane %v2700, 4
      %v2703 = vshll.u32 %v2655, 16
      %v2705 = vrot.slane %v2703, 5
      %v2706 = vor.u32 %v2702, %v2705
      %v2707 = vrot.slane %v2706, 4
      %v2709 = vshll.u32 %v2656, 16
      %v2711 = vrot.slane %v2709, 5
      %v2712 = vsel %vm287, %v2707, %v2711
      %v2714 = vshrl.u32 %v2657, 16
      %v2716 = vrot.slane %v2714, 4
      %v2717 = vshll.u32 %v2657, 16
      %v2719 = vrot.slane %v2717, 5
      %v2720 = vor.u32 %v2716, %v2719
      %v2721 = vrot.slane %v2720, 4
      %v2723 = vshll.u32 %v2658, 16
      %v2725 = vrot.slane %v2723, 5
      %v2726 = vsel %vm287, %v2721, %v2725
      %v2728 = vshrl.u32 %v2659, 16
      %v2730 = vrot.slane %v2728, 4
      %v2731 = vshll.u32 %v2659, 16
      %v2733 = vrot.slane %v2731, 5
      %v2734 = vor.u32 %v2730, %v2733
      %v2735 = vrot.slane %v2734, 4
      %v2737 = vshll.u32 %v2660, 16
      %v2739 = vrot.slane %v2737, 5
      %v2740 = vsel %vm287, %v2735, %v2739
      %v2742 = vshrl.u32 %v2661, 16
      %v2744 = vrot.slane %v2742, 4
      %v2745 = vshll.u32 %v2661, 16
      %v2747 = vrot.slane %v2745, 5
      %v2748 = vor.u32 %v2744, %v2747
      %v2749 = vrot.slane %v2748, 4
      %v2751 = vshll.u32 %v2662, 16
      %v2753 = vrot.slane %v2751, 5
      %v2754 = vsel %vm287, %v2749, %v2753
      %v2756 = vshrl.u32 %v2663, 16
      %v2758 = vrot.slane %v2756, 4
      %v2759 = vshll.u32 %v2663, 16
      %v2761 = vrot.slane %v2759, 5
      %v2762 = vor.u32 %v2758, %v2761
      %v2763 = vrot.slane %v2762, 4
      %v2765 = vshll.u32 %v2664, 16
      %v2767 = vrot.slane %v2765, 5
      %v2768 = vsel %vm287, %v2763, %v2767
      %v2770 = vshrl.u32 %v2665, 16
      %v2772 = vrot.slane %v2770, 4
      %v2773 = vshll.u32 %v2665, 16
      %v2775 = vrot.slane %v2773, 5
      %v2776 = vor.u32 %v2772, %v2775
      %v2777 = vrot.slane %v2776, 4
      %v2779 = vshll.u32 %v2666, 16
      %v2781 = vrot.slane %v2779, 5
      %v2782 = vsel %vm287, %v2777, %v2781
      %v2784 = vshrl.u32 %v2667, 16
      %v2786 = vrot.slane %v2784, 4
      %v2787 = vshll.u32 %v2667, 16
      %v2789 = vrot.slane %v2787, 5
      %v2790 = vor.u32 %v2786, %v2789
      %v2791 = vrot.slane %v2790, 4
      %v2793 = vshll.u32 %v2668, 16
      %v2795 = vrot.slane %v2793, 5
      %v2796 = vsel %vm287, %v2791, %v2795
      %v2798 = vshrl.u32 %v2669, 16
      %v2800 = vrot.slane %v2798, 4
      %v2801 = vshll.u32 %v2669, 16
      %v2803 = vrot.slane %v2801, 5
      %v2804 = vor.u32 %v2800, %v2803
      %v2805 = vrot.slane %v2804, 4
      %v2807 = vshll.u32 %v2670, 16
      %v2809 = vrot.slane %v2807, 5
      %v2810 = vsel %vm287, %v2805, %v2809
      %v2812 = vshrl.u32 %v2671, 16
      %v2814 = vrot.slane %v2812, 4
      %v2815 = vshll.u32 %v2671, 16
      %v2817 = vrot.slane %v2815, 5
      %v2818 = vor.u32 %v2814, %v2817
      %v2819 = vrot.slane %v2818, 4
      %v2821 = vshll.u32 %v2672, 16
      %v2823 = vrot.slane %v2821, 5
      %v2824 = vsel %vm287, %v2819, %v2823
      %v2826 = vshrl.u32 %v2673, 16
      %v2828 = vrot.slane %v2826, 4
      %v2829 = vshll.u32 %v2673, 16
      %v2831 = vrot.slane %v2829, 5
      %v2832 = vor.u32 %v2828, %v2831
      %v2833 = vrot.slane %v2832, 4
      %v2835 = vshll.u32 %v2674, 16
      %v2837 = vrot.slane %v2835, 5
      %v2838 = vsel %vm287, %v2833, %v2837
      %v2840 = vshrl.u32 %v2675, 16
      %v2842 = vrot.slane %v2840, 4
      %v2843 = vshll.u32 %v2675, 16
      %v2845 = vrot.slane %v2843, 5
      %v2846 = vor.u32 %v2842, %v2845
      %v2847 = vrot.slane %v2846, 4
      %v2849 = vshll.u32 %v2676, 16
      %v2851 = vrot.slane %v2849, 5
      %v2852 = vsel %vm287, %v2847, %v2851
      %v2854 = vshrl.u32 %v2677, 16
      %v2856 = vrot.slane %v2854, 4
      %v2857 = vshll.u32 %v2677, 16
      %v2859 = vrot.slane %v2857, 5
      %v2860 = vor.u32 %v2856, %v2859
      %v2861 = vrot.slane %v2860, 4
      %v2863 = vshll.u32 %v2678, 16
      %v2865 = vrot.slane %v2863, 5
      %v2866 = vsel %vm287, %v2861, %v2865
      %v2868 = vshrl.u32 %v2679, 16
      %v2870 = vrot.slane %v2868, 4
      %v2871 = vshll.u32 %v2679, 16
      %v2873 = vrot.slane %v2871, 5
      %v2874 = vor.u32 %v2870, %v2873
      %v2875 = vrot.slane %v2874, 4
      %v2877 = vshll.u32 %v2680, 16
      %v2879 = vrot.slane %v2877, 5
      %v2880 = vsel %vm287, %v2875, %v2879
      %v2882 = vshrl.u32 %v2681, 16
      %v2884 = vrot.slane %v2882, 4
      %v2885 = vshll.u32 %v2681, 16
      %v2887 = vrot.slane %v2885, 5
      %v2888 = vor.u32 %v2884, %v2887
      %v2889 = vrot.slane %v2888, 4
      %v2891 = vshll.u32 %v2682, 16
      %v2893 = vrot.slane %v2891, 5
      %v2894 = vsel %vm287, %v2889, %v2893
      %v2896 = vshrl.u32 %v2683, 16
      %v2898 = vrot.slane %v2896, 4
      %v2899 = vshll.u32 %v2683, 16
      %v2901 = vrot.slane %v2899, 5
      %v2902 = vor.u32 %v2898, %v2901
      %v2903 = vrot.slane %v2902, 4
      %v2905 = vshll.u32 %v2684, 16
      %v2907 = vrot.slane %v2905, 5
      %v2908 = vsel %vm287, %v2903, %v2907
      %v2909 = vunpack.c.l.b16 %v2698
      %v2910 = vunpack.c.l.b16 %v2712
      %v2911 = vunpack.c.l.b16 %v2726
      %v2912 = vunpack.c.l.b16 %v2740
      %v2913 = vunpack.c.l.b16 %v2754
      %v2914 = vunpack.c.l.b16 %v2768
      %v2915 = vunpack.c.l.b16 %v2782
      %v2916 = vunpack.c.l.b16 %v2796
      %v2917 = vunpack.c.l.b16 %v2810
      %v2918 = vunpack.c.l.b16 %v2824
      %v2919 = vunpack.c.l.b16 %v2838
      %v2920 = vunpack.c.l.b16 %v2852
      %v2921 = vunpack.c.l.b16 %v2866
      %v2922 = vunpack.c.l.b16 %v2880
      %v2923 = vunpack.c.l.b16 %v2894
      %v2924 = vunpack.c.l.b16 %v2908
      %v2925 = vpack.c.b16 %v2910, %v2909
      %v2926 = vpack.c.b16 %v2912, %v2911
      %v2927 = vpack.c.b16 %v2914, %v2913
      %v2928 = vpack.c.b16 %v2916, %v2915
      %v2929 = vpack.c.b16 %v2918, %v2917
      %v2930 = vpack.c.b16 %v2920, %v2919
      %v2931 = vpack.c.b16 %v2922, %v2921
      %v2932 = vpack.c.b16 %v2924, %v2923
      %2933 = vrot.lane.b32.xlu0 %v2925, 80
      %v2934 = vpop.permute.xlu0 %2933
      %2935 = vrot.lane.b32.xlu0 %v2926, 80
      %v2936 = vpop.permute.xlu0 %2935
      %2937 = vrot.lane.b32.xlu0 %v2927, 80
      %v2938 = vpop.permute.xlu0 %2937
      %2939 = vrot.lane.b32.xlu0 %v2928, 80
      %v2940 = vpop.permute.xlu0 %2939
      %2941 = vrot.lane.b32.xlu0 %v2929, 80
      %v2942 = vpop.permute.xlu0 %2941
      %2943 = vrot.lane.b32.xlu0 %v2930, 80
      %v2944 = vpop.permute.xlu0 %2943
      %2945 = vrot.lane.b32.xlu0 %v2931, 80
      %v2946 = vpop.permute.xlu0 %2945
      %2947 = vrot.lane.b32.xlu0 %v2932, 80
      %v2948 = vpop.permute.xlu0 %2947
      %2957 = vst.msk [vmem:[#allocation2 + $0x8] sm:$0xff] %vm1366, %v2934
      %2958 = vst.msk [vmem:[#allocation2 + $0x18] sm:$0xff] %vm1366, %v2936
      %2959 = vst.msk [vmem:[#allocation2 + $0x28] sm:$0xff] %vm1366, %v2938
      %2960 = vst.msk [vmem:[#allocation2 + $0x38] sm:$0xff] %vm1366, %v2940
      %2961 = vst.msk [vmem:[#allocation2 + $0x48] sm:$0xff] %vm1366, %v2942
      %2962 = vst.msk [vmem:[#allocation2 + $0x58] sm:$0xff] %vm1366, %v2944
      %2963 = vst.msk [vmem:[#allocation2 + $0x68] sm:$0xff] %vm1366, %v2946
      %2964 = vst.msk [vmem:[#allocation2 + $0x78] sm:$0xff] %vm1366, %v2948
      %s2965 = scalar_lea.vmem %s170, 56
      %v2966 = vld [vmem:[%s2965] sm:$0xf]
      %v2967 = vld [vmem:[%s2965 + $0x20] sm:$0xf]
      %v2968 = vld [vmem:[%s2965 + $0x40] sm:$0xf]
      %v2969 = vld [vmem:[%s2965 + $0x60] sm:$0xf]
      %v2970 = vld [vmem:[%s2965 + $0x80] sm:$0xf]
      %v2971 = vld [vmem:[%s2965 + $0xa0] sm:$0xf]
      %v2972 = vld [vmem:[%s2965 + $0xc0] sm:$0xf]
      %v2973 = vld [vmem:[%s2965 + $0xe0] sm:$0xf]
      %v2974 = vld [vmem:[%s2965 + $0x120] sm:$0xf]
      %v2975 = vld [vmem:[%s2965 + $0x140] sm:$0xf]
      %v2976 = vld [vmem:[%s2965 + $0x160] sm:$0xf]
      %v2977 = vld [vmem:[%s2965 + $0x180] sm:$0xf]
      %v2978 = vld [vmem:[%s2965 + $0x1a0] sm:$0xf]
      %v2979 = vld [vmem:[%s2965 + $0x1c0] sm:$0xf]
      %v2980 = vld [vmem:[%s2965 + $0x1e0] sm:$0xf]
      %v2981 = vld [vmem:[%s2965 + $0x200] sm:$0xf]
      %v2998 = vunpack.c.l.b16 %v2966
      %v2999 = vunpack.c.l.b16 %v2967
      %v3000 = vunpack.c.l.b16 %v2968
      %v3001 = vunpack.c.l.b16 %v2969
      %v3002 = vunpack.c.l.b16 %v2970
      %v3003 = vunpack.c.l.b16 %v2971
      %v3004 = vunpack.c.l.b16 %v2972
      %v3005 = vunpack.c.l.b16 %v2973
      %v3006 = vunpack.c.l.b16 %v2974
      %v3007 = vunpack.c.l.b16 %v2975
      %v3008 = vunpack.c.l.b16 %v2976
      %v3009 = vunpack.c.l.b16 %v2977
      %v3010 = vunpack.c.l.b16 %v2978
      %v3011 = vunpack.c.l.b16 %v2979
      %v3012 = vunpack.c.l.b16 %v2980
      %v3013 = vunpack.c.l.b16 %v2981
      %v3014 = vpack.c.b16 %v2999, %v2998
      %v3015 = vpack.c.b16 %v3001, %v3000
      %v3016 = vpack.c.b16 %v3003, %v3002
      %v3017 = vpack.c.b16 %v3005, %v3004
      %v3018 = vpack.c.b16 %v3007, %v3006
      %v3019 = vpack.c.b16 %v3009, %v3008
      %v3020 = vpack.c.b16 %v3011, %v3010
      %v3021 = vpack.c.b16 %v3013, %v3012
      %3022 = vrot.lane.b32.xlu0 %v3014, 96
      %v3023 = vpop.permute.xlu0 %3022
      %3024 = vrot.lane.b32.xlu0 %v3015, 96
      %v3025 = vpop.permute.xlu0 %3024
      %3026 = vrot.lane.b32.xlu0 %v3016, 96
      %v3027 = vpop.permute.xlu0 %3026
      %3028 = vrot.lane.b32.xlu0 %v3017, 96
      %v3029 = vpop.permute.xlu0 %3028
      %3030 = vrot.lane.b32.xlu0 %v3018, 96
      %v3031 = vpop.permute.xlu0 %3030
      %3032 = vrot.lane.b32.xlu0 %v3019, 96
      %v3033 = vpop.permute.xlu0 %3032
      %3034 = vrot.lane.b32.xlu0 %v3020, 96
      %v3035 = vpop.permute.xlu0 %3034
      %3036 = vrot.lane.b32.xlu0 %v3021, 96
      %v3037 = vpop.permute.xlu0 %3036
      %3046 = vst.msk [vmem:[#allocation2 + $0x8] sm:$0xff] %vm1456, %v3023
      %3047 = vst.msk [vmem:[#allocation2 + $0x18] sm:$0xff] %vm1456, %v3025
      %3048 = vst.msk [vmem:[#allocation2 + $0x28] sm:$0xff] %vm1456, %v3027
      %3049 = vst.msk [vmem:[#allocation2 + $0x38] sm:$0xff] %vm1456, %v3029
      %3050 = vst.msk [vmem:[#allocation2 + $0x48] sm:$0xff] %vm1456, %v3031
      %3051 = vst.msk [vmem:[#allocation2 + $0x58] sm:$0xff] %vm1456, %v3033
      %3052 = vst.msk [vmem:[#allocation2 + $0x68] sm:$0xff] %vm1456, %v3035
      %3053 = vst.msk [vmem:[#allocation2 + $0x78] sm:$0xff] %vm1456, %v3037
      %v3054 = vld [vmem:[%s2965] sm:$0xf]
      %v3055 = vld [vmem:[%s2965 + $0x4] sm:$0x1]
      %v3056 = vld [vmem:[%s2965 + $0x20] sm:$0xf]
      %v3057 = vld [vmem:[%s2965 + $0x24] sm:$0x1]
      %v3058 = vld [vmem:[%s2965 + $0x40] sm:$0xf]
      %v3059 = vld [vmem:[%s2965 + $0x44] sm:$0x1]
      %v3060 = vld [vmem:[%s2965 + $0x60] sm:$0xf]
      %v3061 = vld [vmem:[%s2965 + $0x64] sm:$0x1]
      %v3062 = vld [vmem:[%s2965 + $0x80] sm:$0xf]
      %v3063 = vld [vmem:[%s2965 + $0x84] sm:$0x1]
      %v3064 = vld [vmem:[%s2965 + $0xa0] sm:$0xf]
      %v3065 = vld [vmem:[%s2965 + $0xa4] sm:$0x1]
      %v3066 = vld [vmem:[%s2965 + $0xc0] sm:$0xf]
      %v3067 = vld [vmem:[%s2965 + $0xc4] sm:$0x1]
      %v3068 = vld [vmem:[%s2965 + $0xe0] sm:$0xf]
      %v3069 = vld [vmem:[%s2965 + $0xe4] sm:$0x1]
      %v3070 = vld [vmem:[%s2965 + $0x120] sm:$0xf]
      %v3071 = vld [vmem:[%s2965 + $0x124] sm:$0x1]
      %v3072 = vld [vmem:[%s2965 + $0x140] sm:$0xf]
      %v3073 = vld [vmem:[%s2965 + $0x144] sm:$0x1]
      %v3074 = vld [vmem:[%s2965 + $0x160] sm:$0xf]
      %v3075 = vld [vmem:[%s2965 + $0x164] sm:$0x1]
      %v3076 = vld [vmem:[%s2965 + $0x180] sm:$0xf]
      %v3077 = vld [vmem:[%s2965 + $0x184] sm:$0x1]
      %v3078 = vld [vmem:[%s2965 + $0x1a0] sm:$0xf]
      %v3079 = vld [vmem:[%s2965 + $0x1a4] sm:$0x1]
      %v3080 = vld [vmem:[%s2965 + $0x1c0] sm:$0xf]
      %v3081 = vld [vmem:[%s2965 + $0x1c4] sm:$0x1]
      %v3082 = vld [vmem:[%s2965 + $0x1e0] sm:$0xf]
      %v3083 = vld [vmem:[%s2965 + $0x1e4] sm:$0x1]
      %v3084 = vld [vmem:[%s2965 + $0x200] sm:$0xf]
      %v3085 = vld [vmem:[%s2965 + $0x204] sm:$0x1]
      %v3087 = vshrl.u32 %v3054, 16
      %v3089 = vrot.slane %v3087, 4
      %v3090 = vshll.u32 %v3054, 16
      %v3092 = vrot.slane %v3090, 5
      %v3093 = vor.u32 %v3089, %v3092
      %v3094 = vrot.slane %v3093, 4
      %v3096 = vshll.u32 %v3055, 16
      %v3098 = vrot.slane %v3096, 5
      %v3099 = vsel %vm287, %v3094, %v3098
      %v3101 = vshrl.u32 %v3056, 16
      %v3103 = vrot.slane %v3101, 4
      %v3104 = vshll.u32 %v3056, 16
      %v3106 = vrot.slane %v3104, 5
      %v3107 = vor.u32 %v3103, %v3106
      %v3108 = vrot.slane %v3107, 4
      %v3110 = vshll.u32 %v3057, 16
      %v3112 = vrot.slane %v3110, 5
      %v3113 = vsel %vm287, %v3108, %v3112
      %v3115 = vshrl.u32 %v3058, 16
      %v3117 = vrot.slane %v3115, 4
      %v3118 = vshll.u32 %v3058, 16
      %v3120 = vrot.slane %v3118, 5
      %v3121 = vor.u32 %v3117, %v3120
      %v3122 = vrot.slane %v3121, 4
      %v3124 = vshll.u32 %v3059, 16
      %v3126 = vrot.slane %v3124, 5
      %v3127 = vsel %vm287, %v3122, %v3126
      %v3129 = vshrl.u32 %v3060, 16
      %v3131 = vrot.slane %v3129, 4
      %v3132 = vshll.u32 %v3060, 16
      %v3134 = vrot.slane %v3132, 5
      %v3135 = vor.u32 %v3131, %v3134
      %v3136 = vrot.slane %v3135, 4
      %v3138 = vshll.u32 %v3061, 16
      %v3140 = vrot.slane %v3138, 5
      %v3141 = vsel %vm287, %v3136, %v3140
      %v3143 = vshrl.u32 %v3062, 16
      %v3145 = vrot.slane %v3143, 4
      %v3146 = vshll.u32 %v3062, 16
      %v3148 = vrot.slane %v3146, 5
      %v3149 = vor.u32 %v3145, %v3148
      %v3150 = vrot.slane %v3149, 4
      %v3152 = vshll.u32 %v3063, 16
      %v3154 = vrot.slane %v3152, 5
      %v3155 = vsel %vm287, %v3150, %v3154
      %v3157 = vshrl.u32 %v3064, 16
      %v3159 = vrot.slane %v3157, 4
      %v3160 = vshll.u32 %v3064, 16
      %v3162 = vrot.slane %v3160, 5
      %v3163 = vor.u32 %v3159, %v3162
      %v3164 = vrot.slane %v3163, 4
      %v3166 = vshll.u32 %v3065, 16
      %v3168 = vrot.slane %v3166, 5
      %v3169 = vsel %vm287, %v3164, %v3168
      %v3171 = vshrl.u32 %v3066, 16
      %v3173 = vrot.slane %v3171, 4
      %v3174 = vshll.u32 %v3066, 16
      %v3176 = vrot.slane %v3174, 5
      %v3177 = vor.u32 %v3173, %v3176
      %v3178 = vrot.slane %v3177, 4
      %v3180 = vshll.u32 %v3067, 16
      %v3182 = vrot.slane %v3180, 5
      %v3183 = vsel %vm287, %v3178, %v3182
      %v3185 = vshrl.u32 %v3068, 16
      %v3187 = vrot.slane %v3185, 4
      %v3188 = vshll.u32 %v3068, 16
      %v3190 = vrot.slane %v3188, 5
      %v3191 = vor.u32 %v3187, %v3190
      %v3192 = vrot.slane %v3191, 4
      %v3194 = vshll.u32 %v3069, 16
      %v3196 = vrot.slane %v3194, 5
      %v3197 = vsel %vm287, %v3192, %v3196
      %v3199 = vshrl.u32 %v3070, 16
      %v3201 = vrot.slane %v3199, 4
      %v3202 = vshll.u32 %v3070, 16
      %v3204 = vrot.slane %v3202, 5
      %v3205 = vor.u32 %v3201, %v3204
      %v3206 = vrot.slane %v3205, 4
      %v3208 = vshll.u32 %v3071, 16
      %v3210 = vrot.slane %v3208, 5
      %v3211 = vsel %vm287, %v3206, %v3210
      %v3213 = vshrl.u32 %v3072, 16
      %v3215 = vrot.slane %v3213, 4
      %v3216 = vshll.u32 %v3072, 16
      %v3218 = vrot.slane %v3216, 5
      %v3219 = vor.u32 %v3215, %v3218
      %v3220 = vrot.slane %v3219, 4
      %v3222 = vshll.u32 %v3073, 16
      %v3224 = vrot.slane %v3222, 5
      %v3225 = vsel %vm287, %v3220, %v3224
      %v3227 = vshrl.u32 %v3074, 16
      %v3229 = vrot.slane %v3227, 4
      %v3230 = vshll.u32 %v3074, 16
      %v3232 = vrot.slane %v3230, 5
      %v3233 = vor.u32 %v3229, %v3232
      %v3234 = vrot.slane %v3233, 4
      %v3236 = vshll.u32 %v3075, 16
      %v3238 = vrot.slane %v3236, 5
      %v3239 = vsel %vm287, %v3234, %v3238
      %v3241 = vshrl.u32 %v3076, 16
      %v3243 = vrot.slane %v3241, 4
      %v3244 = vshll.u32 %v3076, 16
      %v3246 = vrot.slane %v3244, 5
      %v3247 = vor.u32 %v3243, %v3246
      %v3248 = vrot.slane %v3247, 4
      %v3250 = vshll.u32 %v3077, 16
      %v3252 = vrot.slane %v3250, 5
      %v3253 = vsel %vm287, %v3248, %v3252
      %v3255 = vshrl.u32 %v3078, 16
      %v3257 = vrot.slane %v3255, 4
      %v3258 = vshll.u32 %v3078, 16
      %v3260 = vrot.slane %v3258, 5
      %v3261 = vor.u32 %v3257, %v3260
      %v3262 = vrot.slane %v3261, 4
      %v3264 = vshll.u32 %v3079, 16
      %v3266 = vrot.slane %v3264, 5
      %v3267 = vsel %vm287, %v3262, %v3266
      %v3269 = vshrl.u32 %v3080, 16
      %v3271 = vrot.slane %v3269, 4
      %v3272 = vshll.u32 %v3080, 16
      %v3274 = vrot.slane %v3272, 5
      %v3275 = vor.u32 %v3271, %v3274
      %v3276 = vrot.slane %v3275, 4
      %v3278 = vshll.u32 %v3081, 16
      %v3280 = vrot.slane %v3278, 5
      %v3281 = vsel %vm287, %v3276, %v3280
      %v3283 = vshrl.u32 %v3082, 16
      %v3285 = vrot.slane %v3283, 4
      %v3286 = vshll.u32 %v3082, 16
      %v3288 = vrot.slane %v3286, 5
      %v3289 = vor.u32 %v3285, %v3288
      %v3290 = vrot.slane %v3289, 4
      %v3292 = vshll.u32 %v3083, 16
      %v3294 = vrot.slane %v3292, 5
      %v3295 = vsel %vm287, %v3290, %v3294
      %v3297 = vshrl.u32 %v3084, 16
      %v3299 = vrot.slane %v3297, 4
      %v3300 = vshll.u32 %v3084, 16
      %v3302 = vrot.slane %v3300, 5
      %v3303 = vor.u32 %v3299, %v3302
      %v3304 = vrot.slane %v3303, 4
      %v3306 = vshll.u32 %v3085, 16
      %v3308 = vrot.slane %v3306, 5
      %v3309 = vsel %vm287, %v3304, %v3308
      %v3310 = vunpack.c.l.b16 %v3099
      %v3311 = vunpack.c.l.b16 %v3113
      %v3312 = vunpack.c.l.b16 %v3127
      %v3313 = vunpack.c.l.b16 %v3141
      %v3314 = vunpack.c.l.b16 %v3155
      %v3315 = vunpack.c.l.b16 %v3169
      %v3316 = vunpack.c.l.b16 %v3183
      %v3317 = vunpack.c.l.b16 %v3197
      %v3318 = vunpack.c.l.b16 %v3211
      %v3319 = vunpack.c.l.b16 %v3225
      %v3320 = vunpack.c.l.b16 %v3239
      %v3321 = vunpack.c.l.b16 %v3253
      %v3322 = vunpack.c.l.b16 %v3267
      %v3323 = vunpack.c.l.b16 %v3281
      %v3324 = vunpack.c.l.b16 %v3295
      %v3325 = vunpack.c.l.b16 %v3309
      %v3326 = vpack.c.b16 %v3311, %v3310
      %v3327 = vpack.c.b16 %v3313, %v3312
      %v3328 = vpack.c.b16 %v3315, %v3314
      %v3329 = vpack.c.b16 %v3317, %v3316
      %v3330 = vpack.c.b16 %v3319, %v3318
      %v3331 = vpack.c.b16 %v3321, %v3320
      %v3332 = vpack.c.b16 %v3323, %v3322
      %v3333 = vpack.c.b16 %v3325, %v3324
      %3334 = vrot.lane.b32.xlu0 %v3326, 112
      %v3335 = vpop.permute.xlu0 %3334
      %3336 = vrot.lane.b32.xlu0 %v3327, 112
      %v3337 = vpop.permute.xlu0 %3336
      %3338 = vrot.lane.b32.xlu0 %v3328, 112
      %v3339 = vpop.permute.xlu0 %3338
      %3340 = vrot.lane.b32.xlu0 %v3329, 112
      %v3341 = vpop.permute.xlu0 %3340
      %3342 = vrot.lane.b32.xlu0 %v3330, 112
      %v3343 = vpop.permute.xlu0 %3342
      %3344 = vrot.lane.b32.xlu0 %v3331, 112
      %v3345 = vpop.permute.xlu0 %3344
      %3346 = vrot.lane.b32.xlu0 %v3332, 112
      %v3347 = vpop.permute.xlu0 %3346
      %3348 = vrot.lane.b32.xlu0 %v3333, 112
      %v3349 = vpop.permute.xlu0 %3348
      %3358 = vst.msk [vmem:[#allocation2 + $0x8] sm:$0xff] %vm1769, %v3335
      %3359 = vst.msk [vmem:[#allocation2 + $0x18] sm:$0xff] %vm1769, %v3337
      %3360 = vst.msk [vmem:[#allocation2 + $0x28] sm:$0xff] %vm1769, %v3339
      %3361 = vst.msk [vmem:[#allocation2 + $0x38] sm:$0xff] %vm1769, %v3341
      %3362 = vst.msk [vmem:[#allocation2 + $0x48] sm:$0xff] %vm1769, %v3343
      %3363 = vst.msk [vmem:[#allocation2 + $0x58] sm:$0xff] %vm1769, %v3345
      %3364 = vst.msk [vmem:[#allocation2 + $0x68] sm:$0xff] %vm1769, %v3347
      %3365 = vst.msk [vmem:[#allocation2 + $0x78] sm:$0xff] %vm1769, %v3349
      %v3366 = vld [vmem:[#allocation2] sm:$0xff]
      %v3367 = vld [vmem:[#allocation2 + $0x8] sm:$0xff]
      %v3368 = vld [vmem:[#allocation2 + $0x10] sm:$0xff]
      %v3369 = vld [vmem:[#allocation2 + $0x18] sm:$0xff]
      %v3370 = vld [vmem:[#allocation2 + $0x20] sm:$0xff]
      %v3371 = vld [vmem:[#allocation2 + $0x28] sm:$0xff]
      %v3372 = vld [vmem:[#allocation2 + $0x30] sm:$0xff]
      %v3373 = vld [vmem:[#allocation2 + $0x38] sm:$0xff]
      %v3374 = vld [vmem:[#allocation2 + $0x40] sm:$0xff]
      %v3375 = vld [vmem:[#allocation2 + $0x48] sm:$0xff]
      %v3376 = vld [vmem:[#allocation2 + $0x50] sm:$0xff]
      %v3377 = vld [vmem:[#allocation2 + $0x58] sm:$0xff]
      %v3378 = vld [vmem:[#allocation2 + $0x60] sm:$0xff]
      %v3379 = vld [vmem:[#allocation2 + $0x68] sm:$0xff]
      %v3380 = vld [vmem:[#allocation2 + $0x70] sm:$0xff]
      %v3381 = vld [vmem:[#allocation2 + $0x78] sm:$0xff]
      %v3382 = vld [vmem:[%s1] sm:$0xf]
      %v3383 = vld [vmem:[%s1 + $0x4] sm:$0xf]
      %v3384 = vld [vmem:[%s1 + $0x8] sm:$0xf]
      %v3385 = vld [vmem:[%s1 + $0xc] sm:$0xf]
      %v3386 = vld [vmem:[%s1 + $0x10] sm:$0xf]
      %v3387 = vld [vmem:[%s1 + $0x14] sm:$0xf]
      %v3388 = vld [vmem:[%s1 + $0x18] sm:$0xf]
      %v3389 = vld [vmem:[%s1 + $0x1c] sm:$0xf]
      %v3390 = vld [vmem:[%s1 + $0x20] sm:$0xf]
      %v3391 = vld [vmem:[%s1 + $0x24] sm:$0xf]
      %v3392 = vld [vmem:[%s1 + $0x28] sm:$0xf]
      %v3393 = vld [vmem:[%s1 + $0x2c] sm:$0xf]
      %v3394 = vld [vmem:[%s1 + $0x30] sm:$0xf]
      %v3395 = vld [vmem:[%s1 + $0x34] sm:$0xf]
      %v3396 = vld [vmem:[%s1 + $0x38] sm:$0xf]
      %v3397 = vld [vmem:[%s1 + $0x3c] sm:$0xf]
      %v3398 = vld [vmem:[%s1 + $0x40] sm:$0xf]
      %v3399 = vld [vmem:[%s1 + $0x44] sm:$0xf]
      %v3400 = vld [vmem:[%s1 + $0x48] sm:$0xf]
      %v3401 = vld [vmem:[%s1 + $0x4c] sm:$0xf]
      %v3402 = vld [vmem:[%s1 + $0x50] sm:$0xf]
      %v3403 = vld [vmem:[%s1 + $0x54] sm:$0xf]
      %v3404 = vld [vmem:[%s1 + $0x58] sm:$0xf]
      %v3405 = vld [vmem:[%s1 + $0x5c] sm:$0xf]
      %v3406 = vld [vmem:[%s1 + $0x60] sm:$0xf]
      %v3407 = vld [vmem:[%s1 + $0x64] sm:$0xf]
      %v3408 = vld [vmem:[%s1 + $0x68] sm:$0xf]
      %v3409 = vld [vmem:[%s1 + $0x6c] sm:$0xf]
      %v3410 = vld [vmem:[%s1 + $0x70] sm:$0xf]
      %v3411 = vld [vmem:[%s1 + $0x74] sm:$0xf]
      %v3412 = vld [vmem:[%s1 + $0x78] sm:$0xf]
      %v3413 = vld [vmem:[%s1 + $0x7c] sm:$0xf]
      %v3414 = vld [vmem:[%s2] sm:$0x1]
      %v3416 = vlaneseq
      %v3417 = vshrl.u32 %v3416, 7
      %v3418 = vsub.s32 0, %v3417
      %v3419 = vrot.slane %v3414, %v3418
      %v3453 = vunpack.c.l.b16 %v3382
      %v3454 = vunpack.c.l.b16 %v3383
      %v3455 = vunpack.c.l.b16 %v3384
      %v3456 = vunpack.c.l.b16 %v3385
      %v3457 = vunpack.c.l.b16 %v3386
      %v3458 = vunpack.c.l.b16 %v3387
      %v3459 = vunpack.c.l.b16 %v3388
      %v3460 = vunpack.c.l.b16 %v3389
      %v3461 = vunpack.c.l.b16 %v3390
      %v3462 = vunpack.c.l.b16 %v3391
      %v3463 = vunpack.c.l.b16 %v3392
      %v3464 = vunpack.c.l.b16 %v3393
      %v3465 = vunpack.c.l.b16 %v3394
      %v3466 = vunpack.c.l.b16 %v3395
      %v3467 = vunpack.c.l.b16 %v3396
      %v3468 = vunpack.c.l.b16 %v3397
      %v3469 = vunpack.c.l.b16 %v3398
      %v3470 = vunpack.c.l.b16 %v3399
      %v3471 = vunpack.c.l.b16 %v3400
      %v3472 = vunpack.c.l.b16 %v3401
      %v3473 = vunpack.c.l.b16 %v3402
      %v3474 = vunpack.c.l.b16 %v3403
      %v3475 = vunpack.c.l.b16 %v3404
      %v3476 = vunpack.c.l.b16 %v3405
      %v3477 = vunpack.c.l.b16 %v3406
      %v3478 = vunpack.c.l.b16 %v3407
      %v3479 = vunpack.c.l.b16 %v3408
      %v3480 = vunpack.c.l.b16 %v3409
      %v3481 = vunpack.c.l.b16 %v3410
      %v3482 = vunpack.c.l.b16 %v3411
      %v3483 = vunpack.c.l.b16 %v3412
      %v3484 = vunpack.c.l.b16 %v3413
      %v3485 = vpack.c.b16 %v3454, %v3453
      %v3486 = vpack.c.b16 %v3456, %v3455
      %v3487 = vpack.c.b16 %v3458, %v3457
      %v3488 = vpack.c.b16 %v3460, %v3459
      %v3489 = vpack.c.b16 %v3462, %v3461
      %v3490 = vpack.c.b16 %v3464, %v3463
      %v3491 = vpack.c.b16 %v3466, %v3465
      %v3492 = vpack.c.b16 %v3468, %v3467
      %v3493 = vpack.c.b16 %v3470, %v3469
      %v3494 = vpack.c.b16 %v3472, %v3471
      %v3495 = vpack.c.b16 %v3474, %v3473
      %v3496 = vpack.c.b16 %v3476, %v3475
      %v3497 = vpack.c.b16 %v3478, %v3477
      %v3498 = vpack.c.b16 %v3480, %v3479
      %v3499 = vpack.c.b16 %v3482, %v3481
      %v3500 = vpack.c.b16 %v3484, %v3483
      %3517 = vmatprep.subr.bf16.mxu0 0
      %3518 = vmatpush1.bf16.msra.mxu0 %v3485
      %3519 = vmatprep.subr.bf16.mxu0 0
      %3520 = vmatpush1.bf16.msra.mxu0 %v3486
      %3521 = vmatprep.subr.bf16.mxu0 0
      %3522 = vmatpush1.bf16.msra.mxu0 %v3487
      %3523 = vmatprep.subr.bf16.mxu0 0
      %3524 = vmatpush1.bf16.msra.mxu0 %v3488
      %3525 = vmatprep.subr.bf16.mxu0 0
      %3526 = vmatpush1.bf16.msra.mxu0 %v3489
      %3527 = vmatprep.subr.bf16.mxu0 0
      %3528 = vmatpush1.bf16.msra.mxu0 %v3490
      %3529 = vmatprep.subr.bf16.mxu0 0
      %3530 = vmatpush1.bf16.msra.mxu0 %v3491
      %3531 = vmatprep.subr.bf16.mxu0 0
      %3532 = vmatpush1.bf16.msra.mxu0 %v3492
      %3533 = vmatprep.subr.bf16.mxu0 0
      %3534 = vmatpush1.bf16.msra.mxu0 %v3493
      %3535 = vmatprep.subr.bf16.mxu0 0
      %3536 = vmatpush1.bf16.msra.mxu0 %v3494
      %3537 = vmatprep.subr.bf16.mxu0 0
      %3538 = vmatpush1.bf16.msra.mxu0 %v3495
      %3539 = vmatprep.subr.bf16.mxu0 0
      %3540 = vmatpush1.bf16.msra.mxu0 %v3496
      %3541 = vmatprep.subr.bf16.mxu0 0
      %3542 = vmatpush1.bf16.msra.mxu0 %v3497
      %3543 = vmatprep.subr.bf16.mxu0 0
      %3544 = vmatpush1.bf16.msra.mxu0 %v3498
      %3545 = vmatprep.subr.bf16.mxu0 0
      %3546 = vmatpush1.bf16.msra.mxu0 %v3499
      %3547 = vmatprep.subr.bf16.mxu0 0
      %3548 = vmatpush1.bf16.msra.mxu0 %v3500
      %3549 = vmatprep.mubr.bf16.mxu0 %v3367
      %3550 = vmatmul.mubr.bf16.gmra.mrb[0].mxu0 %v3366
      %v3551 = vpop.f32.mrb[0].mxu0
      %v3552 = vadd.f32 %v3419, %v3551
      %v3553 = vpop.f32.mrb[0].mxu0
      %v3554 = vpop.f32.mrb[0].mxu0
      %v3555 = vadd.f32 %v3419, %v3554
      %v3556 = vpop.f32.mrb[0].mxu0
      %3557 = vmatprep.mubr.bf16.mxu0 %v3369
      %3558 = vmatmul.mubr.bf16.gmra.mrb[0].mxu0 %v3368
      %v3559 = vpop.f32.mrb[0].mxu0
      %v3560 = vadd.f32 %v3419, %v3559
      %v3561 = vpop.f32.mrb[0].mxu0
      %v3562 = vpop.f32.mrb[0].mxu0
      %v3563 = vadd.f32 %v3419, %v3562
      %v3564 = vpop.f32.mrb[0].mxu0
      %3565 = vmatprep.mubr.bf16.mxu0 %v3371
      %3566 = vmatmul.mubr.bf16.gmra.mrb[0].mxu0 %v3370
      %v3567 = vpop.f32.mrb[0].mxu0
      %v3568 = vadd.f32 %v3419, %v3567
      %v3569 = vpop.f32.mrb[0].mxu0
      %v3570 = vpop.f32.mrb[0].mxu0
      %v3571 = vadd.f32 %v3419, %v3570
      %v3572 = vpop.f32.mrb[0].mxu0
      %3573 = vmatprep.mubr.bf16.mxu0 %v3373
      %3574 = vmatmul.mubr.bf16.gmra.mrb[0].mxu0 %v3372
      %v3575 = vpop.f32.mrb[0].mxu0
      %v3576 = vadd.f32 %v3419, %v3575
      %v3577 = vpop.f32.mrb[0].mxu0
      %v3578 = vpop.f32.mrb[0].mxu0
      %v3579 = vadd.f32 %v3419, %v3578
      %v3580 = vpop.f32.mrb[0].mxu0
      %3581 = vmatprep.mubr.bf16.mxu0 %v3375
      %3582 = vmatmul.mubr.bf16.gmra.mrb[0].mxu0 %v3374
      %v3583 = vpop.f32.mrb[0].mxu0
      %v3584 = vadd.f32 %v3419, %v3583
      %v3585 = vpop.f32.mrb[0].mxu0
      %v3586 = vpop.f32.mrb[0].mxu0
      %v3587 = vadd.f32 %v3419, %v3586
      %v3588 = vpop.f32.mrb[0].mxu0
      %3589 = vmatprep.mubr.bf16.mxu0 %v3377
      %3590 = vmatmul.mubr.bf16.gmra.mrb[0].mxu0 %v3376
      %v3591 = vpop.f32.mrb[0].mxu0
      %v3592 = vadd.f32 %v3419, %v3591
      %v3593 = vpop.f32.mrb[0].mxu0
      %v3594 = vpop.f32.mrb[0].mxu0
      %v3595 = vadd.f32 %v3419, %v3594
      %v3596 = vpop.f32.mrb[0].mxu0
      %3597 = vmatprep.mubr.bf16.mxu0 %v3379
      %3598 = vmatmul.mubr.bf16.gmra.mrb[0].mxu0 %v3378
      %v3599 = vpop.f32.mrb[0].mxu0
      %v3600 = vadd.f32 %v3419, %v3599
      %v3601 = vpop.f32.mrb[0].mxu0
      %v3602 = vpop.f32.mrb[0].mxu0
      %v3603 = vadd.f32 %v3419, %v3602
      %v3604 = vpop.f32.mrb[0].mxu0
      %3605 = vmatprep.mubr.bf16.mxu0 %v3381
      %3606 = vmatmul.mubr.bf16.gmra.mrb[0].mxu0 %v3380
      %v3607 = vpop.f32.mrb[0].mxu0
      %v3608 = vadd.f32 %v3419, %v3607
      %v3609 = vpop.f32.mrb[0].mxu0
      %v3610 = vpop.f32.mrb[0].mxu0
      %v3611 = vadd.f32 %v3419, %v3610
      %v3612 = vpop.f32.mrb[0].mxu0
      %3613 = vdwg.mxu0
      %v3614 = vmax.f32 %v3552, 0.0
      %v3615 = vmax.f32 %v3555, 0.0
      %v3616 = vmax.f32 %v3560, 0.0
      %v3617 = vmax.f32 %v3563, 0.0
      %v3618 = vmax.f32 %v3568, 0.0
      %v3619 = vmax.f32 %v3571, 0.0
      %v3620 = vmax.f32 %v3576, 0.0
      %v3621 = vmax.f32 %v3579, 0.0
      %v3622 = vmax.f32 %v3584, 0.0
      %v3623 = vmax.f32 %v3587, 0.0
      %v3624 = vmax.f32 %v3592, 0.0
      %v3625 = vmax.f32 %v3595, 0.0
      %v3626 = vmax.f32 %v3600, 0.0
      %v3627 = vmax.f32 %v3603, 0.0
      %v3628 = vmax.f32 %v3608, 0.0
      %v3629 = vmax.f32 %v3611, 0.0
      %v3630 = vpack.c.bf16 %v3615, %v3614
      %v3631 = vpack.c.bf16 %v3617, %v3616
      %v3632 = vpack.c.bf16 %v3619, %v3618
      %v3633 = vpack.c.bf16 %v3621, %v3620
      %v3634 = vpack.c.bf16 %v3623, %v3622
      %v3635 = vpack.c.bf16 %v3625, %v3624
      %v3636 = vpack.c.bf16 %v3627, %v3626
      %v3637 = vpack.c.bf16 %v3629, %v3628
      %v3646 = vunpack.c.l.b16 %v3630
      %v3647 = vunpack.c.h.b16 %v3630
      %v3648 = vunpack.c.l.b16 %v3631
      %v3649 = vunpack.c.h.b16 %v3631
      %v3650 = vunpack.c.l.b16 %v3632
      %v3651 = vunpack.c.h.b16 %v3632
      %v3652 = vunpack.c.l.b16 %v3633
      %v3653 = vunpack.c.h.b16 %v3633
      %v3654 = vunpack.c.l.b16 %v3634
      %v3655 = vunpack.c.h.b16 %v3634
      %v3656 = vunpack.c.l.b16 %v3635
      %v3657 = vunpack.c.h.b16 %v3635
      %v3658 = vunpack.c.l.b16 %v3636
      %v3659 = vunpack.c.h.b16 %v3636
      %v3660 = vunpack.c.l.b16 %v3637
      %v3661 = vunpack.c.h.b16 %v3637
      %v3662 = vpack.c.b16 %v3646, %v3646
      %v3663 = vpack.c.b16 %v3647, %v3647
      %v3664 = vpack.c.b16 %v3648, %v3648
      %v3665 = vpack.c.b16 %v3649, %v3649
      %v3666 = vpack.c.b16 %v3650, %v3650
      %v3667 = vpack.c.b16 %v3651, %v3651
      %v3668 = vpack.c.b16 %v3652, %v3652
      %v3669 = vpack.c.b16 %v3653, %v3653
      %v3670 = vpack.c.b16 %v3654, %v3654
      %v3671 = vpack.c.b16 %v3655, %v3655
      %v3672 = vpack.c.b16 %v3656, %v3656
      %v3673 = vpack.c.b16 %v3657, %v3657
      %v3674 = vpack.c.b16 %v3658, %v3658
      %v3675 = vpack.c.b16 %v3659, %v3659
      %v3676 = vpack.c.b16 %v3660, %v3660
      %v3677 = vpack.c.b16 %v3661, %v3661
      %vm3694 = vcmask 519168
      %3695 = vst.msk [vmem:[%s177] sm:$0xf] %vm3694, %v3662
      %3696 = vst.msk [vmem:[%s177 + $0x4] sm:$0xf] %vm3694, %v3663
      %3697 = vst.msk [vmem:[%s177 + $0x8] sm:$0xf] %vm3694, %v3664
      %3698 = vst.msk [vmem:[%s177 + $0xc] sm:$0xf] %vm3694, %v3665
      %3699 = vst.msk [vmem:[%s177 + $0x10] sm:$0xf] %vm3694, %v3666
      %3700 = vst.msk [vmem:[%s177 + $0x14] sm:$0xf] %vm3694, %v3667
      %3701 = vst.msk [vmem:[%s177 + $0x18] sm:$0xf] %vm3694, %v3668
      %3702 = vst.msk [vmem:[%s177 + $0x1c] sm:$0xf] %vm3694, %v3669
      %3703 = vst.msk [vmem:[%s177 + $0x20] sm:$0xf] %vm3694, %v3670
      %3704 = vst.msk [vmem:[%s177 + $0x24] sm:$0xf] %vm3694, %v3671
      %3705 = vst.msk [vmem:[%s177 + $0x28] sm:$0xf] %vm3694, %v3672
      %3706 = vst.msk [vmem:[%s177 + $0x2c] sm:$0xf] %vm3694, %v3673
      %3707 = vst.msk [vmem:[%s177 + $0x30] sm:$0xf] %vm3694, %v3674
      %3708 = vst.msk [vmem:[%s177 + $0x34] sm:$0xf] %vm3694, %v3675
      %3709 = vst.msk [vmem:[%s177 + $0x38] sm:$0xf] %vm3694, %v3676
      %3710 = vst.msk [vmem:[%s177 + $0x3c] sm:$0xf] %vm3694, %v3677
      %s3711 = smul.u32 2, %s14
      %p3712 = scmp.lt.s32.totalorder %s3711, 3
      %s3713 = scalar_select %p3712, %s3711, 3
      %s3714 = smul.addr %s3713, 8
      %s3715 = smul.addr %s3714, 4
      %s3716 = scalar_lea.vmem %s3, %s3715
      // Predicated region
      $region33: #{dqn_forward.4} parent=31 // pred_check
        %p3717 = pneg %p100
      $region34: #{dqn_forward.4} parent=31 // pred_check_branch
        %3719 = sbr.rel (%p3717) target = $region36
      $region35: #{dqn_forward.4} parent=31 // pred_region
        %s3720 = smul.u32 2, %s14
      $region36: #{dqn_forward.4} parent=31 // pred_fallthru
        _
    $region32: #{dqn_forward.4} parent=5 // pred_fallthru
      _
    %p3721 = scmp.le.s32.totalorder 2, %s9
    // Predicated region
    $region37: #{dqn_forward.4} parent=5 // pred_check
      %p3722 = pneg %p3721
    $region38: #{dqn_forward.4} parent=5 // pred_check_branch
      %3724 = sbr.rel (%p3722) target = $region40
    $region39: #{dqn_forward.4} parent=5 // pred_region
      %s3725 = ssub.s32 %s9, 2
      // Predicated region
      $region41: #{dqn_forward.4} parent=39 // pred_check
        %p3726 = pneg %p106
      $region42: #{dqn_forward.4} parent=39 // pred_check_branch
        %3728 = sbr.rel (%p3726) target = $region44
      $region43: #{dqn_forward.4} parent=39 // pred_region
        %s3729 = smul.u32 2, %s15
        %p3730 = scmp.lt.s32.totalorder %s3729, 3
        %s3731 = scalar_select %p3730, %s3729, 3
        %s3732 = smul.addr %s3731, 8
        %s3733 = smul.addr %s3732, 4
        %s3734 = scalar_lea.vmem %s3, %s3733
      $region44: #{dqn_forward.4} parent=39 // pred_fallthru
        _
    $region40: #{dqn_forward.4} parent=5 // pred_fallthru
      _
  $region6: #{dqn_forward.4} parent=0 // loop_footer
    %s13 = sadd.s32 1, %s9
  $region7: #{dqn_forward.4} parent=0 // loop_footer_branch
    %8 = sbr.rel target = $region3
  $region8: #{dqn_forward.4} parent=0 // loop_exit
    _

// kernel: dqn_forward.5
$region0: #{dqn_forward.5}
  #allocation0 [shape = 'u32[]', space=smem, size = 0x4, offset = 0x4, fixed_abs, tag = 'smem constant byte address 0x4 - core index']
  #allocation1 [shape = 'u32[144,128]{1,0:T(1,128)}', space=vmem, size = 0x12000, scoped, tag = 'internal scratch']
  #allocation2 [shape = 'bf16[48,1024]{1,0:T(16,128)(2,1)}', space=vmem, size = 0x18000, scoped, tag = 'scratch operand']
  %s0 = inlined_call_operand.vmem [shape: bf16[4,4,2,9,128], index: 0, kind: input, shape index: {}]
  %s1 = inlined_call_operand.vmem [shape: bf16[1024,64], index: 1, kind: input, shape index: {}]
  %s2 = inlined_call_operand.vmem [shape: f32[1,64], index: 2, kind: input, shape index: {}]
  %s3 = inlined_call_operand.vmem [shape: bf16[4,3,8,64], index: 3, kind: output, shape index: {}]
  %s4 = sld [smem:[#allocation0]]
  $region45: #{dqn_forward.5} parent=0
    _
  %s6 = ssub.s32 1, %s4
  %s7 = scalar_select 0, %s6, %s4
  loop: start=0, step=1, limit=4
  $region2: #{dqn_forward.5} parent=0 // loop_pre_header
    _
  $region3: #{dqn_forward.5} parent=0 // loop_header
    %s9 = sphi 0, %s13
    %p10 = scmp.ge.s32.totalorder %s9, 4
    %s19 = sphi 0, %s21
    %s22 = sphi 0, %s19
    %s23 = sphi 0, %s22
    %s39 = sphi 0, %s23
    %s43 = sphi 0, %s43
    %s45 = sphi 0, %s43
    %s46 = sphi 0, %s45
    %s60 = sphi 0, %s46
    %s64 = sphi 0, %s64
    %s66 = sphi 0, %s64
    %s67 = sphi 0, %s66
    %s81 = sphi 0, %s67
    %s87 = sphi 0, %s89
    %s90 = sphi 0, %s87
    %s91 = sphi 0, %s90
    %s107 = sphi 0, %s91
  $region4: #{dqn_forward.5} parent=0 // loop_header_branch
    %12 = sbr.rel (%p10) target = $region8
  $region5: #{dqn_forward.5} parent=0 // loop_body
    %s14 = ssub.s32 %s9, 1
    %s15 = ssub.s32 %s9, 2
    %s16 = sadd.s32 %s9, 1
    %s17 = ssub.s32 %s9, %s16
    %p18 = scmp.eq.s32.totalorder %s17, 0
    %s20 = sadd.s32 %s19, 1
    %s21 = scalar_select %p18, %s19, %s20
    %p24 = pneg %p18
    %p25 = scmp.eq.s32.totalorder %s9, 1
    %p26 = por %p24, %p25
    %p27 = scmp.ne.s32.totalorder %s19, %s22
    %p28 = scmp.eq.s32.totalorder %s9, 0
    %p29 = por %p27, %p28
    %p30 = scmp.ne.s32.totalorder %s19, %s22
    %p31 = scmp.eq.s32.totalorder %s14, 1
    %p32 = por %p30, %p31
    %p33 = scmp.ne.s32.totalorder %s22, %s23
    %p34 = scmp.eq.s32.totalorder %s14, 0
    %p35 = por %p33, %p34
    %p36 = scmp.ne.s32.totalorder %s22, %s23
    %p37 = scmp.eq.s32.totalorder %s15, 1
    %p38 = por %p36, %p37
    %p40 = scmp.ne.s32.totalorder %s23, %s39
    %p41 = scmp.eq.s32.totalorder %s15, 0
    %p42 = por %p40, %p41
    %s44 = sadd.s32 %s43, 1
    %p47 = scmp.eq.s32.totalorder %s9, 1
    %p48 = scmp.ne.s32.totalorder %s43, %s45
    %p49 = scmp.eq.s32.totalorder %s9, 0
    %p50 = por %p48, %p49
    %p51 = scmp.ne.s32.totalorder %s43, %s45
    %p52 = scmp.eq.s32.totalorder %s14, 1
    %p53 = por %p51, %p52
    %p54 = scmp.ne.s32.totalorder %s45, %s46
    %p55 = scmp.eq.s32.totalorder %s14, 0
    %p56 = por %p54, %p55
    %p57 = scmp.ne.s32.totalorder %s45, %s46
    %p58 = scmp.eq.s32.totalorder %s15, 1
    %p59 = por %p57, %p58
    %p61 = scmp.ne.s32.totalorder %s46, %s60
    %p62 = scmp.eq.s32.totalorder %s15, 0
    %p63 = por %p61, %p62
    %s65 = sadd.s32 %s64, 1
    %p68 = scmp.eq.s32.totalorder %s9, 1
    %p69 = scmp.ne.s32.totalorder %s64, %s66
    %p70 = scmp.eq.s32.totalorder %s9, 0
    %p71 = por %p69, %p70
    %p72 = scmp.ne.s32.totalorder %s64, %s66
    %p73 = scmp.eq.s32.totalorder %s14, 1
    %p74 = por %p72, %p73
    %p75 = scmp.ne.s32.totalorder %s66, %s67
    %p76 = scmp.eq.s32.totalorder %s14, 0
    %p77 = por %p75, %p76
    %p78 = scmp.ne.s32.totalorder %s66, %s67
    %p79 = scmp.eq.s32.totalorder %s15, 1
    %p80 = por %p78, %p79
    %p82 = scmp.ne.s32.totalorder %s67, %s81
    %p83 = scmp.eq.s32.totalorder %s15, 0
    %p84 = por %p82, %p83
    %s85 = ssub.s32 %s9, %s16
    %p86 = scmp.eq.s32.totalorder %s85, 0
    %s88 = sadd.s32 %s87, 1
    %s89 = scalar_select %p86, %s87, %s88
    %p92 = pneg %p86
    %p93 = scmp.eq.s32.totalorder %s9, 1
    %p94 = por %p92, %p93
    %p95 = scmp.ne.s32.totalorder %s87, %s90
    %p96 = scmp.eq.s32.totalorder %s9, 0
    %p97 = por %p95, %p96
    %p98 = scmp.ne.s32.totalorder %s87, %s90
    %p99 = scmp.eq.s32.totalorder %s14, 1
    %p100 = por %p98, %p99
    %p101 = scmp.ne.s32.totalorder %s90, %s91
    %p102 = scmp.eq.s32.totalorder %s14, 0
    %p103 = por %p101, %p102
    %p104 = scmp.ne.s32.totalorder %s90, %s91
    %p105 = scmp.eq.s32.totalorder %s15, 1
    %p106 = por %p104, %p105
    %p108 = scmp.ne.s32.totalorder %s91, %s107
    %p109 = scmp.eq.s32.totalorder %s15, 0
    %p110 = por %p108, %p109
    %p111 = scmp.le.s32.totalorder 1, %s9
    %p112 = scmp.lt.s32.totalorder %s9, 3
    %p113 = pnand %p111, %p112
    %p114 = pneg %p113
    // Predicated region
    $region9: #{dqn_forward.5} parent=5 // pred_check
      _
    $region10: #{dqn_forward.5} parent=5 // pred_check_branch
      %116 = sbr.rel (%p113) target = $region12
    $region11: #{dqn_forward.5} parent=5 // pred_region
      %s117 = ssub.s32 %s9, 1
      // Predicated region
      $region13: #{dqn_forward.5} parent=11 // pred_check
        %p118 = pneg %p56
      $region14: #{dqn_forward.5} parent=11 // pred_check_branch
        %120 = sbr.rel (%p118) target = $region16
      $region15: #{dqn_forward.5} parent=11 // pred_region
        _
      $region16: #{dqn_forward.5} parent=11 // pred_fallthru
        _
      // Predicated region
      $region17: #{dqn_forward.5} parent=11 // pred_check
        %p121 = pneg %p77
      $region18: #{dqn_forward.5} parent=11 // pred_check_branch
        %123 = sbr.rel (%p121) target = $region20
      $region19: #{dqn_forward.5} parent=11 // pred_region
        _
      $region20: #{dqn_forward.5} parent=11 // pred_fallthru
        _
    $region12: #{dqn_forward.5} parent=5 // pred_fallthru
      _
    %p124 = scmp.lt.s32.totalorder %s9, 2
    // Predicated region
    $region21: #{dqn_forward.5} parent=5 // pred_check
      %p125 = pneg %p124
    $region22: #{dqn_forward.5} parent=5 // pred_check_branch
      %127 = sbr.rel (%p125) target = $region24
    $region23: #{dqn_forward.5} parent=5 // pred_region
      // Predicated region
      $region25: #{dqn_forward.5} parent=23 // pred_check
        %p128 = pneg %p29
      $region26: #{dqn_forward.5} parent=23 // pred_check_branch
        %130 = sbr.rel (%p128) target = $region28
      $region27: #{dqn_forward.5} parent=23 // pred_region
        %s131 = smul.u32 2, %s9
        %p132 = scmp.lt.s32.totalorder %s131, 3
        %s133 = scalar_select %p132, %s131, 3
        %s134 = smul.addr %s133, 16
        %s135 = smul.addr %s134, 4
        %s136 = scalar_lea.vmem %s0, %s135
        %s137 = smul.u32 2, %s9
      $region28: #{dqn_forward.5} parent=23 // pred_fallthru
        _
    $region24: #{dqn_forward.5} parent=5 // pred_fallthru
      _
    %p138 = scmp.le.s32.totalorder 1, %s9
    %p139 = scmp.lt.s32.totalorder %s9, 3
    %p140 = pnand %p138, %p139
    %p141 = pneg %p140
    // Predicated region
    $region29: #{dqn_forward.5} parent=5 // pred_check
      _
    $region30: #{dqn_forward.5} parent=5 // pred_check_branch
      %143 = sbr.rel (%p140) target = $region32
    $region31: #{dqn_forward.5} parent=5 // pred_region
      %s144 = ssub.s32 %s9, 1
      %s145 = smul.u32 2, %s14
      %p146 = scmp.lt.s32.totalorder %s145, 3
      %s147 = scalar_select %p146, %s145, 3
      %s148 = smul.addr %s147, 16
      %s149 = smul.addr %s148, 4
      %s150 = scalar_lea.vmem %s0, %s149
      %p151 = pneg %p35
      %p152 = pneg %p32
      %p153 = pneg %p56
      %p154 = pneg %p53
      %p155 = pneg %p77
      %p156 = pneg %p74
      %p157 = pneg %p103
      %p158 = pneg %p100
      %s159 = smul.u32 2, %s14
      %p160 = scmp.lt.s32.totalorder %s159, 3
      %s161 = scalar_select %p160, %s159, 3
      %s162 = smul.addr %s161, 3
      %s163 = smul.addr %s162, 4
      %s164 = scalar_lea.vmem %s3, %s163
      %s165 = smul.u32 2, %s14
      %p166 = scmp.lt.s32.totalorder %s165, 3
      %s167 = scalar_select %p166, %s165, 3
      %s168 = smul.addr %s167, 16
      %s169 = smul.addr %s168, 4
      %s170 = scalar_lea.vmem %s0, %s169
      %s171 = smul.u32 2, %s14
      %s172 = smul.u32 2, %s14
      %p173 = scmp.lt.s32.totalorder %s172, 3
      %s174 = scalar_select %p173, %s172, 3
      %s175 = smul.addr %s174, 3
      %s176 = smul.addr %s175, 4
      %s177 = scalar_lea.vmem %s3, %s176
      %s178 = smul.u32 2, %s14
      %v180 = vld [vmem:[%s170] sm:$0xf]
      %v181 = vld [vmem:[%s170 + $0x10] sm:$0xf]
      %v182 = vld [vmem:[%s170 + $0x20] sm:$0xf]
      %v183 = vld [vmem:[%s170 + $0x40] sm:$0xf]
      %v184 = vld [vmem:[%s170 + $0x50] sm:$0xf]
      %v185 = vld [vmem:[%s170 + $0x60] sm:$0xf]
      %v192 = vunpack.c.l.b16 %v180
      %v193 = vunpack.c.l.b16 %v181
      %v194 = vunpack.c.l.b16 %v182
      %v195 = vunpack.c.l.b16 %v183
      %v196 = vunpack.c.l.b16 %v184
      %v197 = vunpack.c.l.b16 %v185
      %v198 = vpack.c.b16 %v193, %v192
      %v199 = vpack.c.b16 %v195, %v194
      %v200 = vpack.c.b16 %v197, %v196
      %204 = vst [vmem:[#allocation2] sm:$0xff] %v198
      %205 = vst [vmem:[#allocation2 + $0x40] sm:$0xff] %v199
      %206 = vst [vmem:[#allocation2 + $0x80] sm:$0xff] %v200
      %v207 = vld [vmem:[%s170] sm:$0xf]
      %v208 = vld [vmem:[%s170 + $0x4] sm:$0x1]
      %v209 = vld [vmem:[%s170 + $0x10] sm:$0xf]
      %v210 = vld [vmem:[%s170 + $0x14] sm:$0x1]
      %v211 = vld [vmem:[%s170 + $0x20] sm:$0xf]
      %v212 = vld [vmem:[%s170 + $0x24] sm:$0x1]
      %v213 = vld [vmem:[%s170 + $0x40] sm:$0xf]
      %v214 = vld [vmem:[%s170 + $0x44] sm:$0x1]
      %v215 = vld [vmem:[%s170 + $0x50] sm:$0xf]
      %v216 = vld [vmem:[%s170 + $0x54] sm:$0x1]
      %v217 = vld [vmem:[%s170 + $0x60] sm:$0xf]
      %v218 = vld [vmem:[%s170 + $0x64] sm:$0x1]
      %vm219 = vsmask.f32 3328
      %vm220 = vsmask.f32 7440
      %vm221 = vmor %vm219, %vm220
      %v223 = vshrl.u32 %v207, 16
      %v225 = vrot.slane %v223, 4
      %v226 = vshll.u32 %v207, 16
      %v228 = vrot.slane %v226, 5
      %v229 = vor.u32 %v225, %v228
      %v230 = vrot.slane %v229, 4
      %v232 = vshll.u32 %v208, 16
      %v234 = vrot.slane %v232, 5
      %v235 = vsel %vm221, %v230, %v234
      %v237 = vshrl.u32 %v209, 16
      %v239 = vrot.slane %v237, 4
      %v240 = vshll.u32 %v209, 16
      %v242 = vrot.slane %v240, 5
      %v243 = vor.u32 %v239, %v242
      %v244 = vrot.slane %v243, 4
      %v246 = vshll.u32 %v210, 16
      %v248 = vrot.slane %v246, 5
      %v249 = vsel %vm221, %v244, %v248
      %v251 = vshrl.u32 %v211, 16
      %v253 = vrot.slane %v251, 4
      %v254 = vshll.u32 %v211, 16
      %v256 = vrot.slane %v254, 5
      %v257 = vor.u32 %v253, %v256
      %v258 = vrot.slane %v257, 4
      %v260 = vshll.u32 %v212, 16
      %v262 = vrot.slane %v260, 5
      %v263 = vsel %vm221, %v258, %v262
      %v265 = vshrl.u32 %v213, 16
      %v267 = vrot.slane %v265, 4
      %v268 = vshll.u32 %v213, 16
      %v270 = vrot.slane %v268, 5
      %v271 = vor.u32 %v267, %v270
      %v272 = vrot.slane %v271, 4
      %v274 = vshll.u32 %v214, 16
      %v276 = vrot.slane %v274, 5
      %v277 = vsel %vm221, %v272, %v276
      %v279 = vshrl.u32 %v215, 16
      %v281 = vrot.slane %v279, 4
      %v282 = vshll.u32 %v215, 16
      %v284 = vrot.slane %v282, 5
      %v285 = vor.u32 %v281, %v284
      %v286 = vrot.slane %v285, 4
      %v288 = vshll.u32 %v216, 16
      %v290 = vrot.slane %v288, 5
      %v291 = vsel %vm221, %v286, %v290
      %v293 = vshrl.u32 %v217, 16
      %v295 = vrot.slane %v293, 4
      %v296 = vshll.u32 %v217, 16
      %v298 = vrot.slane %v296, 5
      %v299 = vor.u32 %v295, %v298
      %v300 = vrot.slane %v299, 4
      %v302 = vshll.u32 %v218, 16
      %v304 = vrot.slane %v302, 5
      %v305 = vsel %vm221, %v300, %v304
      %v306 = vunpack.c.l.b16 %v235
      %v307 = vunpack.c.l.b16 %v249
      %v308 = vunpack.c.l.b16 %v263
      %v309 = vunpack.c.l.b16 %v277
      %v310 = vunpack.c.l.b16 %v291
      %v311 = vunpack.c.l.b16 %v305
      %v312 = vpack.c.b16 %v307, %v306
      %v313 = vpack.c.b16 %v309, %v308
      %v314 = vpack.c.b16 %v311, %v310
      %318 = vst [vmem:[#allocation2 + $0x8] sm:$0xff] %v312
      %319 = vst [vmem:[#allocation2 + $0x48] sm:$0xff] %v313
      %320 = vst [vmem:[#allocation2 + $0x88] sm:$0xff] %v314
      %s321 = scalar_lea.vmem %s170, 8
      %v322 = vld [vmem:[%s321] sm:$0xf]
      %v323 = vld [vmem:[%s321 + $0x10] sm:$0xf]
      %v324 = vld [vmem:[%s321 + $0x20] sm:$0xf]
      %v325 = vld [vmem:[%s321 + $0x40] sm:$0xf]
      %v326 = vld [vmem:[%s321 + $0x50] sm:$0xf]
      %v327 = vld [vmem:[%s321 + $0x60] sm:$0xf]
      %v334 = vunpack.c.l.b16 %v322
      %v335 = vunpack.c.l.b16 %v323
      %v336 = vunpack.c.l.b16 %v324
      %v337 = vunpack.c.l.b16 %v325
      %v338 = vunpack.c.l.b16 %v326
      %v339 = vunpack.c.l.b16 %v327
      %v340 = vpack.c.b16 %v335, %v334
      %v341 = vpack.c.b16 %v337, %v336
      %v342 = vpack.c.b16 %v339, %v338
      %346 = vst [vmem:[#allocation2 + $0x10] sm:$0xff] %v340
      %347 = vst [vmem:[#allocation2 + $0x50] sm:$0xff] %v341
      %348 = vst [vmem:[#allocation2 + $0x90] sm:$0xff] %v342
      %v349 = vld [vmem:[%s321] sm:$0xf]
      %v350 = vld [vmem:[%s321 + $0x4] sm:$0x1]
      %v351 = vld [vmem:[%s321 + $0x10] sm:$0xf]
      %v352 = vld [vmem:[%s321 + $0x14] sm:$0x1]
      %v353 = vld [vmem:[%s321 + $0x20] sm:$0xf]
      %v354 = vld [vmem:[%s321 + $0x24] sm:$0x1]
      %v355 = vld [vmem:[%s321 + $0x40] sm:$0xf]
      %v356 = vld [vmem:[%s321 + $0x44] sm:$0x1]
      %v357 = vld [vmem:[%s321 + $0x50] sm:$0xf]
      %v358 = vld [vmem:[%s321 + $0x54] sm:$0x1]
      %v359 = vld [vmem:[%s321 + $0x60] sm:$0xf]
      %v360 = vld [vmem:[%s321 + $0x64] sm:$0x1]
      %v362 = vshrl.u32 %v349, 16
      %v364 = vrot.slane %v362, 4
      %v365 = vshll.u32 %v349, 16
      %v367 = vrot.slane %v365, 5
      %v368 = vor.u32 %v364, %v367
      %v369 = vrot.slane %v368, 4
      %v371 = vshll.u32 %v350, 16
      %v373 = vrot.slane %v371, 5
      %v374 = vsel %vm221, %v369, %v373
      %v376 = vshrl.u32 %v351, 16
      %v378 = vrot.slane %v376, 4
      %v379 = vshll.u32 %v351, 16
      %v381 = vrot.slane %v379, 5
      %v382 = vor.u32 %v378, %v381
      %v383 = vrot.slane %v382, 4
      %v385 = vshll.u32 %v352, 16
      %v387 = vrot.slane %v385, 5
      %v388 = vsel %vm221, %v383, %v387
      %v390 = vshrl.u32 %v353, 16
      %v392 = vrot.slane %v390, 4
      %v393 = vshll.u32 %v353, 16
      %v395 = vrot.slane %v393, 5
      %v396 = vor.u32 %v392, %v395
      %v397 = vrot.slane %v396, 4
      %v399 = vshll.u32 %v354, 16
      %v401 = vrot.slane %v399, 5
      %v402 = vsel %vm221, %v397, %v401
      %v404 = vshrl.u32 %v355, 16
      %v406 = vrot.slane %v404, 4
      %v407 = vshll.u32 %v355, 16
      %v409 = vrot.slane %v407, 5
      %v410 = vor.u32 %v406, %v409
      %v411 = vrot.slane %v410, 4
      %v413 = vshll.u32 %v356, 16
      %v415 = vrot.slane %v413, 5
      %v416 = vsel %vm221, %v411, %v415
      %v418 = vshrl.u32 %v357, 16
      %v420 = vrot.slane %v418, 4
      %v421 = vshll.u32 %v357, 16
      %v423 = vrot.slane %v421, 5
      %v424 = vor.u32 %v420, %v423
      %v425 = vrot.slane %v424, 4
      %v427 = vshll.u32 %v358, 16
      %v429 = vrot.slane %v427, 5
      %v430 = vsel %vm221, %v425, %v429
      %v432 = vshrl.u32 %v359, 16
      %v434 = vrot.slane %v432, 4
      %v435 = vshll.u32 %v359, 16
      %v437 = vrot.slane %v435, 5
      %v438 = vor.u32 %v434, %v437
      %v439 = vrot.slane %v438, 4
      %v441 = vshll.u32 %v360, 16
      %v443 = vrot.slane %v441, 5
      %v444 = vsel %vm221, %v439, %v443
      %v445 = vunpack.c.l.b16 %v374
      %v446 = vunpack.c.l.b16 %v388
      %v447 = vunpack.c.l.b16 %v402
      %v448 = vunpack.c.l.b16 %v416
      %v449 = vunpack.c.l.b16 %v430
      %v450 = vunpack.c.l.b16 %v444
      %v451 = vpack.c.b16 %v446, %v445
      %v452 = vpack.c.b16 %v448, %v447
      %v453 = vpack.c.b16 %v450, %v449
      %457 = vst [vmem:[#allocation2 + $0x18] sm:$0xff] %v451
      %458 = vst [vmem:[#allocation2 + $0x58] sm:$0xff] %v452
      %459 = vst [vmem:[#allocation2 + $0x98] sm:$0xff] %v453
      %s460 = scalar_lea.vmem %s170, 16
      %v461 = vld [vmem:[%s460] sm:$0xf]
      %v462 = vld [vmem:[%s460 + $0x10] sm:$0xf]
      %v463 = vld [vmem:[%s460 + $0x20] sm:$0xf]
      %v464 = vld [vmem:[%s460 + $0x40] sm:$0xf]
      %v465 = vld [vmem:[%s460 + $0x50] sm:$0xf]
      %v466 = vld [vmem:[%s460 + $0x60] sm:$0xf]
      %v473 = vunpack.c.l.b16 %v461
      %v474 = vunpack.c.l.b16 %v462
      %v475 = vunpack.c.l.b16 %v463
      %v476 = vunpack.c.l.b16 %v464
      %v477 = vunpack.c.l.b16 %v465
      %v478 = vunpack.c.l.b16 %v466
      %v479 = vpack.c.b16 %v474, %v473
      %v480 = vpack.c.b16 %v476, %v475
      %v481 = vpack.c.b16 %v478, %v477
      %485 = vst [vmem:[#allocation2 + $0x20] sm:$0xff] %v479
      %486 = vst [vmem:[#allocation2 + $0x60] sm:$0xff] %v480
      %487 = vst [vmem:[#allocation2 + $0xa0] sm:$0xff] %v481
      %v488 = vld [vmem:[%s460] sm:$0xf]
      %v489 = vld [vmem:[%s460 + $0x4] sm:$0x1]
      %v490 = vld [vmem:[%s460 + $0x10] sm:$0xf]
      %v491 = vld [vmem:[%s460 + $0x14] sm:$0x1]
      %v492 = vld [vmem:[%s460 + $0x20] sm:$0xf]
      %v493 = vld [vmem:[%s460 + $0x24] sm:$0x1]
      %v494 = vld [vmem:[%s460 + $0x40] sm:$0xf]
      %v495 = vld [vmem:[%s460 + $0x44] sm:$0x1]
      %v496 = vld [vmem:[%s460 + $0x50] sm:$0xf]
      %v497 = vld [vmem:[%s460 + $0x54] sm:$0x1]
      %v498 = vld [vmem:[%s460 + $0x60] sm:$0xf]
      %v499 = vld [vmem:[%s460 + $0x64] sm:$0x1]
      %v501 = vshrl.u32 %v488, 16
      %v503 = vrot.slane %v501, 4
      %v504 = vshll.u32 %v488, 16
      %v506 = vrot.slane %v504, 5
      %v507 = vor.u32 %v503, %v506
      %v508 = vrot.slane %v507, 4
      %v510 = vshll.u32 %v489, 16
      %v512 = vrot.slane %v510, 5
      %v513 = vsel %vm221, %v508, %v512
      %v515 = vshrl.u32 %v490, 16
      %v517 = vrot.slane %v515, 4
      %v518 = vshll.u32 %v490, 16
      %v520 = vrot.slane %v518, 5
      %v521 = vor.u32 %v517, %v520
      %v522 = vrot.slane %v521, 4
      %v524 = vshll.u32 %v491, 16
      %v526 = vrot.slane %v524, 5
      %v527 = vsel %vm221, %v522, %v526
      %v529 = vshrl.u32 %v492, 16
      %v531 = vrot.slane %v529, 4
      %v532 = vshll.u32 %v492, 16
      %v534 = vrot.slane %v532, 5
      %v535 = vor.u32 %v531, %v534
      %v536 = vrot.slane %v535, 4
      %v538 = vshll.u32 %v493, 16
      %v540 = vrot.slane %v538, 5
      %v541 = vsel %vm221, %v536, %v540
      %v543 = vshrl.u32 %v494, 16
      %v545 = vrot.slane %v543, 4
      %v546 = vshll.u32 %v494, 16
      %v548 = vrot.slane %v546, 5
      %v549 = vor.u32 %v545, %v548
      %v550 = vrot.slane %v549, 4
      %v552 = vshll.u32 %v495, 16
      %v554 = vrot.slane %v552, 5
      %v555 = vsel %vm221, %v550, %v554
      %v557 = vshrl.u32 %v496, 16
      %v559 = vrot.slane %v557, 4
      %v560 = vshll.u32 %v496, 16
      %v562 = vrot.slane %v560, 5
      %v563 = vor.u32 %v559, %v562
      %v564 = vrot.slane %v563, 4
      %v566 = vshll.u32 %v497, 16
      %v568 = vrot.slane %v566, 5
      %v569 = vsel %vm221, %v564, %v568
      %v571 = vshrl.u32 %v498, 16
      %v573 = vrot.slane %v571, 4
      %v574 = vshll.u32 %v498, 16
      %v576 = vrot.slane %v574, 5
      %v577 = vor.u32 %v573, %v576
      %v578 = vrot.slane %v577, 4
      %v580 = vshll.u32 %v499, 16
      %v582 = vrot.slane %v580, 5
      %v583 = vsel %vm221, %v578, %v582
      %v584 = vunpack.c.l.b16 %v513
      %v585 = vunpack.c.l.b16 %v527
      %v586 = vunpack.c.l.b16 %v541
      %v587 = vunpack.c.l.b16 %v555
      %v588 = vunpack.c.l.b16 %v569
      %v589 = vunpack.c.l.b16 %v583
      %v590 = vpack.c.b16 %v585, %v584
      %v591 = vpack.c.b16 %v587, %v586
      %v592 = vpack.c.b16 %v589, %v588
      %596 = vst [vmem:[#allocation2 + $0x28] sm:$0xff] %v590
      %597 = vst [vmem:[#allocation2 + $0x68] sm:$0xff] %v591
      %598 = vst [vmem:[#allocation2 + $0xa8] sm:$0xff] %v592
      %s599 = scalar_lea.vmem %s170, 24
      %v600 = vld [vmem:[%s599] sm:$0xf]
      %v601 = vld [vmem:[%s599 + $0x10] sm:$0xf]
      %v602 = vld [vmem:[%s599 + $0x20] sm:$0xf]
      %v603 = vld [vmem:[%s599 + $0x40] sm:$0xf]
      %v604 = vld [vmem:[%s599 + $0x50] sm:$0xf]
      %v605 = vld [vmem:[%s599 + $0x60] sm:$0xf]
      %v612 = vunpack.c.l.b16 %v600
      %v613 = vunpack.c.l.b16 %v601
      %v614 = vunpack.c.l.b16 %v602
      %v615 = vunpack.c.l.b16 %v603
      %v616 = vunpack.c.l.b16 %v604
      %v617 = vunpack.c.l.b16 %v605
      %v618 = vpack.c.b16 %v613, %v612
      %v619 = vpack.c.b16 %v615, %v614
      %v620 = vpack.c.b16 %v617, %v616
      %624 = vst [vmem:[#allocation2 + $0x30] sm:$0xff] %v618
      %625 = vst [vmem:[#allocation2 + $0x70] sm:$0xff] %v619
      %626 = vst [vmem:[#allocation2 + $0xb0] sm:$0xff] %v620
      %v627 = vld [vmem:[%s599] sm:$0xf]
      %v628 = vld [vmem:[%s599 + $0x4] sm:$0x1]
      %v629 = vld [vmem:[%s599 + $0x10] sm:$0xf]
      %v630 = vld [vmem:[%s599 + $0x14] sm:$0x1]
      %v631 = vld [vmem:[%s599 + $0x20] sm:$0xf]
      %v632 = vld [vmem:[%s599 + $0x24] sm:$0x1]
      %v633 = vld [vmem:[%s599 + $0x40] sm:$0xf]
      %v634 = vld [vmem:[%s599 + $0x44] sm:$0x1]
      %v635 = vld [vmem:[%s599 + $0x50] sm:$0xf]
      %v636 = vld [vmem:[%s599 + $0x54] sm:$0x1]
      %v637 = vld [vmem:[%s599 + $0x60] sm:$0xf]
      %v638 = vld [vmem:[%s599 + $0x64] sm:$0x1]
      %v640 = vshrl.u32 %v627, 16
      %v642 = vrot.slane %v640, 4
      %v643 = vshll.u32 %v627, 16
      %v645 = vrot.slane %v643, 5
      %v646 = vor.u32 %v642, %v645
      %v647 = vrot.slane %v646, 4
      %v649 = vshll.u32 %v628, 16
      %v651 = vrot.slane %v649, 5
      %v652 = vsel %vm221, %v647, %v651
      %v654 = vshrl.u32 %v629, 16
      %v656 = vrot.slane %v654, 4
      %v657 = vshll.u32 %v629, 16
      %v659 = vrot.slane %v657, 5
      %v660 = vor.u32 %v656, %v659
      %v661 = vrot.slane %v660, 4
      %v663 = vshll.u32 %v630, 16
      %v665 = vrot.slane %v663, 5
      %v666 = vsel %vm221, %v661, %v665
      %v668 = vshrl.u32 %v631, 16
      %v670 = vrot.slane %v668, 4
      %v671 = vshll.u32 %v631, 16
      %v673 = vrot.slane %v671, 5
      %v674 = vor.u32 %v670, %v673
      %v675 = vrot.slane %v674, 4
      %v677 = vshll.u32 %v632, 16
      %v679 = vrot.slane %v677, 5
      %v680 = vsel %vm221, %v675, %v679
      %v682 = vshrl.u32 %v633, 16
      %v684 = vrot.slane %v682, 4
      %v685 = vshll.u32 %v633, 16
      %v687 = vrot.slane %v685, 5
      %v688 = vor.u32 %v684, %v687
      %v689 = vrot.slane %v688, 4
      %v691 = vshll.u32 %v634, 16
      %v693 = vrot.slane %v691, 5
      %v694 = vsel %vm221, %v689, %v693
      %v696 = vshrl.u32 %v635, 16
      %v698 = vrot.slane %v696, 4
      %v699 = vshll.u32 %v635, 16
      %v701 = vrot.slane %v699, 5
      %v702 = vor.u32 %v698, %v701
      %v703 = vrot.slane %v702, 4
      %v705 = vshll.u32 %v636, 16
      %v707 = vrot.slane %v705, 5
      %v708 = vsel %vm221, %v703, %v707
      %v710 = vshrl.u32 %v637, 16
      %v712 = vrot.slane %v710, 4
      %v713 = vshll.u32 %v637, 16
      %v715 = vrot.slane %v713, 5
      %v716 = vor.u32 %v712, %v715
      %v717 = vrot.slane %v716, 4
      %v719 = vshll.u32 %v638, 16
      %v721 = vrot.slane %v719, 5
      %v722 = vsel %vm221, %v717, %v721
      %v723 = vunpack.c.l.b16 %v652
      %v724 = vunpack.c.l.b16 %v666
      %v725 = vunpack.c.l.b16 %v680
      %v726 = vunpack.c.l.b16 %v694
      %v727 = vunpack.c.l.b16 %v708
      %v728 = vunpack.c.l.b16 %v722
      %v729 = vpack.c.b16 %v724, %v723
      %v730 = vpack.c.b16 %v726, %v725
      %v731 = vpack.c.b16 %v728, %v727
      %735 = vst [vmem:[#allocation2 + $0x38] sm:$0xff] %v729
      %736 = vst [vmem:[#allocation2 + $0x78] sm:$0xff] %v730
      %737 = vst [vmem:[#allocation2 + $0xb8] sm:$0xff] %v731
      %v738 = vld [vmem:[#allocation2] sm:$0xff]
      %v739 = vld [vmem:[#allocation2 + $0x8] sm:$0xff]
      %v740 = vld [vmem:[#allocation2 + $0x10] sm:$0xff]
      %v741 = vld [vmem:[#allocation2 + $0x18] sm:$0xff]
      %v742 = vld [vmem:[#allocation2 + $0x20] sm:$0xff]
      %v743 = vld [vmem:[#allocation2 + $0x28] sm:$0xff]
      %v744 = vld [vmem:[#allocation2 + $0x30] sm:$0xff]
      %v745 = vld [vmem:[#allocation2 + $0x38] sm:$0xff]
      %v746 = vld [vmem:[#allocation2 + $0x40] sm:$0xff]
      %v747 = vld [vmem:[#allocation2 + $0x48] sm:$0xff]
      %v748 = vld [vmem:[#allocation2 + $0x50] sm:$0xff]
      %v749 = vld [vmem:[#allocation2 + $0x58] sm:$0xff]
      %v750 = vld [vmem:[#allocation2 + $0x60] sm:$0xff]
      %v751 = vld [vmem:[#allocation2 + $0x68] sm:$0xff]
      %v752 = vld [vmem:[#allocation2 + $0x70] sm:$0xff]
      %v753 = vld [vmem:[#allocation2 + $0x78] sm:$0xff]
      %v754 = vld [vmem:[#allocation2 + $0x80] sm:$0xff]
      %v755 = vld [vmem:[#allocation2 + $0x88] sm:$0xff]
      %v756 = vld [vmem:[#allocation2 + $0x90] sm:$0xff]
      %v757 = vld [vmem:[#allocation2 + $0x98] sm:$0xff]
      %v758 = vld [vmem:[#allocation2 + $0xa0] sm:$0xff]
      %v759 = vld [vmem:[#allocation2 + $0xa8] sm:$0xff]
      %v760 = vld [vmem:[#allocation2 + $0xb0] sm:$0xff]
      %v761 = vld [vmem:[#allocation2 + $0xb8] sm:$0xff]
      %v762 = vld [vmem:[%s1] sm:$0xf]
      %v763 = vld [vmem:[%s1 + $0x4] sm:$0xf]
      %v764 = vld [vmem:[%s1 + $0x8] sm:$0xf]
      %v765 = vld [vmem:[%s1 + $0xc] sm:$0xf]
      %v766 = vld [vmem:[%s1 + $0x10] sm:$0xf]
      %v767 = vld [vmem:[%s1 + $0x14] sm:$0xf]
      %v768 = vld [vmem:[%s1 + $0x18] sm:$0xf]
      %v769 = vld [vmem:[%s1 + $0x1c] sm:$0xf]
      %v770 = vld [vmem:[%s1 + $0x20] sm:$0xf]
      %v771 = vld [vmem:[%s1 + $0x24] sm:$0xf]
      %v772 = vld [vmem:[%s1 + $0x28] sm:$0xf]
      %v773 = vld [vmem:[%s1 + $0x2c] sm:$0xf]
      %v774 = vld [vmem:[%s1 + $0x30] sm:$0xf]
      %v775 = vld [vmem:[%s1 + $0x34] sm:$0xf]
      %v776 = vld [vmem:[%s1 + $0x38] sm:$0xf]
      %v777 = vld [vmem:[%s1 + $0x3c] sm:$0xf]
      %v778 = vld [vmem:[%s1 + $0x40] sm:$0xf]
      %v779 = vld [vmem:[%s1 + $0x44] sm:$0xf]
      %v780 = vld [vmem:[%s1 + $0x48] sm:$0xf]
      %v781 = vld [vmem:[%s1 + $0x4c] sm:$0xf]
      %v782 = vld [vmem:[%s1 + $0x50] sm:$0xf]
      %v783 = vld [vmem:[%s1 + $0x54] sm:$0xf]
      %v784 = vld [vmem:[%s1 + $0x58] sm:$0xf]
      %v785 = vld [vmem:[%s1 + $0x5c] sm:$0xf]
      %v786 = vld [vmem:[%s1 + $0x60] sm:$0xf]
      %v787 = vld [vmem:[%s1 + $0x64] sm:$0xf]
      %v788 = vld [vmem:[%s1 + $0x68] sm:$0xf]
      %v789 = vld [vmem:[%s1 + $0x6c] sm:$0xf]
      %v790 = vld [vmem:[%s1 + $0x70] sm:$0xf]
      %v791 = vld [vmem:[%s1 + $0x74] sm:$0xf]
      %v792 = vld [vmem:[%s1 + $0x78] sm:$0xf]
      %v793 = vld [vmem:[%s1 + $0x7c] sm:$0xf]
      %v794 = vld [vmem:[%s1 + $0x80] sm:$0xf]
      %v795 = vld [vmem:[%s1 + $0x84] sm:$0xf]
      %v796 = vld [vmem:[%s1 + $0x88] sm:$0xf]
      %v797 = vld [vmem:[%s1 + $0x8c] sm:$0xf]
      %v798 = vld [vmem:[%s1 + $0x90] sm:$0xf]
      %v799 = vld [vmem:[%s1 + $0x94] sm:$0xf]
      %v800 = vld [vmem:[%s1 + $0x98] sm:$0xf]
      %v801 = vld [vmem:[%s1 + $0x9c] sm:$0xf]
      %v802 = vld [vmem:[%s1 + $0xa0] sm:$0xf]
      %v803 = vld [vmem:[%s1 + $0xa4] sm:$0xf]
      %v804 = vld [vmem:[%s1 + $0xa8] sm:$0xf]
      %v805 = vld [vmem:[%s1 + $0xac] sm:$0xf]
      %v806 = vld [vmem:[%s1 + $0xb0] sm:$0xf]
      %v807 = vld [vmem:[%s1 + $0xb4] sm:$0xf]
      %v808 = vld [vmem:[%s1 + $0xb8] sm:$0xf]
      %v809 = vld [vmem:[%s1 + $0xbc] sm:$0xf]
      %v810 = vld [vmem:[%s1 + $0xc0] sm:$0xf]
      %v811 = vld [vmem:[%s1 + $0xc4] sm:$0xf]
      %v812 = vld [vmem:[%s1 + $0xc8] sm:$0xf]
      %v813 = vld [vmem:[%s1 + $0xcc] sm:$0xf]
      %v814 = vld [vmem:[%s1 + $0xd0] sm:$0xf]
      %v815 = vld [vmem:[%s1 + $0xd4] sm:$0xf]
      %v816 = vld [vmem:[%s1 + $0xd8] sm:$0xf]
      %v817 = vld [vmem:[%s1 + $0xdc] sm:$0xf]
      %v818 = vld [vmem:[%s1 + $0xe0] sm:$0xf]
      %v819 = vld [vmem:[%s1 + $0xe4] sm:$0xf]
      %v820 = vld [vmem:[%s1 + $0xe8] sm:$0xf]
      %v821 = vld [vmem:[%s1 + $0xec] sm:$0xf]
      %v822 = vld [vmem:[%s1 + $0xf0] sm:$0xf]
      %v823 = vld [vmem:[%s1 + $0xf4] sm:$0xf]
      %v824 = vld [vmem:[%s1 + $0xf8] sm:$0xf]
      %v825 = vld [vmem:[%s1 + $0xfc] sm:$0xf]
      %v826 = vld [vmem:[%s1 + $0x100] sm:$0xf]
      %v827 = vld [vmem:[%s1 + $0x104] sm:$0xf]
      %v828 = vld [vmem:[%s1 + $0x108] sm:$0xf]
      %v829 = vld [vmem:[%s1 + $0x10c] sm:$0xf]
      %v830 = vld [vmem:[%s1 + $0x110] sm:$0xf]
      %v831 = vld [vmem:[%s1 + $0x114] sm:$0xf]
      %v832 = vld [vmem:[%s1 + $0x118] sm:$0xf]
      %v833 = vld [vmem:[%s1 + $0x11c] sm:$0xf]
      %v834 = vld [vmem:[%s1 + $0x120] sm:$0xf]
      %v835 = vld [vmem:[%s1 + $0x124] sm:$0xf]
      %v836 = vld [vmem:[%s1 + $0x128] sm:$0xf]
      %v837 = vld [vmem:[%s1 + $0x12c] sm:$0xf]
      %v838 = vld [vmem:[%s1 + $0x130] sm:$0xf]
      %v839 = vld [vmem:[%s1 + $0x134] sm:$0xf]
      %v840 = vld [vmem:[%s1 + $0x138] sm:$0xf]
      %v841 = vld [vmem:[%s1 + $0x13c] sm:$0xf]
      %v842 = vld [vmem:[%s1 + $0x140] sm:$0xf]
      %v843 = vld [vmem:[%s1 + $0x144] sm:$0xf]
      %v844 = vld [vmem:[%s1 + $0x148] sm:$0xf]
      %v845 = vld [vmem:[%s1 + $0x14c] sm:$0xf]
      %v846 = vld [vmem:[%s1 + $0x150] sm:$0xf]
      %v847 = vld [vmem:[%s1 + $0x154] sm:$0xf]
      %v848 = vld [vmem:[%s1 + $0x158] sm:$0xf]
      %v849 = vld [vmem:[%s1 + $0x15c] sm:$0xf]
      %v850 = vld [vmem:[%s1 + $0x160] sm:$0xf]
      %v851 = vld [vmem:[%s1 + $0x164] sm:$0xf]
      %v852 = vld [vmem:[%s1 + $0x168] sm:$0xf]
      %v853 = vld [vmem:[%s1 + $0x16c] sm:$0xf]
      %v854 = vld [vmem:[%s1 + $0x170] sm:$0xf]
      %v855 = vld [vmem:[%s1 + $0x174] sm:$0xf]
      %v856 = vld [vmem:[%s1 + $0x178] sm:$0xf]
      %v857 = vld [vmem:[%s1 + $0x17c] sm:$0xf]
      %v858 = vld [vmem:[%s1 + $0x180] sm:$0xf]
      %v859 = vld [vmem:[%s1 + $0x184] sm:$0xf]
      %v860 = vld [vmem:[%s1 + $0x188] sm:$0xf]
      %v861 = vld [vmem:[%s1 + $0x18c] sm:$0xf]
      %v862 = vld [vmem:[%s1 + $0x190] sm:$0xf]
      %v863 = vld [vmem:[%s1 + $0x194] sm:$0xf]
      %v864 = vld [vmem:[%s1 + $0x198] sm:$0xf]
      %v865 = vld [vmem:[%s1 + $0x19c] sm:$0xf]
      %v866 = vld [vmem:[%s1 + $0x1a0] sm:$0xf]
      %v867 = vld [vmem:[%s1 + $0x1a4] sm:$0xf]
      %v868 = vld [vmem:[%s1 + $0x1a8] sm:$0xf]
      %v869 = vld [vmem:[%s1 + $0x1ac] sm:$0xf]
      %v870 = vld [vmem:[%s1 + $0x1b0] sm:$0xf]
      %v871 = vld [vmem:[%s1 + $0x1b4] sm:$0xf]
      %v872 = vld [vmem:[%s1 + $0x1b8] sm:$0xf]
      %v873 = vld [vmem:[%s1 + $0x1bc] sm:$0xf]
      %v874 = vld [vmem:[%s1 + $0x1c0] sm:$0xf]
      %v875 = vld [vmem:[%s1 + $0x1c4] sm:$0xf]
      %v876 = vld [vmem:[%s1 + $0x1c8] sm:$0xf]
      %v877 = vld [vmem:[%s1 + $0x1cc] sm:$0xf]
      %v878 = vld [vmem:[%s1 + $0x1d0] sm:$0xf]
      %v879 = vld [vmem:[%s1 + $0x1d4] sm:$0xf]
      %v880 = vld [vmem:[%s1 + $0x1d8] sm:$0xf]
      %v881 = vld [vmem:[%s1 + $0x1dc] sm:$0xf]
      %v882 = vld [vmem:[%s1 + $0x1e0] sm:$0xf]
      %v883 = vld [vmem:[%s1 + $0x1e4] sm:$0xf]
      %v884 = vld [vmem:[%s1 + $0x1e8] sm:$0xf]
      %v885 = vld [vmem:[%s1 + $0x1ec] sm:$0xf]
      %v886 = vld [vmem:[%s1 + $0x1f0] sm:$0xf]
      %v887 = vld [vmem:[%s1 + $0x1f4] sm:$0xf]
      %v888 = vld [vmem:[%s1 + $0x1f8] sm:$0xf]
      %v889 = vld [vmem:[%s1 + $0x1fc] sm:$0xf]
      %v890 = vld [vmem:[%s2] sm:$0x1]
      %v892 = vlaneseq
      %v893 = vshrl.u32 %v892, 7
      %v894 = vsub.s32 0, %v893
      %v895 = vrot.slane %v890, %v894
      %v1025 = vunpack.c.l.b16 %v762
      %v1026 = vunpack.c.l.b16 %v763
      %v1027 = vunpack.c.l.b16 %v764
      %v1028 = vunpack.c.l.b16 %v765
      %v1029 = vunpack.c.l.b16 %v766
      %v1030 = vunpack.c.l.b16 %v767
      %v1031 = vunpack.c.l.b16 %v768
      %v1032 = vunpack.c.l.b16 %v769
      %v1033 = vunpack.c.l.b16 %v770
      %v1034 = vunpack.c.l.b16 %v771
      %v1035 = vunpack.c.l.b16 %v772
      %v1036 = vunpack.c.l.b16 %v773
      %v1037 = vunpack.c.l.b16 %v774
      %v1038 = vunpack.c.l.b16 %v775
      %v1039 = vunpack.c.l.b16 %v776
      %v1040 = vunpack.c.l.b16 %v777
      %v1041 = vunpack.c.l.b16 %v778
      %v1042 = vunpack.c.l.b16 %v779
      %v1043 = vunpack.c.l.b16 %v780
      %v1044 = vunpack.c.l.b16 %v781
      %v1045 = vunpack.c.l.b16 %v782
      %v1046 = vunpack.c.l.b16 %v783
      %v1047 = vunpack.c.l.b16 %v784
      %v1048 = vunpack.c.l.b16 %v785
      %v1049 = vunpack.c.l.b16 %v786
      %v1050 = vunpack.c.l.b16 %v787
      %v1051 = vunpack.c.l.b16 %v788
      %v1052 = vunpack.c.l.b16 %v789
      %v1053 = vunpack.c.l.b16 %v790
      %v1054 = vunpack.c.l.b16 %v791
      %v1055 = vunpack.c.l.b16 %v792
      %v1056 = vunpack.c.l.b16 %v793
      %v1057 = vunpack.c.l.b16 %v794
      %v1058 = vunpack.c.l.b16 %v795
      %v1059 = vunpack.c.l.b16 %v796
      %v1060 = vunpack.c.l.b16 %v797
      %v1061 = vunpack.c.l.b16 %v798
      %v1062 = vunpack.c.l.b16 %v799
      %v1063 = vunpack.c.l.b16 %v800
      %v1064 = vunpack.c.l.b16 %v801
      %v1065 = vunpack.c.l.b16 %v802
      %v1066 = vunpack.c.l.b16 %v803
      %v1067 = vunpack.c.l.b16 %v804
      %v1068 = vunpack.c.l.b16 %v805
      %v1069 = vunpack.c.l.b16 %v806
      %v1070 = vunpack.c.l.b16 %v807
      %v1071 = vunpack.c.l.b16 %v808
      %v1072 = vunpack.c.l.b16 %v809
      %v1073 = vunpack.c.l.b16 %v810
      %v1074 = vunpack.c.l.b16 %v811
      %v1075 = vunpack.c.l.b16 %v812
      %v1076 = vunpack.c.l.b16 %v813
      %v1077 = vunpack.c.l.b16 %v814
      %v1078 = vunpack.c.l.b16 %v815
      %v1079 = vunpack.c.l.b16 %v816
      %v1080 = vunpack.c.l.b16 %v817
      %v1081 = vunpack.c.l.b16 %v818
      %v1082 = vunpack.c.l.b16 %v819
      %v1083 = vunpack.c.l.b16 %v820
      %v1084 = vunpack.c.l.b16 %v821
      %v1085 = vunpack.c.l.b16 %v822
      %v1086 = vunpack.c.l.b16 %v823
      %v1087 = vunpack.c.l.b16 %v824
      %v1088 = vunpack.c.l.b16 %v825
      %v1089 = vunpack.c.l.b16 %v826
      %v1090 = vunpack.c.l.b16 %v827
      %v1091 = vunpack.c.l.b16 %v828
      %v1092 = vunpack.c.l.b16 %v829
      %v1093 = vunpack.c.l.b16 %v830
      %v1094 = vunpack.c.l.b16 %v831
      %v1095 = vunpack.c.l.b16 %v832
      %v1096 = vunpack.c.l.b16 %v833
      %v1097 = vunpack.c.l.b16 %v834
      %v1098 = vunpack.c.l.b16 %v835
      %v1099 = vunpack.c.l.b16 %v836
      %v1100 = vunpack.c.l.b16 %v837
      %v1101 = vunpack.c.l.b16 %v838
      %v1102 = vunpack.c.l.b16 %v839
      %v1103 = vunpack.c.l.b16 %v840
      %v1104 = vunpack.c.l.b16 %v841
      %v1105 = vunpack.c.l.b16 %v842
      %v1106 = vunpack.c.l.b16 %v843
      %v1107 = vunpack.c.l.b16 %v844
      %v1108 = vunpack.c.l.b16 %v845
      %v1109 = vunpack.c.l.b16 %v846
      %v1110 = vunpack.c.l.b16 %v847
      %v1111 = vunpack.c.l.b16 %v848
      %v1112 = vunpack.c.l.b16 %v849
      %v1113 = vunpack.c.l.b16 %v850
      %v1114 = vunpack.c.l.b16 %v851
      %v1115 = vunpack.c.l.b16 %v852
      %v1116 = vunpack.c.l.b16 %v853
      %v1117 = vunpack.c.l.b16 %v854
      %v1118 = vunpack.c.l.b16 %v855
      %v1119 = vunpack.c.l.b16 %v856
      %v1120 = vunpack.c.l.b16 %v857
      %v1121 = vunpack.c.l.b16 %v858
      %v1122 = vunpack.c.l.b16 %v859
      %v1123 = vunpack.c.l.b16 %v860
      %v1124 = vunpack.c.l.b16 %v861
      %v1125 = vunpack.c.l.b16 %v862
      %v1126 = vunpack.c.l.b16 %v863
      %v1127 = vunpack.c.l.b16 %v864
      %v1128 = vunpack.c.l.b16 %v865
      %v1129 = vunpack.c.l.b16 %v866
      %v1130 = vunpack.c.l.b16 %v867
      %v1131 = vunpack.c.l.b16 %v868
      %v1132 = vunpack.c.l.b16 %v869
      %v1133 = vunpack.c.l.b16 %v870
      %v1134 = vunpack.c.l.b16 %v871
      %v1135 = vunpack.c.l.b16 %v872
      %v1136 = vunpack.c.l.b16 %v873
      %v1137 = vunpack.c.l.b16 %v874
      %v1138 = vunpack.c.l.b16 %v875
      %v1139 = vunpack.c.l.b16 %v876
      %v1140 = vunpack.c.l.b16 %v877
      %v1141 = vunpack.c.l.b16 %v878
      %v1142 = vunpack.c.l.b16 %v879
      %v1143 = vunpack.c.l.b16 %v880
      %v1144 = vunpack.c.l.b16 %v881
      %v1145 = vunpack.c.l.b16 %v882
      %v1146 = vunpack.c.l.b16 %v883
      %v1147 = vunpack.c.l.b16 %v884
      %v1148 = vunpack.c.l.b16 %v885
      %v1149 = vunpack.c.l.b16 %v886
      %v1150 = vunpack.c.l.b16 %v887
      %v1151 = vunpack.c.l.b16 %v888
      %v1152 = vunpack.c.l.b16 %v889
      %v1153 = vpack.c.b16 %v1026, %v1025
      %v1154 = vpack.c.b16 %v1028, %v1027
      %v1155 = vpack.c.b16 %v1030, %v1029
      %v1156 = vpack.c.b16 %v1032, %v1031
      %v1157 = vpack.c.b16 %v1034, %v1033
      %v1158 = vpack.c.b16 %v1036, %v1035
      %v1159 = vpack.c.b16 %v1038, %v1037
      %v1160 = vpack.c.b16 %v1040, %v1039
      %v1161 = vpack.c.b16 %v1042, %v1041
      %v1162 = vpack.c.b16 %v1044, %v1043
      %v1163 = vpack.c.b16 %v1046, %v1045
      %v1164 = vpack.c.b16 %v1048, %v1047
      %v1165 = vpack.c.b16 %v1050, %v1049
      %v1166 = vpack.c.b16 %v1052, %v1051
      %v1167 = vpack.c.b16 %v1054, %v1053
      %v1168 = vpack.c.b16 %v1056, %v1055
      %v1169 = vpack.c.b16 %v1058, %v1057
      %v1170 = vpack.c.b16 %v1060, %v1059
      %v1171 = vpack.c.b16 %v1062, %v1061
      %v1172 = vpack.c.b16 %v1064, %v1063
      %v1173 = vpack.c.b16 %v1066, %v1065
      %v1174 = vpack.c.b16 %v1068, %v1067
      %v1175 = vpack.c.b16 %v1070, %v1069
      %v1176 = vpack.c.b16 %v1072, %v1071
      %v1177 = vpack.c.b16 %v1074, %v1073
      %v1178 = vpack.c.b16 %v1076, %v1075
      %v1179 = vpack.c.b16 %v1078, %v1077
      %v1180 = vpack.c.b16 %v1080, %v1079
      %v1181 = vpack.c.b16 %v1082, %v1081
      %v1182 = vpack.c.b16 %v1084, %v1083
      %v1183 = vpack.c.b16 %v1086, %v1085
      %v1184 = vpack.c.b16 %v1088, %v1087
      %v1185 = vpack.c.b16 %v1090, %v1089
      %v1186 = vpack.c.b16 %v1092, %v1091
      %v1187 = vpack.c.b16 %v1094, %v1093
      %v1188 = vpack.c.b16 %v1096, %v1095
      %v1189 = vpack.c.b16 %v1098, %v1097
      %v1190 = vpack.c.b16 %v1100, %v1099
      %v1191 = vpack.c.b16 %v1102, %v1101
      %v1192 = vpack.c.b16 %v1104, %v1103
      %v1193 = vpack.c.b16 %v1106, %v1105
      %v1194 = vpack.c.b16 %v1108, %v1107
      %v1195 = vpack.c.b16 %v1110, %v1109
      %v1196 = vpack.c.b16 %v1112, %v1111
      %v1197 = vpack.c.b16 %v1114, %v1113
      %v1198 = vpack.c.b16 %v1116, %v1115
      %v1199 = vpack.c.b16 %v1118, %v1117
      %v1200 = vpack.c.b16 %v1120, %v1119
      %v1201 = vpack.c.b16 %v1122, %v1121
      %v1202 = vpack.c.b16 %v1124, %v1123
      %v1203 = vpack.c.b16 %v1126, %v1125
      %v1204 = vpack.c.b16 %v1128, %v1127
      %v1205 = vpack.c.b16 %v1130, %v1129
      %v1206 = vpack.c.b16 %v1132, %v1131
      %v1207 = vpack.c.b16 %v1134, %v1133
      %v1208 = vpack.c.b16 %v1136, %v1135
      %v1209 = vpack.c.b16 %v1138, %v1137
      %v1210 = vpack.c.b16 %v1140, %v1139
      %v1211 = vpack.c.b16 %v1142, %v1141
      %v1212 = vpack.c.b16 %v1144, %v1143
      %v1213 = vpack.c.b16 %v1146, %v1145
      %v1214 = vpack.c.b16 %v1148, %v1147
      %v1215 = vpack.c.b16 %v1150, %v1149
      %v1216 = vpack.c.b16 %v1152, %v1151
      %1281 = vmatprep.subr.bf16.mxu0 0
      %1282 = vmatpush1.bf16.msra.mxu0 %v1153
      %1283 = vmatprep.subr.bf16.mxu0 0
      %1284 = vmatpush1.bf16.msra.mxu0 %v1154
      %1285 = vmatprep.subr.bf16.mxu0 0
      %1286 = vmatpush1.bf16.msra.mxu0 %v1155
      %1287 = vmatprep.subr.bf16.mxu0 0
      %1288 = vmatpush1.bf16.msra.mxu0 %v1156
      %1289 = vmatprep.subr.bf16.mxu0 0
      %1290 = vmatpush1.bf16.msra.mxu0 %v1157
      %1291 = vmatprep.subr.bf16.mxu0 0
      %1292 = vmatpush1.bf16.msra.mxu0 %v1158
      %1293 = vmatprep.subr.bf16.mxu0 0
      %1294 = vmatpush1.bf16.msra.mxu0 %v1159
      %1295 = vmatprep.subr.bf16.mxu0 0
      %1296 = vmatpush1.bf16.msra.mxu0 %v1160
      %1297 = vmatprep.subr.bf16.mxu0 0
      %1298 = vmatpush1.bf16.msra.mxu0 %v1161
      %1299 = vmatprep.subr.bf16.mxu0 0
      %1300 = vmatpush1.bf16.msra.mxu0 %v1162
      %1301 = vmatprep.subr.bf16.mxu0 0
      %1302 = vmatpush1.bf16.msra.mxu0 %v1163
      %1303 = vmatprep.subr.bf16.mxu0 0
      %1304 = vmatpush1.bf16.msra.mxu0 %v1164
      %1305 = vmatprep.subr.bf16.mxu0 0
      %1306 = vmatpush1.bf16.msra.mxu0 %v1165
      %1307 = vmatprep.subr.bf16.mxu0 0
      %1308 = vmatpush1.bf16.msra.mxu0 %v1166
      %1309 = vmatprep.subr.bf16.mxu0 0
      %1310 = vmatpush1.bf16.msra.mxu0 %v1167
      %1311 = vmatprep.subr.bf16.mxu0 0
      %1312 = vmatpush1.bf16.msra.mxu0 %v1168
      %1313 = vmatprep.mubr.bf16.mxu0 %v739
      %1314 = vmatmul.mubr.bf16.gmra.mrb[0].mxu0 %v738
      %v1315 = vpop.f32.mrb[0].mxu0
      %v1316 = vadd.f32 %v895, %v1315
      %v1317 = vpop.f32.mrb[0].mxu0
      %v1318 = vpop.f32.mrb[0].mxu0
      %v1319 = vadd.f32 %v895, %v1318
      %v1320 = vpop.f32.mrb[0].mxu0
      %1321 = vmatprep.mubr.bf16.mxu0 %v747
      %1322 = vmatmul.mubr.bf16.gmra.mrb[0].mxu0 %v746
      %v1323 = vpop.f32.mrb[0].mxu0
      %v1324 = vadd.f32 %v895, %v1323
      %v1325 = vpop.f32.mrb[0].mxu0
      %v1326 = vpop.f32.mrb[0].mxu0
      %v1327 = vadd.f32 %v895, %v1326
      %v1328 = vpop.f32.mrb[0].mxu0
      %1329 = vmatprep.mubr.bf16.mxu0 %v755
      %1330 = vmatmul.mubr.bf16.gmra.mrb[0].mxu0 %v754
      %v1331 = vpop.f32.mrb[0].mxu0
      %v1332 = vadd.f32 %v895, %v1331
      %v1333 = vpop.f32.mrb[0].mxu0
      %v1334 = vpop.f32.mrb[0].mxu0
      %v1335 = vadd.f32 %v895, %v1334
      %v1336 = vpop.f32.mrb[0].mxu0
      %1337 = vdwg.mxu0
      %1338 = vmatprep.subr.bf16.mxu0 0
      %1339 = vmatpush1.bf16.msra.mxu0 %v1169
      %1340 = vmatprep.subr.bf16.mxu0 0
      %1341 = vmatpush1.bf16.msra.mxu0 %v1170
      %1342 = vmatprep.subr.bf16.mxu0 0
      %1343 = vmatpush1.bf16.msra.mxu0 %v1171
      %1344 = vmatprep.subr.bf16.mxu0 0
      %1345 = vmatpush1.bf16.msra.mxu0 %v1172
      %1346 = vmatprep.subr.bf16.mxu0 0
      %1347 = vmatpush1.bf16.msra.mxu0 %v1173
      %1348 = vmatprep.subr.bf16.mxu0 0
      %1349 = vmatpush1.bf16.msra.mxu0 %v1174
      %1350 = vmatprep.subr.bf16.mxu0 0
      %1351 = vmatpush1.bf16.msra.mxu0 %v1175
      %1352 = vmatprep.subr.bf16.mxu0 0
      %1353 = vmatpush1.bf16.msra.mxu0 %v1176
      %1354 = vmatprep.subr.bf16.mxu0 0
      %1355 = vmatpush1.bf16.msra.mxu0 %v1177
      %1356 = vmatprep.subr.bf16.mxu0 0
      %1357 = vmatpush1.bf16.msra.mxu0 %v1178
      %1358 = vmatprep.subr.bf16.mxu0 0
      %1359 = vmatpush1.bf16.msra.mxu0 %v1179
      %1360 = vmatprep.subr.bf16.mxu0 0
      %1361 = vmatpush1.bf16.msra.mxu0 %v1180
      %1362 = vmatprep.subr.bf16.mxu0 0
      %1363 = vmatpush1.bf16.msra.mxu0 %v1181
      %1364 = vmatprep.subr.bf16.mxu0 0
      %1365 = vmatpush1.bf16.msra.mxu0 %v1182
      %1366 = vmatprep.subr.bf16.mxu0 0
      %1367 = vmatpush1.bf16.msra.mxu0 %v1183
      %1368 = vmatprep.subr.bf16.mxu0 0
      %1369 = vmatpush1.bf16.msra.mxu0 %v1184
      %1370 = vmatprep.mubr.bf16.mxu0 %v741
      %1371 = vmatmul.mubr.bf16.gmra.mrb[0].mxu0 %v740
      %v1372 = vpop.f32.mrb[0].mxu0
      %v1373 = vadd.f32 %v1316, %v1372
      %v1374 = vpop.f32.mrb[0].mxu0
      %v1375 = vpop.f32.mrb[0].mxu0
      %v1376 = vadd.f32 %v1319, %v1375
      %v1377 = vpop.f32.mrb[0].mxu0
      %1378 = vmatprep.mubr.bf16.mxu0 %v749
      %1379 = vmatmul.mubr.bf16.gmra.mrb[0].mxu0 %v748
      %v1380 = vpop.f32.mrb[0].mxu0
      %v1381 = vadd.f32 %v1324, %v1380
      %v1382 = vpop.f32.mrb[0].mxu0
      %v1383 = vpop.f32.mrb[0].mxu0
      %v1384 = vadd.f32 %v1327, %v1383
      %v1385 = vpop.f32.mrb[0].mxu0
      %1386 = vmatprep.mubr.bf16.mxu0 %v757
      %1387 = vmatmul.mubr.bf16.gmra.mrb[0].mxu0 %v756
      %v1388 = vpop.f32.mrb[0].mxu0
      %v1389 = vadd.f32 %v1332, %v1388
      %v1390 = vpop.f32.mrb[0].mxu0
      %v1391 = vpop.f32.mrb[0].mxu0
      %v1392 = vadd.f32 %v1335, %v1391
      %v1393 = vpop.f32.mrb[0].mxu0
      %1394 = vdwg.mxu0
      %1395 = vmatprep.subr.bf16.mxu0 0
      %1396 = vmatpush1.bf16.msra.mxu0 %v1185
      %1397 = vmatprep.subr.bf16.mxu0 0
      %1398 = vmatpush1.bf16.msra.mxu0 %v1186
      %1399 = vmatprep.subr.bf16.mxu0 0
      %1400 = vmatpush1.bf16.msra.mxu0 %v1187
      %1401 = vmatprep.subr.bf16.mxu0 0
      %1402 = vmatpush1.bf16.msra.mxu0 %v1188
      %1403 = vmatprep.subr.bf16.mxu0 0
      %1404 = vmatpush1.bf16.msra.mxu0 %v1189
      %1405 = vmatprep.subr.bf16.mxu0 0
      %1406 = vmatpush1.bf16.msra.mxu0 %v1190
      %1407 = vmatprep.subr.bf16.mxu0 0
      %1408 = vmatpush1.bf16.msra.mxu0 %v1191
      %1409 = vmatprep.subr.bf16.mxu0 0
      %1410 = vmatpush1.bf16.msra.mxu0 %v1192
      %1411 = vmatprep.subr.bf16.mxu0 0
      %1412 = vmatpush1.bf16.msra.mxu0 %v1193
      %1413 = vmatprep.subr.bf16.mxu0 0
      %1414 = vmatpush1.bf16.msra.mxu0 %v1194
      %1415 = vmatprep.subr.bf16.mxu0 0
      %1416 = vmatpush1.bf16.msra.mxu0 %v1195
      %1417 = vmatprep.subr.bf16.mxu0 0
      %1418 = vmatpush1.bf16.msra.mxu0 %v1196
      %1419 = vmatprep.subr.bf16.mxu0 0
      %1420 = vmatpush1.bf16.msra.mxu0 %v1197
      %1421 = vmatprep.subr.bf16.mxu0 0
      %1422 = vmatpush1.bf16.msra.mxu0 %v1198
      %1423 = vmatprep.subr.bf16.mxu0 0
      %1424 = vmatpush1.bf16.msra.mxu0 %v1199
      %1425 = vmatprep.subr.bf16.mxu0 0
      %1426 = vmatpush1.bf16.msra.mxu0 %v1200
      %1427 = vmatprep.mubr.bf16.mxu0 %v743
      %1428 = vmatmul.mubr.bf16.gmra.mrb[0].mxu0 %v742
      %v1429 = vpop.f32.mrb[0].mxu0
      %v1430 = vadd.f32 %v1373, %v1429
      %v1431 = vpop.f32.mrb[0].mxu0
      %v1432 = vpop.f32.mrb[0].mxu0
      %v1433 = vadd.f32 %v1376, %v1432
      %v1434 = vpop.f32.mrb[0].mxu0
      %1435 = vmatprep.mubr.bf16.mxu0 %v751
      %1436 = vmatmul.mubr.bf16.gmra.mrb[0].mxu0 %v750
      %v1437 = vpop.f32.mrb[0].mxu0
      %v1438 = vadd.f32 %v1381, %v1437
      %v1439 = vpop.f32.mrb[0].mxu0
      %v1440 = vpop.f32.mrb[0].mxu0
      %v1441 = vadd.f32 %v1384, %v1440
      %v1442 = vpop.f32.mrb[0].mxu0
      %1443 = vmatprep.mubr.bf16.mxu0 %v759
      %1444 = vmatmul.mubr.bf16.gmra.mrb[0].mxu0 %v758
      %v1445 = vpop.f32.mrb[0].mxu0
      %v1446 = vadd.f32 %v1389, %v1445
      %v1447 = vpop.f32.mrb[0].mxu0
      %v1448 = vpop.f32.mrb[0].mxu0
      %v1449 = vadd.f32 %v1392, %v1448
      %v1450 = vpop.f32.mrb[0].mxu0
      %1451 = vdwg.mxu0
      %1452 = vmatprep.subr.bf16.mxu0 0
      %1453 = vmatpush1.bf16.msra.mxu0 %v1201
      %1454 = vmatprep.subr.bf16.mxu0 0
      %1455 = vmatpush1.bf16.msra.mxu0 %v1202
      %1456 = vmatprep.subr.bf16.mxu0 0
      %1457 = vmatpush1.bf16.msra.mxu0 %v1203
      %1458 = vmatprep.subr.bf16.mxu0 0
      %1459 = vmatpush1.bf16.msra.mxu0 %v1204
      %1460 = vmatprep.subr.bf16.mxu0 0
      %1461 = vmatpush1.bf16.msra.mxu0 %v1205
      %1462 = vmatprep.subr.bf16.mxu0 0
      %1463 = vmatpush1.bf16.msra.mxu0 %v1206
      %1464 = vmatprep.subr.bf16.mxu0 0
      %1465 = vmatpush1.bf16.msra.mxu0 %v1207
      %1466 = vmatprep.subr.bf16.mxu0 0
      %1467 = vmatpush1.bf16.msra.mxu0 %v1208
      %1468 = vmatprep.subr.bf16.mxu0 0
      %1469 = vmatpush1.bf16.msra.mxu0 %v1209
      %1470 = vmatprep.subr.bf16.mxu0 0
      %1471 = vmatpush1.bf16.msra.mxu0 %v1210
      %1472 = vmatprep.subr.bf16.mxu0 0
      %1473 = vmatpush1.bf16.msra.mxu0 %v1211
      %1474 = vmatprep.subr.bf16.mxu0 0
      %1475 = vmatpush1.bf16.msra.mxu0 %v1212
      %1476 = vmatprep.subr.bf16.mxu0 0
      %1477 = vmatpush1.bf16.msra.mxu0 %v1213
      %1478 = vmatprep.subr.bf16.mxu0 0
      %1479 = vmatpush1.bf16.msra.mxu0 %v1214
      %1480 = vmatprep.subr.bf16.mxu0 0
      %1481 = vmatpush1.bf16.msra.mxu0 %v1215
      %1482 = vmatprep.subr.bf16.mxu0 0
      %1483 = vmatpush1.bf16.msra.mxu0 %v1216
      %1484 = vmatprep.mubr.bf16.mxu0 %v745
      %1485 = vmatmul.mubr.bf16.gmra.mrb[0].mxu0 %v744
      %v1486 = vpop.f32.mrb[0].mxu0
      %v1487 = vadd.f32 %v1430, %v1486
      %v1488 = vpop.f32.mrb[0].mxu0
      %v1489 = vpop.f32.mrb[0].mxu0
      %v1490 = vadd.f32 %v1433, %v1489
      %v1491 = vpop.f32.mrb[0].mxu0
      %1492 = vmatprep.mubr.bf16.mxu0 %v753
      %1493 = vmatmul.mubr.bf16.gmra.mrb[0].mxu0 %v752
      %v1494 = vpop.f32.mrb[0].mxu0
      %v1495 = vadd.f32 %v1438, %v1494
      %v1496 = vpop.f32.mrb[0].mxu0
      %v1497 = vpop.f32.mrb[0].mxu0
      %v1498 = vadd.f32 %v1441, %v1497
      %v1499 = vpop.f32.mrb[0].mxu0
      %1500 = vmatprep.mubr.bf16.mxu0 %v761
      %1501 = vmatmul.mubr.bf16.gmra.mrb[0].mxu0 %v760
      %v1502 = vpop.f32.mrb[0].mxu0
      %v1503 = vadd.f32 %v1446, %v1502
      %v1504 = vpop.f32.mrb[0].mxu0
      %v1505 = vpop.f32.mrb[0].mxu0
      %v1506 = vadd.f32 %v1449, %v1505
      %v1507 = vpop.f32.mrb[0].mxu0
      %1508 = vdwg.mxu0
      %v1509 = vmax.f32 %v1487, 0.0
      %v1510 = vmax.f32 %v1490, 0.0
      %v1511 = vmax.f32 %v1495, 0.0
      %v1512 = vmax.f32 %v1498, 0.0
      %v1513 = vmax.f32 %v1503, 0.0
      %v1514 = vmax.f32 %v1506, 0.0
      %v1515 = vpack.c.bf16 %v1510, %v1509
      %v1516 = vpack.c.bf16 %v1512, %v1511
      %v1517 = vpack.c.bf16 %v1514, %v1513
      %v1521 = vunpack.c.l.b16 %v1515
      %v1522 = vunpack.c.h.b16 %v1515
      %v1523 = vunpack.c.l.b16 %v1516
      %v1524 = vunpack.c.h.b16 %v1516
      %v1525 = vunpack.c.l.b16 %v1517
      %v1526 = vunpack.c.h.b16 %v1517
      %v1527 = vpack.c.b16 %v1521, %v1521
      %v1528 = vpack.c.b16 %v1522, %v1522
      %v1529 = vpack.c.b16 %v1523, %v1523
      %v1530 = vpack.c.b16 %v1524, %v1524
      %v1531 = vpack.c.b16 %v1525, %v1525
      %v1532 = vpack.c.b16 %v1526, %v1526
      %vm1539 = vcmask 519168
      %1540 = vst.msk [vmem:[%s177] sm:$0xf] %vm1539, %v1527
      %1541 = vst.msk [vmem:[%s177 + $0x4] sm:$0xf] %vm1539, %v1528
      %1542 = vst.msk [vmem:[%s177 + $0x8] sm:$0xf] %vm1539, %v1529
      %1543 = vst.msk [vmem:[%s177 + $0xc] sm:$0xf] %vm1539, %v1530
      %1544 = vst.msk [vmem:[%s177 + $0x10] sm:$0xf] %vm1539, %v1531
      %1545 = vst.msk [vmem:[%s177 + $0x14] sm:$0xf] %vm1539, %v1532
      %s1546 = smul.u32 2, %s14
      %p1547 = scmp.lt.s32.totalorder %s1546, 3
      %s1548 = scalar_select %p1547, %s1546, 3
      %s1549 = smul.addr %s1548, 3
      %s1550 = smul.addr %s1549, 4
      %s1551 = scalar_lea.vmem %s3, %s1550
      // Predicated region
      $region33: #{dqn_forward.5} parent=31 // pred_check
        %p1552 = pneg %p100
      $region34: #{dqn_forward.5} parent=31 // pred_check_branch
        %1554 = sbr.rel (%p1552) target = $region36
      $region35: #{dqn_forward.5} parent=31 // pred_region
        %s1555 = smul.u32 2, %s14
      $region36: #{dqn_forward.5} parent=31 // pred_fallthru
        _
    $region32: #{dqn_forward.5} parent=5 // pred_fallthru
      _
    %p1556 = scmp.le.s32.totalorder 2, %s9
    // Predicated region
    $region37: #{dqn_forward.5} parent=5 // pred_check
      %p1557 = pneg %p1556
    $region38: #{dqn_forward.5} parent=5 // pred_check_branch
      %1559 = sbr.rel (%p1557) target = $region40
    $region39: #{dqn_forward.5} parent=5 // pred_region
      %s1560 = ssub.s32 %s9, 2
      // Predicated region
      $region41: #{dqn_forward.5} parent=39 // pred_check
        %p1561 = pneg %p106
      $region42: #{dqn_forward.5} parent=39 // pred_check_branch
        %1563 = sbr.rel (%p1561) target = $region44
      $region43: #{dqn_forward.5} parent=39 // pred_region
        %s1564 = smul.u32 2, %s15
        %p1565 = scmp.lt.s32.totalorder %s1564, 3
        %s1566 = scalar_select %p1565, %s1564, 3
        %s1567 = smul.addr %s1566, 3
        %s1568 = smul.addr %s1567, 4
        %s1569 = scalar_lea.vmem %s3, %s1568
      $region44: #{dqn_forward.5} parent=39 // pred_fallthru
        _
    $region40: #{dqn_forward.5} parent=5 // pred_fallthru
      _
  $region6: #{dqn_forward.5} parent=0 // loop_footer
    %s13 = sadd.s32 1, %s9
  $region7: #{dqn_forward.5} parent=0 // loop_footer_branch
    %8 = sbr.rel target = $region3
  $region8: #{dqn_forward.5} parent=0 // loop_exit
    _

// kernel: dqn_forward.6
$region0: #{dqn_forward.6}
  #allocation0 [shape = 'u32[]', space=smem, size = 0x4, offset = 0x4, fixed_abs, tag = 'smem constant byte address 0x4 - core index']
  #allocation1 [shape = 'u32[144,128]{1,0:T(1,128)}', space=vmem, size = 0x12000, scoped, tag = 'internal scratch']
  #allocation2 [shape = 'bf16[16,576]{1,0:T(16,128)(2,1)}', space=vmem, size = 0x5000, scoped, tag = 'scratch operand']
  %s0 = inlined_call_operand.vmem [shape: bf16[4,3,1,10,64], index: 0, kind: input, shape index: {}]
  %s1 = inlined_call_operand.vmem [shape: bf16[576,64], index: 1, kind: input, shape index: {}]
  %s2 = inlined_call_operand.vmem [shape: f32[1,64], index: 2, kind: input, shape index: {}]
  %s3 = inlined_call_operand.vmem [shape: bf16[4,1,8,64], index: 3, kind: output, shape index: {}]
  %s4 = sld [smem:[#allocation0]]
  $region45: #{dqn_forward.6} parent=0
    _
  %s6 = ssub.s32 1, %s4
  %s7 = scalar_select 0, %s6, %s4
  loop: start=0, step=1, limit=4
  $region2: #{dqn_forward.6} parent=0 // loop_pre_header
    _
  $region3: #{dqn_forward.6} parent=0 // loop_header
    %s9 = sphi 0, %s13
    %p10 = scmp.ge.s32.totalorder %s9, 4
    %s19 = sphi 0, %s21
    %s22 = sphi 0, %s19
    %s23 = sphi 0, %s22
    %s39 = sphi 0, %s23
    %s43 = sphi 0, %s43
    %s45 = sphi 0, %s43
    %s46 = sphi 0, %s45
    %s60 = sphi 0, %s46
    %s64 = sphi 0, %s64
    %s66 = sphi 0, %s64
    %s67 = sphi 0, %s66
    %s81 = sphi 0, %s67
    %s87 = sphi 0, %s89
    %s90 = sphi 0, %s87
    %s91 = sphi 0, %s90
    %s107 = sphi 0, %s91
  $region4: #{dqn_forward.6} parent=0 // loop_header_branch
    %12 = sbr.rel (%p10) target = $region8
  $region5: #{dqn_forward.6} parent=0 // loop_body
    %s14 = ssub.s32 %s9, 1
    %s15 = ssub.s32 %s9, 2
    %s16 = sadd.s32 %s9, 1
    %s17 = ssub.s32 %s9, %s16
    %p18 = scmp.eq.s32.totalorder %s17, 0
    %s20 = sadd.s32 %s19, 1
    %s21 = scalar_select %p18, %s19, %s20
    %p24 = pneg %p18
    %p25 = scmp.eq.s32.totalorder %s9, 1
    %p26 = por %p24, %p25
    %p27 = scmp.ne.s32.totalorder %s19, %s22
    %p28 = scmp.eq.s32.totalorder %s9, 0
    %p29 = por %p27, %p28
    %p30 = scmp.ne.s32.totalorder %s19, %s22
    %p31 = scmp.eq.s32.totalorder %s14, 1
    %p32 = por %p30, %p31
    %p33 = scmp.ne.s32.totalorder %s22, %s23
    %p34 = scmp.eq.s32.totalorder %s14, 0
    %p35 = por %p33, %p34
    %p36 = scmp.ne.s32.totalorder %s22, %s23
    %p37 = scmp.eq.s32.totalorder %s15, 1
    %p38 = por %p36, %p37
    %p40 = scmp.ne.s32.totalorder %s23, %s39
    %p41 = scmp.eq.s32.totalorder %s15, 0
    %p42 = por %p40, %p41
    %s44 = sadd.s32 %s43, 1
    %p47 = scmp.eq.s32.totalorder %s9, 1
    %p48 = scmp.ne.s32.totalorder %s43, %s45
    %p49 = scmp.eq.s32.totalorder %s9, 0
    %p50 = por %p48, %p49
    %p51 = scmp.ne.s32.totalorder %s43, %s45
    %p52 = scmp.eq.s32.totalorder %s14, 1
    %p53 = por %p51, %p52
    %p54 = scmp.ne.s32.totalorder %s45, %s46
    %p55 = scmp.eq.s32.totalorder %s14, 0
    %p56 = por %p54, %p55
    %p57 = scmp.ne.s32.totalorder %s45, %s46
    %p58 = scmp.eq.s32.totalorder %s15, 1
    %p59 = por %p57, %p58
    %p61 = scmp.ne.s32.totalorder %s46, %s60
    %p62 = scmp.eq.s32.totalorder %s15, 0
    %p63 = por %p61, %p62
    %s65 = sadd.s32 %s64, 1
    %p68 = scmp.eq.s32.totalorder %s9, 1
    %p69 = scmp.ne.s32.totalorder %s64, %s66
    %p70 = scmp.eq.s32.totalorder %s9, 0
    %p71 = por %p69, %p70
    %p72 = scmp.ne.s32.totalorder %s64, %s66
    %p73 = scmp.eq.s32.totalorder %s14, 1
    %p74 = por %p72, %p73
    %p75 = scmp.ne.s32.totalorder %s66, %s67
    %p76 = scmp.eq.s32.totalorder %s14, 0
    %p77 = por %p75, %p76
    %p78 = scmp.ne.s32.totalorder %s66, %s67
    %p79 = scmp.eq.s32.totalorder %s15, 1
    %p80 = por %p78, %p79
    %p82 = scmp.ne.s32.totalorder %s67, %s81
    %p83 = scmp.eq.s32.totalorder %s15, 0
    %p84 = por %p82, %p83
    %s85 = ssub.s32 %s9, %s16
    %p86 = scmp.eq.s32.totalorder %s85, 0
    %s88 = sadd.s32 %s87, 1
    %s89 = scalar_select %p86, %s87, %s88
    %p92 = pneg %p86
    %p93 = scmp.eq.s32.totalorder %s9, 1
    %p94 = por %p92, %p93
    %p95 = scmp.ne.s32.totalorder %s87, %s90
    %p96 = scmp.eq.s32.totalorder %s9, 0
    %p97 = por %p95, %p96
    %p98 = scmp.ne.s32.totalorder %s87, %s90
    %p99 = scmp.eq.s32.totalorder %s14, 1
    %p100 = por %p98, %p99
    %p101 = scmp.ne.s32.totalorder %s90, %s91
    %p102 = scmp.eq.s32.totalorder %s14, 0
    %p103 = por %p101, %p102
    %p104 = scmp.ne.s32.totalorder %s90, %s91
    %p105 = scmp.eq.s32.totalorder %s15, 1
    %p106 = por %p104, %p105
    %p108 = scmp.ne.s32.totalorder %s91, %s107
    %p109 = scmp.eq.s32.totalorder %s15, 0
    %p110 = por %p108, %p109
    %p111 = scmp.le.s32.totalorder 1, %s9
    %p112 = scmp.lt.s32.totalorder %s9, 3
    %p113 = pnand %p111, %p112
    %p114 = pneg %p113
    // Predicated region
    $region9: #{dqn_forward.6} parent=5 // pred_check
      _
    $region10: #{dqn_forward.6} parent=5 // pred_check_branch
      %116 = sbr.rel (%p113) target = $region12
    $region11: #{dqn_forward.6} parent=5 // pred_region
      %s117 = ssub.s32 %s9, 1
      // Predicated region
      $region13: #{dqn_forward.6} parent=11 // pred_check
        %p118 = pneg %p56
      $region14: #{dqn_forward.6} parent=11 // pred_check_branch
        %120 = sbr.rel (%p118) target = $region16
      $region15: #{dqn_forward.6} parent=11 // pred_region
        _
      $region16: #{dqn_forward.6} parent=11 // pred_fallthru
        _
      // Predicated region
      $region17: #{dqn_forward.6} parent=11 // pred_check
        %p121 = pneg %p77
      $region18: #{dqn_forward.6} parent=11 // pred_check_branch
        %123 = sbr.rel (%p121) target = $region20
      $region19: #{dqn_forward.6} parent=11 // pred_region
        _
      $region20: #{dqn_forward.6} parent=11 // pred_fallthru
        _
    $region12: #{dqn_forward.6} parent=5 // pred_fallthru
      _
    %p124 = scmp.lt.s32.totalorder %s9, 2
    // Predicated region
    $region21: #{dqn_forward.6} parent=5 // pred_check
      %p125 = pneg %p124
    $region22: #{dqn_forward.6} parent=5 // pred_check_branch
      %127 = sbr.rel (%p125) target = $region24
    $region23: #{dqn_forward.6} parent=5 // pred_region
      // Predicated region
      $region25: #{dqn_forward.6} parent=23 // pred_check
        %p128 = pneg %p29
      $region26: #{dqn_forward.6} parent=23 // pred_check_branch
        %130 = sbr.rel (%p128) target = $region28
      $region27: #{dqn_forward.6} parent=23 // pred_region
        %s131 = smul.u32 2, %s9
        %p132 = scmp.lt.s32.totalorder %s131, 3
        %s133 = scalar_select %p132, %s131, 3
        %s134 = smul.addr %s133, 6
        %s135 = smul.addr %s134, 4
        %s136 = scalar_lea.vmem %s0, %s135
        %s137 = smul.u32 2, %s9
      $region28: #{dqn_forward.6} parent=23 // pred_fallthru
        _
    $region24: #{dqn_forward.6} parent=5 // pred_fallthru
      _
    %p138 = scmp.le.s32.totalorder 1, %s9
    %p139 = scmp.lt.s32.totalorder %s9, 3
    %p140 = pnand %p138, %p139
    %p141 = pneg %p140
    // Predicated region
    $region29: #{dqn_forward.6} parent=5 // pred_check
      _
    $region30: #{dqn_forward.6} parent=5 // pred_check_branch
      %143 = sbr.rel (%p140) target = $region32
    $region31: #{dqn_forward.6} parent=5 // pred_region
      %s144 = ssub.s32 %s9, 1
      %s145 = smul.u32 2, %s14
      %p146 = scmp.lt.s32.totalorder %s145, 3
      %s147 = scalar_select %p146, %s145, 3
      %s148 = smul.addr %s147, 6
      %s149 = smul.addr %s148, 4
      %s150 = scalar_lea.vmem %s0, %s149
      %p151 = pneg %p35
      %p152 = pneg %p32
      %p153 = pneg %p56
      %p154 = pneg %p53
      %p155 = pneg %p77
      %p156 = pneg %p74
      %p157 = pneg %p103
      %p158 = pneg %p100
      %s159 = smul.u32 2, %s14
      %p160 = scmp.lt.s32.totalorder %s159, 3
      %s161 = scalar_select %p160, %s159, 3
      %s162 = smul.addr %s161, 4
      %s163 = scalar_lea.vmem %s3, %s162
      %s164 = smul.u32 2, %s14
      %p165 = scmp.lt.s32.totalorder %s164, 3
      %s166 = scalar_select %p165, %s164, 3
      %s167 = smul.addr %s166, 6
      %s168 = smul.addr %s167, 4
      %s169 = scalar_lea.vmem %s0, %s168
      %s170 = smul.u32 2, %s14
      %s171 = smul.u32 2, %s14
      %p172 = scmp.lt.s32.totalorder %s171, 3
      %s173 = scalar_select %p172, %s171, 3
      %s174 = smul.addr %s173, 4
      %s175 = scalar_lea.vmem %s3, %s174
      %s176 = smul.u32 2, %s14
      %v178 = vld [vmem:[%s169] sm:$0xf]
      %v179 = vld [vmem:[%s169 + $0x18] sm:$0xf]
      %v182 = vunpack.c.l.b16 %v178
      %v183 = vunpack.c.l.b16 %v179
      %v184 = vpack.c.b16 %v183, %v182
      %vm186 = vcmask 523264
      %187 = vst.msk [vmem:[#allocation2] sm:$0xff] %vm186, %v184
      %v188 = vld [vmem:[%s169] sm:$0xf]
      %v189 = vld [vmem:[%s169 + $0x4] sm:$0x1]
      %v190 = vld [vmem:[%s169 + $0x18] sm:$0xf]
      %v191 = vld [vmem:[%s169 + $0x1c] sm:$0x1]
      %vm192 = vsmask.f32 3328
      %vm193 = vsmask.f32 7440
      %vm194 = vmor %vm192, %vm193
      %v196 = vshrl.u32 %v188, 16
      %v198 = vrot.slane %v196, 4
      %v199 = vshll.u32 %v188, 16
      %v201 = vrot.slane %v199, 5
      %v202 = vor.u32 %v198, %v201
      %v203 = vrot.slane %v202, 4
      %v205 = vshll.u32 %v189, 16
      %v207 = vrot.slane %v205, 5
      %v208 = vsel %vm194, %v203, %v207
      %v210 = vshrl.u32 %v190, 16
      %v212 = vrot.slane %v210, 4
      %v213 = vshll.u32 %v190, 16
      %v215 = vrot.slane %v213, 5
      %v216 = vor.u32 %v212, %v215
      %v217 = vrot.slane %v216, 4
      %v219 = vshll.u32 %v191, 16
      %v221 = vrot.slane %v219, 5
      %v222 = vsel %vm194, %v217, %v221
      %v223 = vunpack.c.l.b16 %v208
      %v224 = vunpack.c.l.b16 %v222
      %v225 = vpack.c.b16 %v224, %v223
      %226 = vrot.lane.b32.xlu0 %v225, 64
      %v227 = vpop.permute.xlu0 %226
      %vm229 = vcmask 1048064
      %230 = vst.msk [vmem:[#allocation2] sm:$0xff] %vm229, %v227
      %v231 = vld [vmem:[%s169] sm:$0xe]
      %v232 = vld [vmem:[%s169 + $0x4] sm:$0x1]
      %v233 = vld [vmem:[%s169 + $0x18] sm:$0xe]
      %v234 = vld [vmem:[%s169 + $0x1c] sm:$0x1]
      %vm239 = vcmask 1042432
      %vm240 = vcmask 1046532
      %vm241 = vmor %vm239, %vm240
      %v242 = vrot.slane %v231, 5
      %v243 = vrot.slane %v242, 4
      %v244 = vrot.slane %v232, 5
      %v245 = vsel %vm241, %v243, %v244
      %v246 = vrot.slane %v233, 5
      %v247 = vrot.slane %v246, 4
      %v248 = vrot.slane %v234, 5
      %v249 = vsel %vm241, %v247, %v248
      %v250 = vunpack.c.l.b16 %v245
      %v251 = vunpack.c.l.b16 %v249
      %v252 = vpack.c.b16 %v251, %v250
      %254 = vst.msk [vmem:[#allocation2 + $0x8] sm:$0xff] %vm186, %v252
      %s255 = scalar_lea.vmem %s169, 8
      %v256 = vld [vmem:[%s255] sm:$0xf]
      %v257 = vld [vmem:[%s255 + $0x18] sm:$0xf]
      %v260 = vunpack.c.l.b16 %v256
      %v261 = vunpack.c.l.b16 %v257
      %v262 = vpack.c.b16 %v261, %v260
      %263 = vrot.lane.b32.xlu0 %v262, 64
      %v264 = vpop.permute.xlu0 %263
      %266 = vst.msk [vmem:[#allocation2 + $0x8] sm:$0xff] %vm229, %v264
      %v267 = vld [vmem:[%s255] sm:$0xf]
      %v268 = vld [vmem:[%s255 + $0x4] sm:$0x1]
      %v269 = vld [vmem:[%s255 + $0x18] sm:$0xf]
      %v270 = vld [vmem:[%s255 + $0x1c] sm:$0x1]
      %v272 = vshrl.u32 %v267, 16
      %v274 = vrot.slane %v272, 4
      %v275 = vshll.u32 %v267, 16
      %v277 = vrot.slane %v275, 5
      %v278 = vor.u32 %v274, %v277
      %v279 = vrot.slane %v278, 4
      %v281 = vshll.u32 %v268, 16
      %v283 = vrot.slane %v281, 5
      %v284 = vsel %vm194, %v279, %v283
      %v286 = vshrl.u32 %v269, 16
      %v288 = vrot.slane %v286, 4
      %v289 = vshll.u32 %v269, 16
      %v291 = vrot.slane %v289, 5
      %v292 = vor.u32 %v288, %v291
      %v293 = vrot.slane %v292, 4
      %v295 = vshll.u32 %v270, 16
      %v297 = vrot.slane %v295, 5
      %v298 = vsel %vm194, %v293, %v297
      %v299 = vunpack.c.l.b16 %v284
      %v300 = vunpack.c.l.b16 %v298
      %v301 = vpack.c.b16 %v300, %v299
      %303 = vst.msk [vmem:[#allocation2 + $0x10] sm:$0xff] %vm186, %v301
      %v304 = vld [vmem:[%s255] sm:$0xe]
      %v305 = vld [vmem:[%s255 + $0x4] sm:$0x1]
      %v306 = vld [vmem:[%s255 + $0x18] sm:$0xe]
      %v307 = vld [vmem:[%s255 + $0x1c] sm:$0x1]
      %v312 = vrot.slane %v304, 5
      %v313 = vrot.slane %v312, 4
      %v314 = vrot.slane %v305, 5
      %v315 = vsel %vm241, %v313, %v314
      %v316 = vrot.slane %v306, 5
      %v317 = vrot.slane %v316, 4
      %v318 = vrot.slane %v307, 5
      %v319 = vsel %vm241, %v317, %v318
      %v320 = vunpack.c.l.b16 %v315
      %v321 = vunpack.c.l.b16 %v319
      %v322 = vpack.c.b16 %v321, %v320
      %323 = vrot.lane.b32.xlu0 %v322, 64
      %v324 = vpop.permute.xlu0 %323
      %326 = vst.msk [vmem:[#allocation2 + $0x10] sm:$0xff] %vm229, %v324
      %s327 = scalar_lea.vmem %s169, 16
      %v328 = vld [vmem:[%s327] sm:$0xf]
      %v329 = vld [vmem:[%s327 + $0x18] sm:$0xf]
      %v332 = vunpack.c.l.b16 %v328
      %v333 = vunpack.c.l.b16 %v329
      %v334 = vpack.c.b16 %v333, %v332
      %336 = vst.msk [vmem:[#allocation2 + $0x18] sm:$0xff] %vm186, %v334
      %v337 = vld [vmem:[%s327] sm:$0xf]
      %v338 = vld [vmem:[%s327 + $0x4] sm:$0x1]
      %v339 = vld [vmem:[%s327 + $0x18] sm:$0xf]
      %v340 = vld [vmem:[%s327 + $0x1c] sm:$0x1]
      %v342 = vshrl.u32 %v337, 16
      %v344 = vrot.slane %v342, 4
      %v345 = vshll.u32 %v337, 16
      %v347 = vrot.slane %v345, 5
      %v348 = vor.u32 %v344, %v347
      %v349 = vrot.slane %v348, 4
      %v351 = vshll.u32 %v338, 16
      %v353 = vrot.slane %v351, 5
      %v354 = vsel %vm194, %v349, %v353
      %v356 = vshrl.u32 %v339, 16
      %v358 = vrot.slane %v356, 4
      %v359 = vshll.u32 %v339, 16
      %v361 = vrot.slane %v359, 5
      %v362 = vor.u32 %v358, %v361
      %v363 = vrot.slane %v362, 4
      %v365 = vshll.u32 %v340, 16
      %v367 = vrot.slane %v365, 5
      %v368 = vsel %vm194, %v363, %v367
      %v369 = vunpack.c.l.b16 %v354
      %v370 = vunpack.c.l.b16 %v368
      %v371 = vpack.c.b16 %v370, %v369
      %372 = vrot.lane.b32.xlu0 %v371, 64
      %v373 = vpop.permute.xlu0 %372
      %375 = vst.msk [vmem:[#allocation2 + $0x18] sm:$0xff] %vm229, %v373
      %v376 = vld [vmem:[%s327] sm:$0xe]
      %v377 = vld [vmem:[%s327 + $0x4] sm:$0x1]
      %v378 = vld [vmem:[%s327 + $0x18] sm:$0xe]
      %v379 = vld [vmem:[%s327 + $0x1c] sm:$0x1]
      %v384 = vrot.slane %v376, 5
      %v385 = vrot.slane %v384, 4
      %v386 = vrot.slane %v377, 5
      %v387 = vsel %vm241, %v385, %v386
      %v388 = vrot.slane %v378, 5
      %v389 = vrot.slane %v388, 4
      %v390 = vrot.slane %v379, 5
      %v391 = vsel %vm241, %v389, %v390
      %v392 = vunpack.c.l.b16 %v387
      %v393 = vunpack.c.l.b16 %v391
      %v394 = vpack.c.b16 %v393, %v392
      %396 = vst.msk [vmem:[#allocation2 + $0x20] sm:$0xff] %vm186, %v394
      %v397 = vld [vmem:[#allocation2] sm:$0xff]
      %v398 = vld [vmem:[#allocation2 + $0x8] sm:$0xff]
      %v399 = vld [vmem:[#allocation2 + $0x10] sm:$0xff]
      %v400 = vld [vmem:[#allocation2 + $0x18] sm:$0xff]
      %v401 = vld [vmem:[#allocation2 + $0x20] sm:$0xff]
      %v402 = vld [vmem:[%s1] sm:$0xf]
      %v403 = vld [vmem:[%s1 + $0x4] sm:$0xf]
      %v404 = vld [vmem:[%s1 + $0x8] sm:$0xf]
      %v405 = vld [vmem:[%s1 + $0xc] sm:$0xf]
      %v406 = vld [vmem:[%s1 + $0x10] sm:$0xf]
      %v407 = vld [vmem:[%s1 + $0x14] sm:$0xf]
      %v408 = vld [vmem:[%s1 + $0x18] sm:$0xf]
      %v409 = vld [vmem:[%s1 + $0x1c] sm:$0xf]
      %v410 = vld [vmem:[%s1 + $0x20] sm:$0xf]
      %v411 = vld [vmem:[%s1 + $0x24] sm:$0xf]
      %v412 = vld [vmem:[%s1 + $0x28] sm:$0xf]
      %v413 = vld [vmem:[%s1 + $0x2c] sm:$0xf]
      %v414 = vld [vmem:[%s1 + $0x30] sm:$0xf]
      %v415 = vld [vmem:[%s1 + $0x34] sm:$0xf]
      %v416 = vld [vmem:[%s1 + $0x38] sm:$0xf]
      %v417 = vld [vmem:[%s1 + $0x3c] sm:$0xf]
      %v418 = vld [vmem:[%s1 + $0x40] sm:$0xf]
      %v419 = vld [vmem:[%s1 + $0x44] sm:$0xf]
      %v420 = vld [vmem:[%s1 + $0x48] sm:$0xf]
      %v421 = vld [vmem:[%s1 + $0x4c] sm:$0xf]
      %v422 = vld [vmem:[%s1 + $0x50] sm:$0xf]
      %v423 = vld [vmem:[%s1 + $0x54] sm:$0xf]
      %v424 = vld [vmem:[%s1 + $0x58] sm:$0xf]
      %v425 = vld [vmem:[%s1 + $0x5c] sm:$0xf]
      %v426 = vld [vmem:[%s1 + $0x60] sm:$0xf]
      %v427 = vld [vmem:[%s1 + $0x64] sm:$0xf]
      %v428 = vld [vmem:[%s1 + $0x68] sm:$0xf]
      %v429 = vld [vmem:[%s1 + $0x6c] sm:$0xf]
      %v430 = vld [vmem:[%s1 + $0x70] sm:$0xf]
      %v431 = vld [vmem:[%s1 + $0x74] sm:$0xf]
      %v432 = vld [vmem:[%s1 + $0x78] sm:$0xf]
      %v433 = vld [vmem:[%s1 + $0x7c] sm:$0xf]
      %v434 = vld [vmem:[%s1 + $0x80] sm:$0xf]
      %v435 = vld [vmem:[%s1 + $0x84] sm:$0xf]
      %v436 = vld [vmem:[%s1 + $0x88] sm:$0xf]
      %v437 = vld [vmem:[%s1 + $0x8c] sm:$0xf]
      %v438 = vld [vmem:[%s1 + $0x90] sm:$0xf]
      %v439 = vld [vmem:[%s1 + $0x94] sm:$0xf]
      %v440 = vld [vmem:[%s1 + $0x98] sm:$0xf]
      %v441 = vld [vmem:[%s1 + $0x9c] sm:$0xf]
      %v442 = vld [vmem:[%s1 + $0xa0] sm:$0xf]
      %v443 = vld [vmem:[%s1 + $0xa4] sm:$0xf]
      %v444 = vld [vmem:[%s1 + $0xa8] sm:$0xf]
      %v445 = vld [vmem:[%s1 + $0xac] sm:$0xf]
      %v446 = vld [vmem:[%s1 + $0xb0] sm:$0xf]
      %v447 = vld [vmem:[%s1 + $0xb4] sm:$0xf]
      %v448 = vld [vmem:[%s1 + $0xb8] sm:$0xf]
      %v449 = vld [vmem:[%s1 + $0xbc] sm:$0xf]
      %v450 = vld [vmem:[%s1 + $0xc0] sm:$0xf]
      %v451 = vld [vmem:[%s1 + $0xc4] sm:$0xf]
      %v452 = vld [vmem:[%s1 + $0xc8] sm:$0xf]
      %v453 = vld [vmem:[%s1 + $0xcc] sm:$0xf]
      %v454 = vld [vmem:[%s1 + $0xd0] sm:$0xf]
      %v455 = vld [vmem:[%s1 + $0xd4] sm:$0xf]
      %v456 = vld [vmem:[%s1 + $0xd8] sm:$0xf]
      %v457 = vld [vmem:[%s1 + $0xdc] sm:$0xf]
      %v458 = vld [vmem:[%s1 + $0xe0] sm:$0xf]
      %v459 = vld [vmem:[%s1 + $0xe4] sm:$0xf]
      %v460 = vld [vmem:[%s1 + $0xe8] sm:$0xf]
      %v461 = vld [vmem:[%s1 + $0xec] sm:$0xf]
      %v462 = vld [vmem:[%s1 + $0xf0] sm:$0xf]
      %v463 = vld [vmem:[%s1 + $0xf4] sm:$0xf]
      %v464 = vld [vmem:[%s1 + $0xf8] sm:$0xf]
      %v465 = vld [vmem:[%s1 + $0xfc] sm:$0xf]
      %v466 = vld [vmem:[%s1 + $0x100] sm:$0xf]
      %v467 = vld [vmem:[%s1 + $0x104] sm:$0xf]
      %v468 = vld [vmem:[%s1 + $0x108] sm:$0xf]
      %v469 = vld [vmem:[%s1 + $0x10c] sm:$0xf]
      %v470 = vld [vmem:[%s1 + $0x110] sm:$0xf]
      %v471 = vld [vmem:[%s1 + $0x114] sm:$0xf]
      %v472 = vld [vmem:[%s1 + $0x118] sm:$0xf]
      %v473 = vld [vmem:[%s1 + $0x11c] sm:$0xf]
      %v474 = vld [vmem:[%s2] sm:$0x1]
      %v476 = vlaneseq
      %v477 = vshrl.u32 %v476, 7
      %v478 = vsub.s32 0, %v477
      %v479 = vrot.slane %v474, %v478
      %v553 = vunpack.c.l.b16 %v402
      %v554 = vunpack.c.l.b16 %v403
      %v555 = vunpack.c.l.b16 %v404
      %v556 = vunpack.c.l.b16 %v405
      %v557 = vunpack.c.l.b16 %v406
      %v558 = vunpack.c.l.b16 %v407
      %v559 = vunpack.c.l.b16 %v408
      %v560 = vunpack.c.l.b16 %v409
      %v561 = vunpack.c.l.b16 %v410
      %v562 = vunpack.c.l.b16 %v411
      %v563 = vunpack.c.l.b16 %v412
      %v564 = vunpack.c.l.b16 %v413
      %v565 = vunpack.c.l.b16 %v414
      %v566 = vunpack.c.l.b16 %v415
      %v567 = vunpack.c.l.b16 %v416
      %v568 = vunpack.c.l.b16 %v417
      %v569 = vunpack.c.l.b16 %v418
      %v570 = vunpack.c.l.b16 %v419
      %v571 = vunpack.c.l.b16 %v420
      %v572 = vunpack.c.l.b16 %v421
      %v573 = vunpack.c.l.b16 %v422
      %v574 = vunpack.c.l.b16 %v423
      %v575 = vunpack.c.l.b16 %v424
      %v576 = vunpack.c.l.b16 %v425
      %v577 = vunpack.c.l.b16 %v426
      %v578 = vunpack.c.l.b16 %v427
      %v579 = vunpack.c.l.b16 %v428
      %v580 = vunpack.c.l.b16 %v429
      %v581 = vunpack.c.l.b16 %v430
      %v582 = vunpack.c.l.b16 %v431
      %v583 = vunpack.c.l.b16 %v432
      %v584 = vunpack.c.l.b16 %v433
      %v585 = vunpack.c.l.b16 %v434
      %v586 = vunpack.c.l.b16 %v435
      %v587 = vunpack.c.l.b16 %v436
      %v588 = vunpack.c.l.b16 %v437
      %v589 = vunpack.c.l.b16 %v438
      %v590 = vunpack.c.l.b16 %v439
      %v591 = vunpack.c.l.b16 %v440
      %v592 = vunpack.c.l.b16 %v441
      %v593 = vunpack.c.l.b16 %v442
      %v594 = vunpack.c.l.b16 %v443
      %v595 = vunpack.c.l.b16 %v444
      %v596 = vunpack.c.l.b16 %v445
      %v597 = vunpack.c.l.b16 %v446
      %v598 = vunpack.c.l.b16 %v447
      %v599 = vunpack.c.l.b16 %v448
      %v600 = vunpack.c.l.b16 %v449
      %v601 = vunpack.c.l.b16 %v450
      %v602 = vunpack.c.l.b16 %v451
      %v603 = vunpack.c.l.b16 %v452
      %v604 = vunpack.c.l.b16 %v453
      %v605 = vunpack.c.l.b16 %v454
      %v606 = vunpack.c.l.b16 %v455
      %v607 = vunpack.c.l.b16 %v456
      %v608 = vunpack.c.l.b16 %v457
      %v609 = vunpack.c.l.b16 %v458
      %v610 = vunpack.c.l.b16 %v459
      %v611 = vunpack.c.l.b16 %v460
      %v612 = vunpack.c.l.b16 %v461
      %v613 = vunpack.c.l.b16 %v462
      %v614 = vunpack.c.l.b16 %v463
      %v615 = vunpack.c.l.b16 %v464
      %v616 = vunpack.c.l.b16 %v465
      %v617 = vunpack.c.l.b16 %v466
      %v618 = vunpack.c.l.b16 %v467
      %v619 = vunpack.c.l.b16 %v468
      %v620 = vunpack.c.l.b16 %v469
      %v621 = vunpack.c.l.b16 %v470
      %v622 = vunpack.c.l.b16 %v471
      %v623 = vunpack.c.l.b16 %v472
      %v624 = vunpack.c.l.b16 %v473
      %v625 = vpack.c.b16 %v554, %v553
      %v626 = vpack.c.b16 %v556, %v555
      %v627 = vpack.c.b16 %v558, %v557
      %v628 = vpack.c.b16 %v560, %v559
      %v629 = vpack.c.b16 %v562, %v561
      %v630 = vpack.c.b16 %v564, %v563
      %v631 = vpack.c.b16 %v566, %v565
      %v632 = vpack.c.b16 %v568, %v567
      %v633 = vpack.c.b16 %v570, %v569
      %v634 = vpack.c.b16 %v572, %v571
      %v635 = vpack.c.b16 %v574, %v573
      %v636 = vpack.c.b16 %v576, %v575
      %v637 = vpack.c.b16 %v578, %v577
      %v638 = vpack.c.b16 %v580, %v579
      %v639 = vpack.c.b16 %v582, %v581
      %v640 = vpack.c.b16 %v584, %v583
      %v641 = vpack.c.b16 %v586, %v585
      %v642 = vpack.c.b16 %v588, %v587
      %v643 = vpack.c.b16 %v590, %v589
      %v644 = vpack.c.b16 %v592, %v591
      %v645 = vpack.c.b16 %v594, %v593
      %v646 = vpack.c.b16 %v596, %v595
      %v647 = vpack.c.b16 %v598, %v597
      %v648 = vpack.c.b16 %v600, %v599
      %v649 = vpack.c.b16 %v602, %v601
      %v650 = vpack.c.b16 %v604, %v603
      %v651 = vpack.c.b16 %v606, %v605
      %v652 = vpack.c.b16 %v608, %v607
      %v653 = vpack.c.b16 %v610, %v609
      %v654 = vpack.c.b16 %v612, %v611
      %v655 = vpack.c.b16 %v614, %v613
      %v656 = vpack.c.b16 %v616, %v615
      %v657 = vpack.c.b16 %v618, %v617
      %v658 = vpack.c.b16 %v620, %v619
      %v659 = vpack.c.b16 %v622, %v621
      %v660 = vpack.c.b16 %v624, %v623
      %v698 = vsel %vm186, %v401, 0
      %700 = vmatprep.subr.bf16.mxu0 0
      %701 = vmatpush1.bf16.msra.mxu0 %v625
      %702 = vmatprep.subr.bf16.mxu0 0
      %703 = vmatpush1.bf16.msra.mxu0 %v626
      %704 = vmatprep.subr.bf16.mxu0 0
      %705 = vmatpush1.bf16.msra.mxu0 %v627
      %706 = vmatprep.subr.bf16.mxu0 0
      %707 = vmatpush1.bf16.msra.mxu0 %v628
      %708 = vmatprep.subr.bf16.mxu0 0
      %709 = vmatpush1.bf16.msra.mxu0 %v629
      %710 = vmatprep.subr.bf16.mxu0 0
      %711 = vmatpush1.bf16.msra.mxu0 %v630
      %712 = vmatprep.subr.bf16.mxu0 0
      %713 = vmatpush1.bf16.msra.mxu0 %v631
      %714 = vmatprep.subr.bf16.mxu0 0
      %715 = vmatpush1.bf16.msra.mxu0 %v632
      %716 = vmatprep.subr.bf16.mxu0 0
      %717 = vmatpush1.bf16.msra.mxu0 %v633
      %718 = vmatprep.subr.bf16.mxu0 0
      %719 = vmatpush1.bf16.msra.mxu0 %v634
      %720 = vmatprep.subr.bf16.mxu0 0
      %721 = vmatpush1.bf16.msra.mxu0 %v635
      %722 = vmatprep.subr.bf16.mxu0 0
      %723 = vmatpush1.bf16.msra.mxu0 %v636
      %724 = vmatprep.subr.bf16.mxu0 0
      %725 = vmatpush1.bf16.msra.mxu0 %v637
      %726 = vmatprep.subr.bf16.mxu0 0
      %727 = vmatpush1.bf16.msra.mxu0 %v638
      %728 = vmatprep.subr.bf16.mxu0 0
      %729 = vmatpush1.bf16.msra.mxu0 %v639
      %730 = vmatprep.subr.bf16.mxu0 0
      %731 = vmatpush1.bf16.msra.mxu0 %v640
      %732 = vmatprep.mubr.bf16.mxu0 %v398
      %733 = vmatmul.mubr.bf16.gmra.mrb[0].mxu0 %v397
      %v734 = vpop.f32.mrb[0].mxu0
      %v735 = vadd.f32 %v479, %v734
      %v736 = vpop.f32.mrb[0].mxu0
      %v737 = vpop.f32.mrb[0].mxu0
      %v738 = vadd.f32 %v479, %v737
      %v739 = vpop.f32.mrb[0].mxu0
      %740 = vdwg.mxu0
      %741 = vmatprep.subr.bf16.mxu0 0
      %742 = vmatpush1.bf16.msra.mxu0 %v641
      %743 = vmatprep.subr.bf16.mxu0 0
      %744 = vmatpush1.bf16.msra.mxu0 %v642
      %745 = vmatprep.subr.bf16.mxu0 0
      %746 = vmatpush1.bf16.msra.mxu0 %v643
      %747 = vmatprep.subr.bf16.mxu0 0
      %748 = vmatpush1.bf16.msra.mxu0 %v644
      %749 = vmatprep.subr.bf16.mxu0 0
      %750 = vmatpush1.bf16.msra.mxu0 %v645
      %751 = vmatprep.subr.bf16.mxu0 0
      %752 = vmatpush1.bf16.msra.mxu0 %v646
      %753 = vmatprep.subr.bf16.mxu0 0
      %754 = vmatpush1.bf16.msra.mxu0 %v647
      %755 = vmatprep.subr.bf16.mxu0 0
      %756 = vmatpush1.bf16.msra.mxu0 %v648
      %757 = vmatprep.subr.bf16.mxu0 0
      %758 = vmatpush1.bf16.msra.mxu0 %v649
      %759 = vmatprep.subr.bf16.mxu0 0
      %760 = vmatpush1.bf16.msra.mxu0 %v650
      %761 = vmatprep.subr.bf16.mxu0 0
      %762 = vmatpush1.bf16.msra.mxu0 %v651
      %763 = vmatprep.subr.bf16.mxu0 0
      %764 = vmatpush1.bf16.msra.mxu0 %v652
      %765 = vmatprep.subr.bf16.mxu0 0
      %766 = vmatpush1.bf16.msra.mxu0 %v653
      %767 = vmatprep.subr.bf16.mxu0 0
      %768 = vmatpush1.bf16.msra.mxu0 %v654
      %769 = vmatprep.subr.bf16.mxu0 0
      %770 = vmatpush1.bf16.msra.mxu0 %v655
      %771 = vmatprep.subr.bf16.mxu0 0
      %772 = vmatpush1.bf16.msra.mxu0 %v656
      %773 = vmatprep.mubr.bf16.mxu0 %v400
      %774 = vmatmul.mubr.bf16.gmra.mrb[0].mxu0 %v399
      %v775 = vpop.f32.mrb[0].mxu0
      %v776 = vadd.f32 %v735, %v775
      %v777 = vpop.f32.mrb[0].mxu0
      %v778 = vpop.f32.mrb[0].mxu0
      %v779 = vadd.f32 %v738, %v778
      %v780 = vpop.f32.mrb[0].mxu0
      %781 = vdwg.mxu0
      %782 = vmatprep.subr.bf16.mxu0 0
      %783 = vmatpush1.bf16.msra.mxu0 %v657
      %784 = vmatprep.subr.bf16.mxu0 0
      %785 = vmatpush1.bf16.msra.mxu0 %v658
      %786 = vmatprep.subr.bf16.mxu0 0
      %787 = vmatpush1.bf16.msra.mxu0 %v659
      %788 = vmatprep.subr.bf16.mxu0 0
      %789 = vmatpush1.bf16.msra.mxu0 %v660
      %790 = vmatprep.subr.bf16.mxu0 0
      %791 = vmatpush1.bf16.msra.mxu0 0
      %792 = vmatprep.subr.bf16.mxu0 0
      %793 = vmatpush1.bf16.msra.mxu0 0
      %794 = vmatprep.subr.bf16.mxu0 0
      %795 = vmatpush1.bf16.msra.mxu0 0
      %796 = vmatprep.subr.bf16.mxu0 0
      %797 = vmatpush1.bf16.msra.mxu0 0
      %798 = vmatprep.subr.bf16.mxu0 0
      %799 = vmatpush1.bf16.msra.mxu0 0
      %800 = vmatprep.subr.bf16.mxu0 0
      %801 = vmatpush1.bf16.msra.mxu0 0
      %802 = vmatprep.subr.bf16.mxu0 0
      %803 = vmatpush1.bf16.msra.mxu0 0
      %804 = vmatprep.subr.bf16.mxu0 0
      %805 = vmatpush1.bf16.msra.mxu0 0
      %806 = vmatprep.subr.bf16.mxu0 0
      %807 = vmatpush1.bf16.msra.mxu0 0
      %808 = vmatprep.subr.bf16.mxu0 0
      %809 = vmatpush1.bf16.msra.mxu0 0
      %810 = vmatprep.subr.bf16.mxu0 0
      %811 = vmatpush1.bf16.msra.mxu0 0
      %812 = vmatprep.subr.bf16.mxu0 0
      %813 = vmatpush1.bf16.msra.mxu0 0
      %814 = vmatprep.mubr.bf16.mxu0 0
      %815 = vmatmul.mubr.bf16.gmra.mrb[0].mxu0 %v698
      %v816 = vpop.f32.mrb[0].mxu0
      %v817 = vadd.f32 %v776, %v816
      %v818 = vpop.f32.mrb[0].mxu0
      %v819 = vpop.f32.mrb[0].mxu0
      %v820 = vadd.f32 %v779, %v819
      %v821 = vpop.f32.mrb[0].mxu0
      %822 = vdwg.mxu0
      %v823 = vmax.f32 %v817, 0.0
      %v824 = vmax.f32 %v820, 0.0
      %v825 = vpack.c.bf16 %v824, %v823
      %v827 = vunpack.c.l.b16 %v825
      %v828 = vunpack.c.h.b16 %v825
      %v829 = vpack.c.b16 %v827, %v827
      %v830 = vpack.c.b16 %v828, %v828
      %vm833 = vcmask 519168
      %834 = vst.msk [vmem:[%s175] sm:$0xf] %vm833, %v829
      %835 = vst.msk [vmem:[%s175 + $0x4] sm:$0xf] %vm833, %v830
      %s836 = smul.u32 2, %s14
      %p837 = scmp.lt.s32.totalorder %s836, 3
      %s838 = scalar_select %p837, %s836, 3
      %s839 = smul.addr %s838, 4
      %s840 = scalar_lea.vmem %s3, %s839
      // Predicated region
      $region33: #{dqn_forward.6} parent=31 // pred_check
        %p841 = pneg %p100
      $region34: #{dqn_forward.6} parent=31 // pred_check_branch
        %843 = sbr.rel (%p841) target = $region36
      $region35: #{dqn_forward.6} parent=31 // pred_region
        %s844 = smul.u32 2, %s14
      $region36: #{dqn_forward.6} parent=31 // pred_fallthru
        _
    $region32: #{dqn_forward.6} parent=5 // pred_fallthru
      _
    %p845 = scmp.le.s32.totalorder 2, %s9
    // Predicated region
    $region37: #{dqn_forward.6} parent=5 // pred_check
      %p846 = pneg %p845
    $region38: #{dqn_forward.6} parent=5 // pred_check_branch
      %848 = sbr.rel (%p846) target = $region40
    $region39: #{dqn_forward.6} parent=5 // pred_region
      %s849 = ssub.s32 %s9, 2
      // Predicated region
      $region41: #{dqn_forward.6} parent=39 // pred_check
        %p850 = pneg %p106
      $region42: #{dqn_forward.6} parent=39 // pred_check_branch
        %852 = sbr.rel (%p850) target = $region44
      $region43: #{dqn_forward.6} parent=39 // pred_region
        %s853 = smul.u32 2, %s15
        %p854 = scmp.lt.s32.totalorder %s853, 3
        %s855 = scalar_select %p854, %s853, 3
        %s856 = smul.addr %s855, 4
        %s857 = scalar_lea.vmem %s3, %s856
      $region44: #{dqn_forward.6} parent=39 // pred_fallthru
        _
    $region40: #{dqn_forward.6} parent=5 // pred_fallthru
      _
  $region6: #{dqn_forward.6} parent=0 // loop_footer
    %s13 = sadd.s32 1, %s9
  $region7: #{dqn_forward.6} parent=0 // loop_footer_branch
    %8 = sbr.rel target = $region3
  $region8: #{dqn_forward.6} parent=0 // loop_exit
    _

// kernel: dqn_forward.7
$region0: #{dqn_forward.7}
  #allocation0 [shape = 'u32[]', space=smem, size = 0x4, offset = 0x4, fixed_abs, tag = 'smem constant byte address 0x4 - core index']
  #allocation1 [shape = 'u32[144,128]{1,0:T(1,128)}', space=vmem, size = 0x12000, scoped, tag = 'internal scratch']
  %s0 = inlined_call_operand.vmem [shape: bf16[4,64], index: 0, kind: input, shape index: {}]
  %s1 = inlined_call_operand.vmem [shape: bf16[64,128], index: 1, kind: input, shape index: {}]
  %s2 = inlined_call_operand.vmem [shape: f32[1,128], index: 2, kind: input, shape index: {}]
  %s3 = inlined_call_operand.vmem [shape: bf16[128,128], index: 3, kind: input, shape index: {}]
  %s4 = inlined_call_operand.vmem [shape: f32[1,128], index: 4, kind: input, shape index: {}]
  %s5 = inlined_call_operand.hbm [shape: f32[4,128], index: 5, kind: output, shape index: {}]
  %s6 = sld [smem:[#allocation0]]
  $region30: #{dqn_forward.7} parent=0
    _
  %s8 = ssub.s32 1, %s6
  %s9 = scalar_select 0, %s8, %s6
  $region1: #{dqn_forward.7} parent=0
    #allocation2 [shape = 'u8[2048]{0}', space=vmem, size = 0x800, scoped, tag = 'output window, operand 0, single buffered']
    #allocation3 [shape = 's32[1]{0}', space=sflag, size = 0x4, scoped, tag = 'scoped memory for dqn_forward.7']
    %10 = vsyncpa [#allocation3], 0
    // Predicated region
    $region2: #{dqn_forward.7} parent=1 // pred_check
      _
    $region3: #{dqn_forward.7} parent=1 // pred_check_branch
      %12 = sbr.rel (0) target = $region5
    $region4: #{dqn_forward.7} parent=1 // pred_region
      _
    $region5: #{dqn_forward.7} parent=1 // pred_fallthru
      _
    // Predicated region
    $region6: #{dqn_forward.7} parent=1 // pred_check
      _
    $region7: #{dqn_forward.7} parent=1 // pred_check_branch
      %14 = sbr.rel (0) target = $region9
    $region8: #{dqn_forward.7} parent=1 // pred_region
      _
    $region9: #{dqn_forward.7} parent=1 // pred_fallthru
      _
    // Predicated region
    $region10: #{dqn_forward.7} parent=1 // pred_check
      _
    $region11: #{dqn_forward.7} parent=1 // pred_check_branch
      %16 = sbr.rel (0) target = $region13
    $region12: #{dqn_forward.7} parent=1 // pred_region
      _
    $region13: #{dqn_forward.7} parent=1 // pred_fallthru
      _
    // Predicated region
    $region14: #{dqn_forward.7} parent=1 // pred_check
      _
    $region15: #{dqn_forward.7} parent=1 // pred_check_branch
      %18 = sbr.rel (0) target = $region17
    $region16: #{dqn_forward.7} parent=1 // pred_region
      _
    $region17: #{dqn_forward.7} parent=1 // pred_fallthru
      _
    // Predicated region
    $region18: #{dqn_forward.7} parent=1 // pred_check
      _
    $region19: #{dqn_forward.7} parent=1 // pred_check_branch
      %20 = sbr.rel (0) target = $region21
    $region20: #{dqn_forward.7} parent=1 // pred_region
      _
    $region21: #{dqn_forward.7} parent=1 // pred_fallthru
      _
    %v22 = vld [vmem:[%s0] sm:$0x3]
    %v23 = vld [vmem:[%s1] sm:$0xf]
    %v24 = vld [vmem:[%s1 + $0x4] sm:$0xf]
    %v25 = vld [vmem:[%s1 + $0x8] sm:$0xf]
    %v26 = vld [vmem:[%s1 + $0xc] sm:$0xf]
    %v27 = vld [vmem:[%s1 + $0x10] sm:$0xf]
    %v28 = vld [vmem:[%s1 + $0x14] sm:$0xf]
    %v29 = vld [vmem:[%s1 + $0x18] sm:$0xf]
    %v30 = vld [vmem:[%s1 + $0x1c] sm:$0xf]
    %v31 = vld [vmem:[%s2] sm:$0x1]
    %v33 = vlaneseq
    %v34 = vshrl.u32 %v33, 7
    %v35 = vsub.s32 0, %v34
    %v36 = vrot.slane %v31, %v35
    %v46 = vunpack.c.l.b16 %v23
    %v47 = vunpack.c.l.b16 %v24
    %v48 = vunpack.c.l.b16 %v25
    %v49 = vunpack.c.l.b16 %v26
    %v50 = vunpack.c.l.b16 %v27
    %v51 = vunpack.c.l.b16 %v28
    %v52 = vunpack.c.l.b16 %v29
    %v53 = vunpack.c.l.b16 %v30
    %v54 = vpack.c.b16 %v47, %v46
    %v55 = vpack.c.b16 %v49, %v48
    %v56 = vpack.c.b16 %v51, %v50
    %v57 = vpack.c.b16 %v53, %v52
    %vm62 = vcmask 523264
    %v64 = vsel %vm62, %v22, 0
    %66 = vmatprep.subr.bf16.mxu0 0
    %67 = vmatpush1.bf16.msra.mxu0 %v54
    %68 = vmatprep.subr.bf16.mxu0 0
    %69 = vmatpush1.bf16.msra.mxu0 %v55
    %70 = vmatprep.subr.bf16.mxu0 0
    %71 = vmatpush1.bf16.msra.mxu0 %v56
    %72 = vmatprep.subr.bf16.mxu0 0
    %73 = vmatpush1.bf16.msra.mxu0 %v57
    %74 = vmatprep.subr.bf16.mxu0 0
    %75 = vmatpush1.bf16.msra.mxu0 0
    %76 = vmatprep.subr.bf16.mxu0 0
    %77 = vmatpush1.bf16.msra.mxu0 0
    %78 = vmatprep.subr.bf16.mxu0 0
    %79 = vmatpush1.bf16.msra.mxu0 0
    %80 = vmatprep.subr.bf16.mxu0 0
    %81 = vmatpush1.bf16.msra.mxu0 0
    %82 = vmatprep.subr.bf16.mxu0 0
    %83 = vmatpush1.bf16.msra.mxu0 0
    %84 = vmatprep.subr.bf16.mxu0 0
    %85 = vmatpush1.bf16.msra.mxu0 0
    %86 = vmatprep.subr.bf16.mxu0 0
    %87 = vmatpush1.bf16.msra.mxu0 0
    %88 = vmatprep.subr.bf16.mxu0 0
    %89 = vmatpush1.bf16.msra.mxu0 0
    %90 = vmatprep.subr.bf16.mxu0 0
    %91 = vmatpush1.bf16.msra.mxu0 0
    %92 = vmatprep.subr.bf16.mxu0 0
    %93 = vmatpush1.bf16.msra.mxu0 0
    %94 = vmatprep.subr.bf16.mxu0 0
    %95 = vmatpush1.bf16.msra.mxu0 0
    %96 = vmatprep.subr.bf16.mxu0 0
    %97 = vmatpush1.bf16.msra.mxu0 0
    %98 = vmatprep.mubr.bf16.mxu0 0
    %99 = vmatmul.mubr.bf16.gmra.mrb[0].mxu0 %v64
    %v100 = vpop.f32.mrb[0].mxu0
    %v101 = vadd.f32 %v36, %v100
    %v102 = vpop.f32.mrb[0].mxu0
    %v103 = vpop.f32.mrb[0].mxu0
    %v104 = vpop.f32.mrb[0].mxu0
    %105 = vdwg.mxu0
    %v106 = vmax.f32 %v101, 0.0
    %v107 = vpack.c.bf16 %v106, %v106
    %v108 = vld [vmem:[%s3] sm:$0xf]
    %v109 = vld [vmem:[%s3 + $0x4] sm:$0xf]
    %v110 = vld [vmem:[%s3 + $0x8] sm:$0xf]
    %v111 = vld [vmem:[%s3 + $0xc] sm:$0xf]
    %v112 = vld [vmem:[%s3 + $0x10] sm:$0xf]
    %v113 = vld [vmem:[%s3 + $0x14] sm:$0xf]
    %v114 = vld [vmem:[%s3 + $0x18] sm:$0xf]
    %v115 = vld [vmem:[%s3 + $0x1c] sm:$0xf]
    %v116 = vld [vmem:[%s3 + $0x20] sm:$0xf]
    %v117 = vld [vmem:[%s3 + $0x24] sm:$0xf]
    %v118 = vld [vmem:[%s3 + $0x28] sm:$0xf]
    %v119 = vld [vmem:[%s3 + $0x2c] sm:$0xf]
    %v120 = vld [vmem:[%s3 + $0x30] sm:$0xf]
    %v121 = vld [vmem:[%s3 + $0x34] sm:$0xf]
    %v122 = vld [vmem:[%s3 + $0x38] sm:$0xf]
    %v123 = vld [vmem:[%s3 + $0x3c] sm:$0xf]
    %v124 = vld [vmem:[%s4] sm:$0x1]
    %v126 = vlaneseq
    %v127 = vshrl.u32 %v126, 7
    %v128 = vsub.s32 0, %v127
    %v129 = vrot.slane %v124, %v128
    %v147 = vunpack.c.l.b16 %v108
    %v148 = vunpack.c.l.b16 %v109
    %v149 = vunpack.c.l.b16 %v110
    %v150 = vunpack.c.l.b16 %v111
    %v151 = vunpack.c.l.b16 %v112
    %v152 = vunpack.c.l.b16 %v113
    %v153 = vunpack.c.l.b16 %v114
    %v154 = vunpack.c.l.b16 %v115
    %v155 = vunpack.c.l.b16 %v116
    %v156 = vunpack.c.l.b16 %v117
    %v157 = vunpack.c.l.b16 %v118
    %v158 = vunpack.c.l.b16 %v119
    %v159 = vunpack.c.l.b16 %v120
    %v160 = vunpack.c.l.b16 %v121
    %v161 = vunpack.c.l.b16 %v122
    %v162 = vunpack.c.l.b16 %v123
    %v163 = vpack.c.b16 %v148, %v147
    %v164 = vpack.c.b16 %v150, %v149
    %v165 = vpack.c.b16 %v152, %v151
    %v166 = vpack.c.b16 %v154, %v153
    %v167 = vpack.c.b16 %v156, %v155
    %v168 = vpack.c.b16 %v158, %v157
    %v169 = vpack.c.b16 %v160, %v159
    %v170 = vpack.c.b16 %v162, %v161
    %179 = vmatprep.subr.bf16.mxu0 0
    %180 = vmatpush1.bf16.msra.mxu0 %v163
    %181 = vmatprep.subr.bf16.mxu0 0
    %182 = vmatpush1.bf16.msra.mxu0 %v164
    %183 = vmatprep.subr.bf16.mxu0 0
    %184 = vmatpush1.bf16.msra.mxu0 %v165
    %185 = vmatprep.subr.bf16.mxu0 0
    %186 = vmatpush1.bf16.msra.mxu0 %v166
    %187 = vmatprep.subr.bf16.mxu0 0
    %188 = vmatpush1.bf16.msra.mxu0 %v167
    %189 = vmatprep.subr.bf16.mxu0 0
    %190 = vmatpush1.bf16.msra.mxu0 %v168
    %191 = vmatprep.subr.bf16.mxu0 0
    %192 = vmatpush1.bf16.msra.mxu0 %v169
    %193 = vmatprep.subr.bf16.mxu0 0
    %194 = vmatpush1.bf16.msra.mxu0 %v170
    %195 = vmatprep.subr.bf16.mxu0 0
    %196 = vmatpush1.bf16.msra.mxu0 0
    %197 = vmatprep.subr.bf16.mxu0 0
    %198 = vmatpush1.bf16.msra.mxu0 0
    %199 = vmatprep.subr.bf16.mxu0 0
    %200 = vmatpush1.bf16.msra.mxu0 0
    %201 = vmatprep.subr.bf16.mxu0 0
    %202 = vmatpush1.bf16.msra.mxu0 0
    %203 = vmatprep.subr.bf16.mxu0 0
    %204 = vmatpush1.bf16.msra.mxu0 0
    %205 = vmatprep.subr.bf16.mxu0 0
    %206 = vmatpush1.bf16.msra.mxu0 0
    %207 = vmatprep.subr.bf16.mxu0 0
    %208 = vmatpush1.bf16.msra.mxu0 0
    %209 = vmatprep.subr.bf16.mxu0 0
    %210 = vmatpush1.bf16.msra.mxu0 0
    %211 = vmatprep.mubr.bf16.mxu0 0
    %212 = vmatmul.mubr.bf16.gmra.mrb[0].mxu0 %v107
    %v213 = vpop.f32.mrb[0].mxu0
    %v214 = vadd.f32 %v129, %v213
    %v215 = vpop.f32.mrb[0].mxu0
    %v216 = vpop.f32.mrb[0].mxu0
    %v217 = vpop.f32.mrb[0].mxu0
    %218 = vdwg.mxu0
    %219 = vst [vmem:[#allocation2] sm:$0xf] %v214
    // Predicated region
    $region22: #{dqn_forward.7} parent=1 // pred_check
      _
    $region23: #{dqn_forward.7} parent=1 // pred_check_branch
      %221 = sbr.rel (0) target = $region25
    $region24: #{dqn_forward.7} parent=1 // pred_region
      %s223 = ssub.s32 64, 64
      %224 = vsyncadd [#allocation3], %s223
      %s226 = sshll.u32 [#allocation2], 4
      %s227 = int_to_ptr.vmem [resolvable:$true] %s226
      %229 = dma.vmem_to_hbm [thread:$0]  %s227, 64, %s5, [#allocation3]
    $region25: #{dqn_forward.7} parent=1 // pred_fallthru
      _
    // Predicated region
    $region26: #{dqn_forward.7} parent=1 // pred_check
      _
    $region27: #{dqn_forward.7} parent=1 // pred_check_branch
      %231 = sbr.rel (0) target = $region29
    $region28: #{dqn_forward.7} parent=1 // pred_region
      %232 = dma.done [#allocation3], 64
    $region29: #{dqn_forward.7} parent=1 // pred_fallthru
      _
    %233 = vsyncpa [#allocation3], 1

</llo_original>
